<compile_context>
chip_gen: v5e
topology: v5e:2x2
jax: 0.10.0
libtpu: 0.0.40
codegen_flags: <defaults>
</compile_context>

<pallas_src>
import jax
import jax.numpy as jnp
from jax import lax
from jax.experimental import pallas as pl
from jax.experimental.pallas import tpu as pltpu


C2_PAD = 128  # lane-dense padded output width (>= num_classes)


def _fused_kernel(a_ref, w1_ref, s_ref, b_ref, w2_ref, b2_ref, o_ref):
    # a_ref : (TM, 9*Cin)   bf16  im2col rows of the padded input
    # w1_ref: (9*Cin, C1)   bf16  3x3 conv weights flattened to one long-K matrix
    # s_ref : (1, C1)       f32   folded BN scale
    # b_ref : (1, C1)       f32   folded BN bias (includes conv2 bias)
    # w2_ref: (C1, 128)     f32   1x1 conv weights, zero-padded in out channels
    # b2_ref: (1, 128)      f32   1x1 conv bias, zero-padded
    # o_ref : (TM, 128)     f32
    acc = jnp.dot(a_ref[...], w1_ref[...], preferred_element_type=jnp.float32)
    acc = acc * s_ref[...] + b_ref[...]
    acc = jnp.maximum(acc, 0.0)
    out = jnp.dot(acc, w2_ref[...], preferred_element_type=jnp.float32)
    o_ref[...] = out + b2_ref[...]


def _im2col_3x3(x_nhwc):
    """(N,H,W,Cin) -> (N*H*W, 9*Cin), tap order (ky, kx) matching HWIO weight flatten."""
    N, H, W, Cin = x_nhwc.shape
    xp = jnp.pad(x_nhwc, ((0, 0), (1, 1), (1, 1), (0, 0)))
    taps = [xp[:, ky:ky + H, kx:kx + W, :] for ky in range(3) for kx in range(3)]
    return jnp.concatenate(taps, axis=-1).reshape(N * H * W, 9 * Cin)


def output_forward_pallas(x_nhwc, params):
    """x_nhwc: (N, H, W, Cin) float32. Returns (N, H, W, num_classes) float32."""
    N, H, W, Cin = x_nhwc.shape
    w1 = params["w1"]                      # (3, 3, Cin, C1) HWIO
    C1 = w1.shape[-1]
    C2 = params["w2"].shape[-1]
    eps = 1e-5

    # Fold BatchNorm (eval mode) and conv2 bias into scale/bias.
    scale = params["gamma"] / jnp.sqrt(params["running_var"] + eps)      # (C1,)
    bias = params["beta"] + (params["b1"] - params["running_mean"]) * scale

    # im2col in the wrapper -> one long-K matmul inside the kernel.
    a = _im2col_3x3(x_nhwc)                # (M, K) f32
    M, K = a.shape

    # Tile M: keep >= 2 grid steps (v7x megacore) while filling MXU rows.
    half = (M + 1) // 2
    tm = min(256, ((max(half, 16) + 15) // 16) * 16)
    grid_m = -(-M // tm)
    m_pad = grid_m * tm
    if m_pad != M:
        a = jnp.pad(a, ((0, m_pad - M), (0, 0)))

    # bf16 MXU operands, f32 accumulation.
    a_bf16 = a.astype(jnp.bfloat16)
    w1_flat = w1.reshape(9 * Cin, C1).astype(jnp.bfloat16)

    # Lane-dense epilogue: zero-pad 1x1-conv output channels to 128.
    w2_p = jnp.zeros((C1, C2_PAD), jnp.float32).at[:, :C2].set(params["w2"])
    b2_p = jnp.zeros((1, C2_PAD), jnp.float32).at[:, :C2].set(params["b2"])

    out = pl.pallas_call(
        _fused_kernel,
        out_shape=jax.ShapeDtypeStruct((m_pad, C2_PAD), jnp.float32),
        grid_spec=pltpu.PrefetchScalarGridSpec(
            num_scalar_prefetch=0,
            grid=(grid_m,),
            in_specs=[
                pl.BlockSpec((tm, K), lambda i: (i, 0)),
                pl.BlockSpec((K, C1), lambda i: (0, 0)),
                pl.BlockSpec((1, C1), lambda i: (0, 0)),
                pl.BlockSpec((1, C1), lambda i: (0, 0)),
                pl.BlockSpec((C1, C2_PAD), lambda i: (0, 0)),
                pl.BlockSpec((1, C2_PAD), lambda i: (0, 0)),
            ],
            out_specs=pl.BlockSpec((tm, C2_PAD), lambda i: (i, 0)),
        ),
        compiler_params=pltpu.CompilerParams(
            dimension_semantics=("parallel",),
        ),
    )(a_bf16, w1_flat, scale.reshape(1, C1), bias.reshape(1, C1), w2_p, b2_p)

    return out[:M, :C2].reshape(N, H, W, C2)


def output_forward_reference(x_nhwc, params):
    """Plain-JAX f32 reference (NHWC) for correctness checking."""
    eps = 1e-5
    y = lax.conv_general_dilated(
        x_nhwc, params["w1"],
        window_strides=(1, 1), padding=((1, 1), (1, 1)),
        dimension_numbers=("NHWC", "HWIO", "NHWC"),
    ) + params["b1"]
    y = (y - params["running_mean"]) / jnp.sqrt(params["running_var"] + eps)
    y = y * params["gamma"] + params["beta"]
    y = jnp.maximum(y, 0.0)
    y = jnp.einsum("nhwc,cd->nhwd", y, params["w2"]) + params["b2"]
    return y


def output_forward_matched_reference(x_nhwc, params):
    """Plain-JAX reference using the same bf16 matmul operands as the kernel
    (tight check of the kernel math, independent of the bf16 cast error)."""
    N, H, W, Cin = x_nhwc.shape
    C1 = params["w1"].shape[-1]
    eps = 1e-5
    scale = params["gamma"] / jnp.sqrt(params["running_var"] + eps)
    bias = params["beta"] + (params["b1"] - params["running_mean"]) * scale
    a = _im2col_3x3(x_nhwc).astype(jnp.bfloat16)
    w1_flat = params["w1"].reshape(9 * Cin, C1).astype(jnp.bfloat16)
    y = jnp.dot(a, w1_flat, preferred_element_type=jnp.float32)
    y = jnp.maximum(y * scale[None, :] + bias[None, :], 0.0)
    z = jnp.dot(y, params["w2"], preferred_element_type=jnp.float32) + params["b2"]
    return z.reshape(N, H, W, -1)


def init_params(key, Cin=512, C1=128, num_classes=7):
    ks = jax.random.split(key, 8)
    return {
        "w1": jax.random.normal(ks[0], (3, 3, Cin, C1), jnp.float32) * 0.02,
        "b1": jax.random.normal(ks[1], (C1,), jnp.float32) * 0.1,
        "gamma": 1.0 + 0.1 * jax.random.normal(ks[2], (C1,), jnp.float32),
        "beta": 0.1 * jax.random.normal(ks[3], (C1,), jnp.float32),
        "running_mean": 0.1 * jax.random.normal(ks[4], (C1,), jnp.float32),
        "running_var": 1.0 + 0.1 * jnp.abs(jax.random.normal(ks[5], (C1,), jnp.float32)),
        "w2": jax.random.normal(ks[6], (C1, num_classes), jnp.float32) * 0.05,
        "b2": jax.random.normal(ks[7], (num_classes,), jnp.float32) * 0.1,
    }


if __name__ == "__main__":
    key = jax.random.PRNGKey(0)
    k_x, k_p = jax.random.split(key)

    # Module requires 512 input channels; keep batch/spatial small.
    N, H, W, Cin = 2, 8, 8, 512
    num_classes = 7

    x_nhwc = jax.random.normal(k_x, (N, H, W, Cin), jnp.float32)
    params = init_params(k_p, Cin=Cin, C1=128, num_classes=num_classes)

    out = jax.block_until_ready(output_forward_pallas(x_nhwc, params))
    assert out.shape == (N, H, W, num_classes)

    ref_matched = jax.block_until_ready(output_forward_matched_reference(x_nhwc, params))
    ref_f32 = jax.block_until_ready(output_forward_reference(x_nhwc, params))

    err_matched = float(jnp.max(jnp.abs(out - ref_matched)))
    err_f32 = float(jnp.max(jnp.abs(out - ref_f32)))
    assert err_matched < 2e-3, f"kernel mismatch vs matched-precision ref: {err_matched}"
    assert err_f32 < 3e-2, f"mismatch vs f32 reference: {err_f32}"

    print("KERNEL_OK")
</pallas_src>

<mosaic_0001>
module attributes {stable_mosaic.version = 11 : i64} {
  func.func @_fused_kernel(%arg0: i32, %arg1: memref<64x4608xbf16, #tpu.memory_space<vmem>>, %arg2: memref<4608x128xbf16, #tpu.memory_space<vmem>>, %arg3: memref<1x128xf32, #tpu.memory_space<vmem>>, %arg4: memref<1x128xf32, #tpu.memory_space<vmem>>, %arg5: memref<128x128xf32, #tpu.memory_space<vmem>>, %arg6: memref<1x128xf32, #tpu.memory_space<vmem>>, %arg7: memref<64x128xf32, #tpu.memory_space<vmem>>) attributes {dimension_semantics = [#tpu.dimension_semantics<parallel>], iteration_bounds = array<i64: 2>, scalar_prefetch = 0 : i64, scratch_operands = 0 : i64, tpu.core_type = #tpu.core_type<tc>, window_params = [{transform_indices = @transform_0, window_bounds = array<i64: 64, 4608>}, {pipeline_mode = #tpu.pipeline_mode<synchronous>, transform_indices = @transform_1, window_bounds = array<i64: 4608, 128>}, {pipeline_mode = #tpu.pipeline_mode<synchronous>, transform_indices = @transform_2, window_bounds = array<i64: 1, 128>}, {pipeline_mode = #tpu.pipeline_mode<synchronous>, transform_indices = @transform_3, window_bounds = array<i64: 1, 128>}, {pipeline_mode = #tpu.pipeline_mode<synchronous>, transform_indices = @transform_4, window_bounds = array<i64: 128, 128>}, {pipeline_mode = #tpu.pipeline_mode<synchronous>, transform_indices = @transform_5, window_bounds = array<i64: 1, 128>}, {transform_indices = @transform_6, window_bounds = array<i64: 64, 128>}]} {
    %c0 = arith.constant 0 : index
    %c0_0 = arith.constant 0 : index
    %0 = vector.load %arg1[%c0, %c0_0] : memref<64x4608xbf16, #tpu.memory_space<vmem>>, vector<64x4608xbf16>
    %c0_1 = arith.constant 0 : index
    %c0_2 = arith.constant 0 : index
    %1 = vector.load %arg2[%c0_1, %c0_2] : memref<4608x128xbf16, #tpu.memory_space<vmem>>, vector<4608x128xbf16>
    %cst = arith.constant dense<0.000000e+00> : vector<64x128xf32>
    %2 = tpu.matmul %0, %1, %cst {dimension_numbers = #tpu.dot_dimension_numbers<[1], [0], [0], [1], [0, 0, 1, 1], [], []>} : vector<64x4608xbf16>, vector<4608x128xbf16>, vector<64x128xf32> -> vector<64x128xf32>
    %c0_3 = arith.constant 0 : index
    %c0_4 = arith.constant 0 : index
    %3 = vector.load %arg3[%c0_3, %c0_4] : memref<1x128xf32, #tpu.memory_space<vmem>>, vector<1x128xf32>
    %4 = vector.broadcast %3 : vector<1x128xf32> to vector<64x128xf32>
    %5 = arith.mulf %2, %4 : vector<64x128xf32>
    %c0_5 = arith.constant 0 : index
    %c0_6 = arith.constant 0 : index
    %6 = vector.load %arg4[%c0_5, %c0_6] : memref<1x128xf32, #tpu.memory_space<vmem>>, vector<1x128xf32>
    %7 = vector.broadcast %6 : vector<1x128xf32> to vector<64x128xf32>
    %8 = arith.addf %5, %7 : vector<64x128xf32>
    %cst_7 = arith.constant 0.000000e+00 : f32
    %9 = vector.broadcast %cst_7 : f32 to vector<64x128xf32>
    %10 = arith.maximumf %8, %9 : vector<64x128xf32>
    %c0_8 = arith.constant 0 : index
    %c0_9 = arith.constant 0 : index
    %11 = vector.load %arg5[%c0_8, %c0_9] : memref<128x128xf32, #tpu.memory_space<vmem>>, vector<128x128xf32>
    %cst_10 = arith.constant dense<0.000000e+00> : vector<64x128xf32>
    %12 = tpu.matmul %10, %11, %cst_10 {dimension_numbers = #tpu.dot_dimension_numbers<[1], [0], [0], [1], [0, 0, 1, 1], [], []>} : vector<64x128xf32>, vector<128x128xf32>, vector<64x128xf32> -> vector<64x128xf32>
    %c0_11 = arith.constant 0 : index
    %c0_12 = arith.constant 0 : index
    %13 = vector.load %arg6[%c0_11, %c0_12] : memref<1x128xf32, #tpu.memory_space<vmem>>, vector<1x128xf32>
    %14 = vector.broadcast %13 : vector<1x128xf32> to vector<64x128xf32>
    %15 = arith.addf %12, %14 : vector<64x128xf32>
    %c0_13 = arith.constant 0 : index
    %c0_14 = arith.constant 0 : index
    %16 = vector.load %arg7[%c0_13, %c0_14] : memref<64x128xf32, #tpu.memory_space<vmem>>, vector<64x128xf32>
    tpu.vector_store %arg7[%c0_13, %c0_14], %15 {strides = array<i32>} : memref<64x128xf32, #tpu.memory_space<vmem>>, vector<64x128xf32>,
    return
  }
  func.func @transform_0(%arg0: i32) -> (i32, i32) {
    %c0_i32 = arith.constant 0 : i32
    %c0_i32_0 = arith.constant 0 : i32
    return %arg0, %c0_i32 : i32, i32
  }
  func.func @transform_1(%arg0: i32) -> (i32, i32) {
    %c0_i32 = arith.constant 0 : i32
    %c0_i32_0 = arith.constant 0 : i32
    %c0_i32_1 = arith.constant 0 : i32
    return %c0_i32, %c0_i32_0 : i32, i32
  }
  func.func @transform_2(%arg0: i32) -> (i32, i32) {
    %c0_i32 = arith.constant 0 : i32
    %c0_i32_0 = arith.constant 0 : i32
    %c0_i32_1 = arith.constant 0 : i32
    return %c0_i32, %c0_i32_0 : i32, i32
  }
  func.func @transform_3(%arg0: i32) -> (i32, i32) {
    %c0_i32 = arith.constant 0 : i32
    %c0_i32_0 = arith.constant 0 : i32
    %c0_i32_1 = arith.constant 0 : i32
    return %c0_i32, %c0_i32_0 : i32, i32
  }
  func.func @transform_4(%arg0: i32) -> (i32, i32) {
    %c0_i32 = arith.constant 0 : i32
    %c0_i32_0 = arith.constant 0 : i32
    %c0_i32_1 = arith.constant 0 : i32
    return %c0_i32, %c0_i32_0 : i32, i32
  }
  func.func @transform_5(%arg0: i32) -> (i32, i32) {
    %c0_i32 = arith.constant 0 : i32
    %c0_i32_0 = arith.constant 0 : i32
    %c0_i32_1 = arith.constant 0 : i32
    return %c0_i32, %c0_i32_0 : i32, i32
  }
  func.func @transform_6(%arg0: i32) -> (i32, i32) {
    %c0_i32 = arith.constant 0 : i32
    %c0_i32_0 = arith.constant 0 : i32
    return %arg0, %c0_i32 : i32, i32
  }
}

</mosaic_0001>

<llo_original>
// kernel: tpu_custom_call.1
$region0: #{tpu_custom_call.1}
  #allocation0 [shape = 'u32[]', space=smem, size = 0x4, offset = 0x4, fixed_abs, tag = 'smem constant byte address 0x4 - core index']
  #allocation1 [shape = 'u32[72,128]{1,0:T(1,128)}', space=vmem, size = 0x9000, scoped, tag = 'internal scratch']
  %s0 = inlined_call_operand.hbm [shape: bf16[128,4608], index: 0, kind: input, shape index: {}]
  %s1 = inlined_call_operand.hbm [shape: bf16[4608,128], index: 1, kind: input, shape index: {}]
  %s2 = inlined_call_operand.hbm [shape: f32[1,128], index: 2, kind: input, shape index: {}]
  %s3 = inlined_call_operand.hbm [shape: f32[1,128], index: 3, kind: input, shape index: {}]
  %s4 = inlined_call_operand.hbm [shape: f32[128,128], index: 4, kind: input, shape index: {}]
  %s5 = inlined_call_operand.hbm [shape: f32[1,128], index: 5, kind: input, shape index: {}]
  %s6 = inlined_call_operand.hbm [shape: f32[128,128], index: 6, kind: output, shape index: {}]
  %s7 = sld [smem:[#allocation0]]
  $region81: #{tpu_custom_call.1} parent=0
    _
  %s9 = ssub.s32 1, %s7
  %s10 = scalar_select 0, %s9, %s7
  $region1: #{tpu_custom_call.1} parent=0
    #allocation2 [shape = 'u8[1179648]{0}', space=vmem, size = 0x120000, scoped, tag = 'input window, operand 0']
    #allocation3 [shape = 's32[2]{0}', space=sflag, size = 0x8, scoped, tag = 'scoped memory for tpu_custom_call.1']
    #allocation4 [shape = 's32[2]{0}', space=sflag, size = 0x8, scoped, tag = 'scoped memory for tpu_custom_call.1']
    #allocation5 [shape = 'u8[1179648]{0}', space=vmem, size = 0x120000, scoped, tag = 'input window, operand 1, single buffered']
    #allocation6 [shape = 's32[1]{0}', space=sflag, size = 0x4, scoped, tag = 'scoped memory for tpu_custom_call.1']
    #allocation7 [shape = 'u8[512]{0}', space=vmem, size = 0x400, scoped, tag = 'input window, operand 2, single buffered']
    #allocation8 [shape = 'u8[512]{0}', space=vmem, size = 0x400, scoped, tag = 'input window, operand 3, single buffered']
    #allocation9 [shape = 's32[1]{0}', space=sflag, size = 0x4, scoped, tag = 'scoped memory for tpu_custom_call.1']
    #allocation10 [shape = 'u8[65536]{0}', space=vmem, size = 0x10000, scoped, tag = 'input window, operand 4, single buffered']
    #allocation11 [shape = 'u8[512]{0}', space=vmem, size = 0x400, scoped, tag = 'input window, operand 5, single buffered']
    #allocation12 [shape = 's32[1]{0}', space=sflag, size = 0x4, scoped, tag = 'scoped memory for tpu_custom_call.1']
    #allocation13 [shape = 'u8[65536]{0}', space=vmem, size = 0x10000, scoped, tag = 'output window, operand 0']
    %11 = vsyncpa [#allocation3], 0
    %s12 = scalar_lea.sflag [#allocation3], 1
    %13 = vsyncpa %s12, 0
    %14 = vsyncpa [#allocation6], 0
    %15 = vsyncpa [#allocation9], 0
    %16 = vsyncpa [#allocation12], 0
    %17 = vsyncpa [#allocation4], 0
    %s18 = scalar_lea.sflag [#allocation4], 1
    %19 = vsyncpa %s18, 0
    loop: start=0, step=1, limit=4
    $region2: #{tpu_custom_call.1} parent=1 // loop_pre_header
      _
    $region3: #{tpu_custom_call.1} parent=1 // loop_header
      %s21 = sphi 0, %s25
      %p22 = scmp.ge.s32.totalorder %s21, 4
      %s31 = sphi 0, %s33
      %s34 = sphi 0, %s31
      %s35 = sphi 0, %s34
      %s51 = sphi 0, %s35
      %s55 = sphi 0, %s55
      %s57 = sphi 0, %s55
      %s58 = sphi 0, %s57
      %s72 = sphi 0, %s58
      %s76 = sphi 0, %s76
      %s78 = sphi 0, %s76
      %s79 = sphi 0, %s78
      %s93 = sphi 0, %s79
      %s97 = sphi 0, %s97
      %s99 = sphi 0, %s97
      %s100 = sphi 0, %s99
      %s114 = sphi 0, %s100
      %s118 = sphi 0, %s118
      %s120 = sphi 0, %s118
      %s121 = sphi 0, %s120
      %s135 = sphi 0, %s121
      %s139 = sphi 0, %s139
      %s141 = sphi 0, %s139
      %s142 = sphi 0, %s141
      %s156 = sphi 0, %s142
      %s162 = sphi 0, %s164
      %s165 = sphi 0, %s162
      %s166 = sphi 0, %s165
      %s182 = sphi 0, %s166
    $region4: #{tpu_custom_call.1} parent=1 // loop_header_branch
      %24 = sbr.rel (%p22) target = $region8
    $region5: #{tpu_custom_call.1} parent=1 // loop_body
      %s26 = ssub.s32 %s21, 1
      %s27 = ssub.s32 %s21, 2
      %s28 = sadd.s32 %s21, 1
      %s29 = ssub.s32 %s21, %s28
      %p30 = scmp.eq.s32.totalorder %s29, 0
      %s32 = sadd.s32 %s31, 1
      %s33 = scalar_select %p30, %s31, %s32
      %p36 = pneg %p30
      %p37 = scmp.eq.s32.totalorder %s21, 1
      %p38 = por %p36, %p37
      %p39 = scmp.ne.s32.totalorder %s31, %s34
      %p40 = scmp.eq.s32.totalorder %s21, 0
      %p41 = por %p39, %p40
      %p42 = scmp.ne.s32.totalorder %s31, %s34
      %p43 = scmp.eq.s32.totalorder %s26, 1
      %p44 = por %p42, %p43
      %p45 = scmp.ne.s32.totalorder %s34, %s35
      %p46 = scmp.eq.s32.totalorder %s26, 0
      %p47 = por %p45, %p46
      %p48 = scmp.ne.s32.totalorder %s34, %s35
      %p49 = scmp.eq.s32.totalorder %s27, 1
      %p50 = por %p48, %p49
      %p52 = scmp.ne.s32.totalorder %s35, %s51
      %p53 = scmp.eq.s32.totalorder %s27, 0
      %p54 = por %p52, %p53
      %s56 = sadd.s32 %s55, 1
      %p59 = scmp.eq.s32.totalorder %s21, 1
      %p60 = scmp.ne.s32.totalorder %s55, %s57
      %p61 = scmp.eq.s32.totalorder %s21, 0
      %p62 = por %p60, %p61
      %p63 = scmp.ne.s32.totalorder %s55, %s57
      %p64 = scmp.eq.s32.totalorder %s26, 1
      %p65 = por %p63, %p64
      %p66 = scmp.ne.s32.totalorder %s57, %s58
      %p67 = scmp.eq.s32.totalorder %s26, 0
      %p68 = por %p66, %p67
      %p69 = scmp.ne.s32.totalorder %s57, %s58
      %p70 = scmp.eq.s32.totalorder %s27, 1
      %p71 = por %p69, %p70
      %p73 = scmp.ne.s32.totalorder %s58, %s72
      %p74 = scmp.eq.s32.totalorder %s27, 0
      %p75 = por %p73, %p74
      %s77 = sadd.s32 %s76, 1
      %p80 = scmp.eq.s32.totalorder %s21, 1
      %p81 = scmp.ne.s32.totalorder %s76, %s78
      %p82 = scmp.eq.s32.totalorder %s21, 0
      %p83 = por %p81, %p82
      %p84 = scmp.ne.s32.totalorder %s76, %s78
      %p85 = scmp.eq.s32.totalorder %s26, 1
      %p86 = por %p84, %p85
      %p87 = scmp.ne.s32.totalorder %s78, %s79
      %p88 = scmp.eq.s32.totalorder %s26, 0
      %p89 = por %p87, %p88
      %p90 = scmp.ne.s32.totalorder %s78, %s79
      %p91 = scmp.eq.s32.totalorder %s27, 1
      %p92 = por %p90, %p91
      %p94 = scmp.ne.s32.totalorder %s79, %s93
      %p95 = scmp.eq.s32.totalorder %s27, 0
      %p96 = por %p94, %p95
      %s98 = sadd.s32 %s97, 1
      %p101 = scmp.eq.s32.totalorder %s21, 1
      %p102 = scmp.ne.s32.totalorder %s97, %s99
      %p103 = scmp.eq.s32.totalorder %s21, 0
      %p104 = por %p102, %p103
      %p105 = scmp.ne.s32.totalorder %s97, %s99
      %p106 = scmp.eq.s32.totalorder %s26, 1
      %p107 = por %p105, %p106
      %p108 = scmp.ne.s32.totalorder %s99, %s100
      %p109 = scmp.eq.s32.totalorder %s26, 0
      %p110 = por %p108, %p109
      %p111 = scmp.ne.s32.totalorder %s99, %s100
      %p112 = scmp.eq.s32.totalorder %s27, 1
      %p113 = por %p111, %p112
      %p115 = scmp.ne.s32.totalorder %s100, %s114
      %p116 = scmp.eq.s32.totalorder %s27, 0
      %p117 = por %p115, %p116
      %s119 = sadd.s32 %s118, 1
      %p122 = scmp.eq.s32.totalorder %s21, 1
      %p123 = scmp.ne.s32.totalorder %s118, %s120
      %p124 = scmp.eq.s32.totalorder %s21, 0
      %p125 = por %p123, %p124
      %p126 = scmp.ne.s32.totalorder %s118, %s120
      %p127 = scmp.eq.s32.totalorder %s26, 1
      %p128 = por %p126, %p127
      %p129 = scmp.ne.s32.totalorder %s120, %s121
      %p130 = scmp.eq.s32.totalorder %s26, 0
      %p131 = por %p129, %p130
      %p132 = scmp.ne.s32.totalorder %s120, %s121
      %p133 = scmp.eq.s32.totalorder %s27, 1
      %p134 = por %p132, %p133
      %p136 = scmp.ne.s32.totalorder %s121, %s135
      %p137 = scmp.eq.s32.totalorder %s27, 0
      %p138 = por %p136, %p137
      %s140 = sadd.s32 %s139, 1
      %p143 = scmp.eq.s32.totalorder %s21, 1
      %p144 = scmp.ne.s32.totalorder %s139, %s141
      %p145 = scmp.eq.s32.totalorder %s21, 0
      %p146 = por %p144, %p145
      %p147 = scmp.ne.s32.totalorder %s139, %s141
      %p148 = scmp.eq.s32.totalorder %s26, 1
      %p149 = por %p147, %p148
      %p150 = scmp.ne.s32.totalorder %s141, %s142
      %p151 = scmp.eq.s32.totalorder %s26, 0
      %p152 = por %p150, %p151
      %p153 = scmp.ne.s32.totalorder %s141, %s142
      %p154 = scmp.eq.s32.totalorder %s27, 1
      %p155 = por %p153, %p154
      %p157 = scmp.ne.s32.totalorder %s142, %s156
      %p158 = scmp.eq.s32.totalorder %s27, 0
      %p159 = por %p157, %p158
      %s160 = ssub.s32 %s21, %s28
      %p161 = scmp.eq.s32.totalorder %s160, 0
      %s163 = sadd.s32 %s162, 1
      %s164 = scalar_select %p161, %s162, %s163
      %p167 = pneg %p161
      %p168 = scmp.eq.s32.totalorder %s21, 1
      %p169 = por %p167, %p168
      %p170 = scmp.ne.s32.totalorder %s162, %s165
      %p171 = scmp.eq.s32.totalorder %s21, 0
      %p172 = por %p170, %p171
      %p173 = scmp.ne.s32.totalorder %s162, %s165
      %p174 = scmp.eq.s32.totalorder %s26, 1
      %p175 = por %p173, %p174
      %p176 = scmp.ne.s32.totalorder %s165, %s166
      %p177 = scmp.eq.s32.totalorder %s26, 0
      %p178 = por %p176, %p177
      %p179 = scmp.ne.s32.totalorder %s165, %s166
      %p180 = scmp.eq.s32.totalorder %s27, 1
      %p181 = por %p179, %p180
      %p183 = scmp.ne.s32.totalorder %s166, %s182
      %p184 = scmp.eq.s32.totalorder %s27, 0
      %p185 = por %p183, %p184
      %p186 = scmp.le.s32.totalorder 1, %s21
      %p187 = scmp.lt.s32.totalorder %s21, 3
      %p188 = pnand %p186, %p187
      %p189 = pneg %p188
      // Predicated region
      $region9: #{tpu_custom_call.1} parent=5 // pred_check
        _
      $region10: #{tpu_custom_call.1} parent=5 // pred_check_branch
        %191 = sbr.rel (%p188) target = $region12
      $region11: #{tpu_custom_call.1} parent=5 // pred_region
        %s192 = ssub.s32 %s21, 1
        // Predicated region
        $region13: #{tpu_custom_call.1} parent=11 // pred_check
          %p193 = pneg %p68
        $region14: #{tpu_custom_call.1} parent=11 // pred_check_branch
          %195 = sbr.rel (%p193) target = $region16
        $region15: #{tpu_custom_call.1} parent=11 // pred_region
          %197 = vsyncadd [#allocation6], 0
          %s198 = sshll.u32 %s1, 4
          %s199 = int_to_ptr.hbm [resolvable:$true] %s198
          %s200 = sshll.u32 [#allocation5], 4
          %s201 = int_to_ptr.vmem [resolvable:$true] %s200
          %206 = dma.hbm_to_vmem [thread:$0]  %s199, 36864, %s201, [#allocation6], 64, 64, 4
        $region16: #{tpu_custom_call.1} parent=11 // pred_fallthru
          _
        // Predicated region
        $region17: #{tpu_custom_call.1} parent=11 // pred_check
          %p207 = pneg %p89
        $region18: #{tpu_custom_call.1} parent=11 // pred_check_branch
          %209 = sbr.rel (%p207) target = $region20
        $region19: #{tpu_custom_call.1} parent=11 // pred_region
          %211 = vsyncadd [#allocation6], 0
          %s213 = sshll.u32 %s2, 4
          %s214 = int_to_ptr.hbm [resolvable:$true] %s213
          %s215 = sshll.u32 [#allocation7], 4
          %s216 = int_to_ptr.vmem [resolvable:$true] %s215
          %218 = dma.hbm_to_vmem [thread:$0]  %s214, 16, %s216, [#allocation6]
        $region20: #{tpu_custom_call.1} parent=11 // pred_fallthru
          _
        // Predicated region
        $region21: #{tpu_custom_call.1} parent=11 // pred_check
          %p219 = pneg %p110
        $region22: #{tpu_custom_call.1} parent=11 // pred_check_branch
          %221 = sbr.rel (%p219) target = $region24
        $region23: #{tpu_custom_call.1} parent=11 // pred_region
          %223 = vsyncadd [#allocation9], 0
          %s225 = sshll.u32 %s3, 4
          %s226 = int_to_ptr.hbm [resolvable:$true] %s225
          %s227 = sshll.u32 [#allocation8], 4
          %s228 = int_to_ptr.vmem [resolvable:$true] %s227
          %230 = dma.hbm_to_vmem [thread:$0]  %s226, 16, %s228, [#allocation9]
        $region24: #{tpu_custom_call.1} parent=11 // pred_fallthru
          _
        // Predicated region
        $region25: #{tpu_custom_call.1} parent=11 // pred_check
          %p231 = pneg %p131
        $region26: #{tpu_custom_call.1} parent=11 // pred_check_branch
          %233 = sbr.rel (%p231) target = $region28
        $region27: #{tpu_custom_call.1} parent=11 // pred_region
          %235 = vsyncadd [#allocation9], 0
          %s236 = sshll.u32 %s4, 4
          %s237 = int_to_ptr.hbm [resolvable:$true] %s236
          %s238 = sshll.u32 [#allocation10], 4
          %s239 = int_to_ptr.vmem [resolvable:$true] %s238
          %244 = dma.hbm_to_vmem [thread:$0]  %s237, 2048, %s239, [#allocation9], 128, 128, 8
        $region28: #{tpu_custom_call.1} parent=11 // pred_fallthru
          _
        // Predicated region
        $region29: #{tpu_custom_call.1} parent=11 // pred_check
          %p245 = pneg %p152
        $region30: #{tpu_custom_call.1} parent=11 // pred_check_branch
          %247 = sbr.rel (%p245) target = $region32
        $region31: #{tpu_custom_call.1} parent=11 // pred_region
          %249 = vsyncadd [#allocation12], 0
          %s251 = sshll.u32 %s5, 4
          %s252 = int_to_ptr.hbm [resolvable:$true] %s251
          %s253 = sshll.u32 [#allocation11], 4
          %s254 = int_to_ptr.vmem [resolvable:$true] %s253
          %256 = dma.hbm_to_vmem [thread:$0]  %s252, 16, %s254, [#allocation12]
        $region32: #{tpu_custom_call.1} parent=11 // pred_fallthru
          _
      $region12: #{tpu_custom_call.1} parent=5 // pred_fallthru
        _
      %p257 = scmp.lt.s32.totalorder %s21, 2
      // Predicated region
      $region33: #{tpu_custom_call.1} parent=5 // pred_check
        %p258 = pneg %p257
      $region34: #{tpu_custom_call.1} parent=5 // pred_check_branch
        %260 = sbr.rel (%p258) target = $region36
      $region35: #{tpu_custom_call.1} parent=5 // pred_region
        // Predicated region
        $region37: #{tpu_custom_call.1} parent=35 // pred_check
          %p261 = pneg %p41
        $region38: #{tpu_custom_call.1} parent=35 // pred_check_branch
          %263 = sbr.rel (%p261) target = $region40
        $region39: #{tpu_custom_call.1} parent=35 // pred_region
          %s264 = sand.u32 %s31, 1
          %s265 = scalar_lea.sflag [#allocation3], %s264
          %s266 = sand.u32 %s31, 1
          %s267 = smul.addr %s266, 1152
          %s268 = scalar_lea.vmem [#allocation2], %s267
          %s269 = smul.u32 8, %s21
          %271 = vsyncadd %s265, 0
          %s272 = smul.addr %s269, 36
          %s273 = smul.addr %s272, 4
          %s274 = scalar_lea.hbm %s0, %s273
          %s275 = sshll.u32 %s274, 4
          %s276 = int_to_ptr.hbm [resolvable:$true] %s275
          %s277 = sshll.u32 %s268, 4
          %s278 = int_to_ptr.vmem [resolvable:$true] %s277
          %283 = dma.hbm_to_vmem [thread:$0]  %s276, 18432, %s278, %s265, 2304, 2304, 144
        $region40: #{tpu_custom_call.1} parent=35 // pred_fallthru
          _
      $region36: #{tpu_custom_call.1} parent=5 // pred_fallthru
        _
      %p284 = scmp.le.s32.totalorder 1, %s21
      %p285 = scmp.lt.s32.totalorder %s21, 3
      %p286 = pnand %p284, %p285
      %p287 = pneg %p286
      // Predicated region
      $region41: #{tpu_custom_call.1} parent=5 // pred_check
        _
      $region42: #{tpu_custom_call.1} parent=5 // pred_check_branch
        %289 = sbr.rel (%p286) target = $region44
      $region43: #{tpu_custom_call.1} parent=5 // pred_region
        %s290 = ssub.s32 %s21, 1
        %s291 = sand.u32 %s34, 1
        %s292 = scalar_lea.sflag [#allocation3], %s291
        %s293 = sand.u32 %s34, 1
        %s294 = smul.addr %s293, 1152
        %s295 = scalar_lea.vmem [#allocation2], %s294
        // Predicated region
        $region45: #{tpu_custom_call.1} parent=43 // pred_check
          %p296 = pneg %p47
        $region46: #{tpu_custom_call.1} parent=43 // pred_check_branch
          %298 = sbr.rel (%p296) target = $region48
        $region47: #{tpu_custom_call.1} parent=43 // pred_region
          %300 = dma.done %s292, 18432
        $region48: #{tpu_custom_call.1} parent=43 // pred_fallthru
          _
        // Predicated region
        $region49: #{tpu_custom_call.1} parent=43 // pred_check
          %p301 = pneg %p68
        $region50: #{tpu_custom_call.1} parent=43 // pred_check_branch
          %303 = sbr.rel (%p301) target = $region52
        $region51: #{tpu_custom_call.1} parent=43 // pred_region
          %305 = dma.done [#allocation6], 36864
        $region52: #{tpu_custom_call.1} parent=43 // pred_fallthru
          _
        // Predicated region
        $region53: #{tpu_custom_call.1} parent=43 // pred_check
          %p306 = pneg %p89
        $region54: #{tpu_custom_call.1} parent=43 // pred_check_branch
          %308 = sbr.rel (%p306) target = $region56
        $region55: #{tpu_custom_call.1} parent=43 // pred_region
          %310 = dma.done [#allocation6], 16
        $region56: #{tpu_custom_call.1} parent=43 // pred_fallthru
          _
        // Predicated region
        $region57: #{tpu_custom_call.1} parent=43 // pred_check
          %p311 = pneg %p110
        $region58: #{tpu_custom_call.1} parent=43 // pred_check_branch
          %313 = sbr.rel (%p311) target = $region60
        $region59: #{tpu_custom_call.1} parent=43 // pred_region
          %315 = dma.done [#allocation9], 16
        $region60: #{tpu_custom_call.1} parent=43 // pred_fallthru
          _
        // Predicated region
        $region61: #{tpu_custom_call.1} parent=43 // pred_check
          %p316 = pneg %p131
        $region62: #{tpu_custom_call.1} parent=43 // pred_check_branch
          %318 = sbr.rel (%p316) target = $region64
        $region63: #{tpu_custom_call.1} parent=43 // pred_region
          %320 = dma.done [#allocation9], 2048
        $region64: #{tpu_custom_call.1} parent=43 // pred_fallthru
          _
        // Predicated region
        $region65: #{tpu_custom_call.1} parent=43 // pred_check
          %p321 = pneg %p152
        $region66: #{tpu_custom_call.1} parent=43 // pred_check_branch
          %323 = sbr.rel (%p321) target = $region68
        $region67: #{tpu_custom_call.1} parent=43 // pred_region
          %325 = dma.done [#allocation12], 16
        $region68: #{tpu_custom_call.1} parent=43 // pred_fallthru
          _
        %s326 = sand.u32 %s34, 1
        %s327 = scalar_lea.sflag [#allocation3], %s326
        %s328 = sand.u32 %s34, 1
        %s329 = smul.addr %s328, 1152
        %s330 = scalar_lea.vmem [#allocation2], %s329
        %p331 = pneg %p47
        %p332 = pneg %p44
        %p333 = pneg %p68
        %p334 = pneg %p65
        %p335 = pneg %p89
        %p336 = pneg %p86
        %p337 = pneg %p110
        %p338 = pneg %p107
        %p339 = pneg %p131
        %p340 = pneg %p128
        %p341 = pneg %p152
        %p342 = pneg %p149
        %p343 = pneg %p178
        %p344 = pneg %p175
        %s345 = sand.u32 %s165, 1
        %s346 = scalar_lea.sflag [#allocation4], %s345
        %s347 = sand.u32 %s165, 1
        %s348 = smul.addr %s347, 64
        %s349 = scalar_lea.vmem [#allocation13], %s348
        %s350 = smul.u32 8, %s26
        %s351 = smul.u32 8, %s26
        %v352 = vld [vmem:[%s295] sm:$0xff]
        %v353 = vld [vmem:[%s295 + $0x8] sm:$0xff]
        %v354 = vld [vmem:[%s295 + $0x10] sm:$0xff]
        %v355 = vld [vmem:[%s295 + $0x18] sm:$0xff]
        %v356 = vld [vmem:[%s295 + $0x20] sm:$0xff]
        %v357 = vld [vmem:[%s295 + $0x28] sm:$0xff]
        %v358 = vld [vmem:[%s295 + $0x30] sm:$0xff]
        %v359 = vld [vmem:[%s295 + $0x38] sm:$0xff]
        %v360 = vld [vmem:[%s295 + $0x40] sm:$0xff]
        %v361 = vld [vmem:[%s295 + $0x48] sm:$0xff]
        %v362 = vld [vmem:[%s295 + $0x50] sm:$0xff]
        %v363 = vld [vmem:[%s295 + $0x58] sm:$0xff]
        %v364 = vld [vmem:[%s295 + $0x60] sm:$0xff]
        %v365 = vld [vmem:[%s295 + $0x68] sm:$0xff]
        %v366 = vld [vmem:[%s295 + $0x70] sm:$0xff]
        %v367 = vld [vmem:[%s295 + $0x78] sm:$0xff]
        %v368 = vld [vmem:[%s295 + $0x80] sm:$0xff]
        %v369 = vld [vmem:[%s295 + $0x88] sm:$0xff]
        %v370 = vld [vmem:[%s295 + $0x90] sm:$0xff]
        %v371 = vld [vmem:[%s295 + $0x98] sm:$0xff]
        %v372 = vld [vmem:[%s295 + $0xa0] sm:$0xff]
        %v373 = vld [vmem:[%s295 + $0xa8] sm:$0xff]
        %v374 = vld [vmem:[%s295 + $0xb0] sm:$0xff]
        %v375 = vld [vmem:[%s295 + $0xb8] sm:$0xff]
        %v376 = vld [vmem:[%s295 + $0xc0] sm:$0xff]
        %v377 = vld [vmem:[%s295 + $0xc8] sm:$0xff]
        %v378 = vld [vmem:[%s295 + $0xd0] sm:$0xff]
        %v379 = vld [vmem:[%s295 + $0xd8] sm:$0xff]
        %v380 = vld [vmem:[%s295 + $0xe0] sm:$0xff]
        %v381 = vld [vmem:[%s295 + $0xe8] sm:$0xff]
        %v382 = vld [vmem:[%s295 + $0xf0] sm:$0xff]
        %v383 = vld [vmem:[%s295 + $0xf8] sm:$0xff]
        %v384 = vld [vmem:[%s295 + $0x100] sm:$0xff]
        %v385 = vld [vmem:[%s295 + $0x108] sm:$0xff]
        %v386 = vld [vmem:[%s295 + $0x110] sm:$0xff]
        %v387 = vld [vmem:[%s295 + $0x118] sm:$0xff]
        %v388 = vld [vmem:[%s295 + $0x120] sm:$0xff]
        %v389 = vld [vmem:[%s295 + $0x128] sm:$0xff]
        %v390 = vld [vmem:[%s295 + $0x130] sm:$0xff]
        %v391 = vld [vmem:[%s295 + $0x138] sm:$0xff]
        %v392 = vld [vmem:[%s295 + $0x140] sm:$0xff]
        %v393 = vld [vmem:[%s295 + $0x148] sm:$0xff]
        %v394 = vld [vmem:[%s295 + $0x150] sm:$0xff]
        %v395 = vld [vmem:[%s295 + $0x158] sm:$0xff]
        %v396 = vld [vmem:[%s295 + $0x160] sm:$0xff]
        %v397 = vld [vmem:[%s295 + $0x168] sm:$0xff]
        %v398 = vld [vmem:[%s295 + $0x170] sm:$0xff]
        %v399 = vld [vmem:[%s295 + $0x178] sm:$0xff]
        %v400 = vld [vmem:[%s295 + $0x180] sm:$0xff]
        %v401 = vld [vmem:[%s295 + $0x188] sm:$0xff]
        %v402 = vld [vmem:[%s295 + $0x190] sm:$0xff]
        %v403 = vld [vmem:[%s295 + $0x198] sm:$0xff]
        %v404 = vld [vmem:[%s295 + $0x1a0] sm:$0xff]
        %v405 = vld [vmem:[%s295 + $0x1a8] sm:$0xff]
        %v406 = vld [vmem:[%s295 + $0x1b0] sm:$0xff]
        %v407 = vld [vmem:[%s295 + $0x1b8] sm:$0xff]
        %v408 = vld [vmem:[%s295 + $0x1c0] sm:$0xff]
        %v409 = vld [vmem:[%s295 + $0x1c8] sm:$0xff]
        %v410 = vld [vmem:[%s295 + $0x1d0] sm:$0xff]
        %v411 = vld [vmem:[%s295 + $0x1d8] sm:$0xff]
        %v412 = vld [vmem:[%s295 + $0x1e0] sm:$0xff]
        %v413 = vld [vmem:[%s295 + $0x1e8] sm:$0xff]
        %v414 = vld [vmem:[%s295 + $0x1f0] sm:$0xff]
        %v415 = vld [vmem:[%s295 + $0x1f8] sm:$0xff]
        %v416 = vld [vmem:[%s295 + $0x200] sm:$0xff]
        %v417 = vld [vmem:[%s295 + $0x208] sm:$0xff]
        %v418 = vld [vmem:[%s295 + $0x210] sm:$0xff]
        %v419 = vld [vmem:[%s295 + $0x218] sm:$0xff]
        %v420 = vld [vmem:[%s295 + $0x220] sm:$0xff]
        %v421 = vld [vmem:[%s295 + $0x228] sm:$0xff]
        %v422 = vld [vmem:[%s295 + $0x230] sm:$0xff]
        %v423 = vld [vmem:[%s295 + $0x238] sm:$0xff]
        %v424 = vld [vmem:[%s295 + $0x240] sm:$0xff]
        %v425 = vld [vmem:[%s295 + $0x248] sm:$0xff]
        %v426 = vld [vmem:[%s295 + $0x250] sm:$0xff]
        %v427 = vld [vmem:[%s295 + $0x258] sm:$0xff]
        %v428 = vld [vmem:[%s295 + $0x260] sm:$0xff]
        %v429 = vld [vmem:[%s295 + $0x268] sm:$0xff]
        %v430 = vld [vmem:[%s295 + $0x270] sm:$0xff]
        %v431 = vld [vmem:[%s295 + $0x278] sm:$0xff]
        %v432 = vld [vmem:[%s295 + $0x280] sm:$0xff]
        %v433 = vld [vmem:[%s295 + $0x288] sm:$0xff]
        %v434 = vld [vmem:[%s295 + $0x290] sm:$0xff]
        %v435 = vld [vmem:[%s295 + $0x298] sm:$0xff]
        %v436 = vld [vmem:[%s295 + $0x2a0] sm:$0xff]
        %v437 = vld [vmem:[%s295 + $0x2a8] sm:$0xff]
        %v438 = vld [vmem:[%s295 + $0x2b0] sm:$0xff]
        %v439 = vld [vmem:[%s295 + $0x2b8] sm:$0xff]
        %v440 = vld [vmem:[%s295 + $0x2c0] sm:$0xff]
        %v441 = vld [vmem:[%s295 + $0x2c8] sm:$0xff]
        %v442 = vld [vmem:[%s295 + $0x2d0] sm:$0xff]
        %v443 = vld [vmem:[%s295 + $0x2d8] sm:$0xff]
        %v444 = vld [vmem:[%s295 + $0x2e0] sm:$0xff]
        %v445 = vld [vmem:[%s295 + $0x2e8] sm:$0xff]
        %v446 = vld [vmem:[%s295 + $0x2f0] sm:$0xff]
        %v447 = vld [vmem:[%s295 + $0x2f8] sm:$0xff]
        %v448 = vld [vmem:[%s295 + $0x300] sm:$0xff]
        %v449 = vld [vmem:[%s295 + $0x308] sm:$0xff]
        %v450 = vld [vmem:[%s295 + $0x310] sm:$0xff]
        %v451 = vld [vmem:[%s295 + $0x318] sm:$0xff]
        %v452 = vld [vmem:[%s295 + $0x320] sm:$0xff]
        %v453 = vld [vmem:[%s295 + $0x328] sm:$0xff]
        %v454 = vld [vmem:[%s295 + $0x330] sm:$0xff]
        %v455 = vld [vmem:[%s295 + $0x338] sm:$0xff]
        %v456 = vld [vmem:[%s295 + $0x340] sm:$0xff]
        %v457 = vld [vmem:[%s295 + $0x348] sm:$0xff]
        %v458 = vld [vmem:[%s295 + $0x350] sm:$0xff]
        %v459 = vld [vmem:[%s295 + $0x358] sm:$0xff]
        %v460 = vld [vmem:[%s295 + $0x360] sm:$0xff]
        %v461 = vld [vmem:[%s295 + $0x368] sm:$0xff]
        %v462 = vld [vmem:[%s295 + $0x370] sm:$0xff]
        %v463 = vld [vmem:[%s295 + $0x378] sm:$0xff]
        %v464 = vld [vmem:[%s295 + $0x380] sm:$0xff]
        %v465 = vld [vmem:[%s295 + $0x388] sm:$0xff]
        %v466 = vld [vmem:[%s295 + $0x390] sm:$0xff]
        %v467 = vld [vmem:[%s295 + $0x398] sm:$0xff]
        %v468 = vld [vmem:[%s295 + $0x3a0] sm:$0xff]
        %v469 = vld [vmem:[%s295 + $0x3a8] sm:$0xff]
        %v470 = vld [vmem:[%s295 + $0x3b0] sm:$0xff]
        %v471 = vld [vmem:[%s295 + $0x3b8] sm:$0xff]
        %v472 = vld [vmem:[%s295 + $0x3c0] sm:$0xff]
        %v473 = vld [vmem:[%s295 + $0x3c8] sm:$0xff]
        %v474 = vld [vmem:[%s295 + $0x3d0] sm:$0xff]
        %v475 = vld [vmem:[%s295 + $0x3d8] sm:$0xff]
        %v476 = vld [vmem:[%s295 + $0x3e0] sm:$0xff]
        %v477 = vld [vmem:[%s295 + $0x3e8] sm:$0xff]
        %v478 = vld [vmem:[%s295 + $0x3f0] sm:$0xff]
        %v479 = vld [vmem:[%s295 + $0x3f8] sm:$0xff]
        %v480 = vld [vmem:[%s295 + $0x400] sm:$0xff]
        %v481 = vld [vmem:[%s295 + $0x408] sm:$0xff]
        %v482 = vld [vmem:[%s295 + $0x410] sm:$0xff]
        %v483 = vld [vmem:[%s295 + $0x418] sm:$0xff]
        %v484 = vld [vmem:[%s295 + $0x420] sm:$0xff]
        %v485 = vld [vmem:[%s295 + $0x428] sm:$0xff]
        %v486 = vld [vmem:[%s295 + $0x430] sm:$0xff]
        %v487 = vld [vmem:[%s295 + $0x438] sm:$0xff]
        %v488 = vld [vmem:[%s295 + $0x440] sm:$0xff]
        %v489 = vld [vmem:[%s295 + $0x448] sm:$0xff]
        %v490 = vld [vmem:[%s295 + $0x450] sm:$0xff]
        %v491 = vld [vmem:[%s295 + $0x458] sm:$0xff]
        %v492 = vld [vmem:[%s295 + $0x460] sm:$0xff]
        %v493 = vld [vmem:[%s295 + $0x468] sm:$0xff]
        %v494 = vld [vmem:[%s295 + $0x470] sm:$0xff]
        %v495 = vld [vmem:[%s295 + $0x478] sm:$0xff]
        %v496 = vld [vmem:[#allocation5] sm:$0xf]
        %v497 = vld [vmem:[#allocation5 + $0x4] sm:$0xf]
        %v498 = vld [vmem:[#allocation5 + $0x8] sm:$0xf]
        %v499 = vld [vmem:[#allocation5 + $0xc] sm:$0xf]
        %v500 = vld [vmem:[#allocation5 + $0x10] sm:$0xf]
        %v501 = vld [vmem:[#allocation5 + $0x14] sm:$0xf]
        %v502 = vld [vmem:[#allocation5 + $0x18] sm:$0xf]
        %v503 = vld [vmem:[#allocation5 + $0x1c] sm:$0xf]
        %v504 = vld [vmem:[#allocation5 + $0x20] sm:$0xf]
        %v505 = vld [vmem:[#allocation5 + $0x24] sm:$0xf]
        %v506 = vld [vmem:[#allocation5 + $0x28] sm:$0xf]
        %v507 = vld [vmem:[#allocation5 + $0x2c] sm:$0xf]
        %v508 = vld [vmem:[#allocation5 + $0x30] sm:$0xf]
        %v509 = vld [vmem:[#allocation5 + $0x34] sm:$0xf]
        %v510 = vld [vmem:[#allocation5 + $0x38] sm:$0xf]
        %v511 = vld [vmem:[#allocation5 + $0x3c] sm:$0xf]
        %v512 = vld [vmem:[#allocation5 + $0x40] sm:$0xf]
        %v513 = vld [vmem:[#allocation5 + $0x44] sm:$0xf]
        %v514 = vld [vmem:[#allocation5 + $0x48] sm:$0xf]
        %v515 = vld [vmem:[#allocation5 + $0x4c] sm:$0xf]
        %v516 = vld [vmem:[#allocation5 + $0x50] sm:$0xf]
        %v517 = vld [vmem:[#allocation5 + $0x54] sm:$0xf]
        %v518 = vld [vmem:[#allocation5 + $0x58] sm:$0xf]
        %v519 = vld [vmem:[#allocation5 + $0x5c] sm:$0xf]
        %v520 = vld [vmem:[#allocation5 + $0x60] sm:$0xf]
        %v521 = vld [vmem:[#allocation5 + $0x64] sm:$0xf]
        %v522 = vld [vmem:[#allocation5 + $0x68] sm:$0xf]
        %v523 = vld [vmem:[#allocation5 + $0x6c] sm:$0xf]
        %v524 = vld [vmem:[#allocation5 + $0x70] sm:$0xf]
        %v525 = vld [vmem:[#allocation5 + $0x74] sm:$0xf]
        %v526 = vld [vmem:[#allocation5 + $0x78] sm:$0xf]
        %v527 = vld [vmem:[#allocation5 + $0x7c] sm:$0xf]
        %v528 = vld [vmem:[#allocation5 + $0x80] sm:$0xf]
        %v529 = vld [vmem:[#allocation5 + $0x84] sm:$0xf]
        %v530 = vld [vmem:[#allocation5 + $0x88] sm:$0xf]
        %v531 = vld [vmem:[#allocation5 + $0x8c] sm:$0xf]
        %v532 = vld [vmem:[#allocation5 + $0x90] sm:$0xf]
        %v533 = vld [vmem:[#allocation5 + $0x94] sm:$0xf]
        %v534 = vld [vmem:[#allocation5 + $0x98] sm:$0xf]
        %v535 = vld [vmem:[#allocation5 + $0x9c] sm:$0xf]
        %v536 = vld [vmem:[#allocation5 + $0xa0] sm:$0xf]
        %v537 = vld [vmem:[#allocation5 + $0xa4] sm:$0xf]
        %v538 = vld [vmem:[#allocation5 + $0xa8] sm:$0xf]
        %v539 = vld [vmem:[#allocation5 + $0xac] sm:$0xf]
        %v540 = vld [vmem:[#allocation5 + $0xb0] sm:$0xf]
        %v541 = vld [vmem:[#allocation5 + $0xb4] sm:$0xf]
        %v542 = vld [vmem:[#allocation5 + $0xb8] sm:$0xf]
        %v543 = vld [vmem:[#allocation5 + $0xbc] sm:$0xf]
        %v544 = vld [vmem:[#allocation5 + $0xc0] sm:$0xf]
        %v545 = vld [vmem:[#allocation5 + $0xc4] sm:$0xf]
        %v546 = vld [vmem:[#allocation5 + $0xc8] sm:$0xf]
        %v547 = vld [vmem:[#allocation5 + $0xcc] sm:$0xf]
        %v548 = vld [vmem:[#allocation5 + $0xd0] sm:$0xf]
        %v549 = vld [vmem:[#allocation5 + $0xd4] sm:$0xf]
        %v550 = vld [vmem:[#allocation5 + $0xd8] sm:$0xf]
        %v551 = vld [vmem:[#allocation5 + $0xdc] sm:$0xf]
        %v552 = vld [vmem:[#allocation5 + $0xe0] sm:$0xf]
        %v553 = vld [vmem:[#allocation5 + $0xe4] sm:$0xf]
        %v554 = vld [vmem:[#allocation5 + $0xe8] sm:$0xf]
        %v555 = vld [vmem:[#allocation5 + $0xec] sm:$0xf]
        %v556 = vld [vmem:[#allocation5 + $0xf0] sm:$0xf]
        %v557 = vld [vmem:[#allocation5 + $0xf4] sm:$0xf]
        %v558 = vld [vmem:[#allocation5 + $0xf8] sm:$0xf]
        %v559 = vld [vmem:[#allocation5 + $0xfc] sm:$0xf]
        %v560 = vld [vmem:[#allocation5 + $0x100] sm:$0xf]
        %v561 = vld [vmem:[#allocation5 + $0x104] sm:$0xf]
        %v562 = vld [vmem:[#allocation5 + $0x108] sm:$0xf]
        %v563 = vld [vmem:[#allocation5 + $0x10c] sm:$0xf]
        %v564 = vld [vmem:[#allocation5 + $0x110] sm:$0xf]
        %v565 = vld [vmem:[#allocation5 + $0x114] sm:$0xf]
        %v566 = vld [vmem:[#allocation5 + $0x118] sm:$0xf]
        %v567 = vld [vmem:[#allocation5 + $0x11c] sm:$0xf]
        %v568 = vld [vmem:[#allocation5 + $0x120] sm:$0xf]
        %v569 = vld [vmem:[#allocation5 + $0x124] sm:$0xf]
        %v570 = vld [vmem:[#allocation5 + $0x128] sm:$0xf]
        %v571 = vld [vmem:[#allocation5 + $0x12c] sm:$0xf]
        %v572 = vld [vmem:[#allocation5 + $0x130] sm:$0xf]
        %v573 = vld [vmem:[#allocation5 + $0x134] sm:$0xf]
        %v574 = vld [vmem:[#allocation5 + $0x138] sm:$0xf]
        %v575 = vld [vmem:[#allocation5 + $0x13c] sm:$0xf]
        %v576 = vld [vmem:[#allocation5 + $0x140] sm:$0xf]
        %v577 = vld [vmem:[#allocation5 + $0x144] sm:$0xf]
        %v578 = vld [vmem:[#allocation5 + $0x148] sm:$0xf]
        %v579 = vld [vmem:[#allocation5 + $0x14c] sm:$0xf]
        %v580 = vld [vmem:[#allocation5 + $0x150] sm:$0xf]
        %v581 = vld [vmem:[#allocation5 + $0x154] sm:$0xf]
        %v582 = vld [vmem:[#allocation5 + $0x158] sm:$0xf]
        %v583 = vld [vmem:[#allocation5 + $0x15c] sm:$0xf]
        %v584 = vld [vmem:[#allocation5 + $0x160] sm:$0xf]
        %v585 = vld [vmem:[#allocation5 + $0x164] sm:$0xf]
        %v586 = vld [vmem:[#allocation5 + $0x168] sm:$0xf]
        %v587 = vld [vmem:[#allocation5 + $0x16c] sm:$0xf]
        %v588 = vld [vmem:[#allocation5 + $0x170] sm:$0xf]
        %v589 = vld [vmem:[#allocation5 + $0x174] sm:$0xf]
        %v590 = vld [vmem:[#allocation5 + $0x178] sm:$0xf]
        %v591 = vld [vmem:[#allocation5 + $0x17c] sm:$0xf]
        %v592 = vld [vmem:[#allocation5 + $0x180] sm:$0xf]
        %v593 = vld [vmem:[#allocation5 + $0x184] sm:$0xf]
        %v594 = vld [vmem:[#allocation5 + $0x188] sm:$0xf]
        %v595 = vld [vmem:[#allocation5 + $0x18c] sm:$0xf]
        %v596 = vld [vmem:[#allocation5 + $0x190] sm:$0xf]
        %v597 = vld [vmem:[#allocation5 + $0x194] sm:$0xf]
        %v598 = vld [vmem:[#allocation5 + $0x198] sm:$0xf]
        %v599 = vld [vmem:[#allocation5 + $0x19c] sm:$0xf]
        %v600 = vld [vmem:[#allocation5 + $0x1a0] sm:$0xf]
        %v601 = vld [vmem:[#allocation5 + $0x1a4] sm:$0xf]
        %v602 = vld [vmem:[#allocation5 + $0x1a8] sm:$0xf]
        %v603 = vld [vmem:[#allocation5 + $0x1ac] sm:$0xf]
        %v604 = vld [vmem:[#allocation5 + $0x1b0] sm:$0xf]
        %v605 = vld [vmem:[#allocation5 + $0x1b4] sm:$0xf]
        %v606 = vld [vmem:[#allocation5 + $0x1b8] sm:$0xf]
        %v607 = vld [vmem:[#allocation5 + $0x1bc] sm:$0xf]
        %v608 = vld [vmem:[#allocation5 + $0x1c0] sm:$0xf]
        %v609 = vld [vmem:[#allocation5 + $0x1c4] sm:$0xf]
        %v610 = vld [vmem:[#allocation5 + $0x1c8] sm:$0xf]
        %v611 = vld [vmem:[#allocation5 + $0x1cc] sm:$0xf]
        %v612 = vld [vmem:[#allocation5 + $0x1d0] sm:$0xf]
        %v613 = vld [vmem:[#allocation5 + $0x1d4] sm:$0xf]
        %v614 = vld [vmem:[#allocation5 + $0x1d8] sm:$0xf]
        %v615 = vld [vmem:[#allocation5 + $0x1dc] sm:$0xf]
        %v616 = vld [vmem:[#allocation5 + $0x1e0] sm:$0xf]
        %v617 = vld [vmem:[#allocation5 + $0x1e4] sm:$0xf]
        %v618 = vld [vmem:[#allocation5 + $0x1e8] sm:$0xf]
        %v619 = vld [vmem:[#allocation5 + $0x1ec] sm:$0xf]
        %v620 = vld [vmem:[#allocation5 + $0x1f0] sm:$0xf]
        %v621 = vld [vmem:[#allocation5 + $0x1f4] sm:$0xf]
        %v622 = vld [vmem:[#allocation5 + $0x1f8] sm:$0xf]
        %v623 = vld [vmem:[#allocation5 + $0x1fc] sm:$0xf]
        %v624 = vld [vmem:[#allocation5 + $0x200] sm:$0xf]
        %v625 = vld [vmem:[#allocation5 + $0x204] sm:$0xf]
        %v626 = vld [vmem:[#allocation5 + $0x208] sm:$0xf]
        %v627 = vld [vmem:[#allocation5 + $0x20c] sm:$0xf]
        %v628 = vld [vmem:[#allocation5 + $0x210] sm:$0xf]
        %v629 = vld [vmem:[#allocation5 + $0x214] sm:$0xf]
        %v630 = vld [vmem:[#allocation5 + $0x218] sm:$0xf]
        %v631 = vld [vmem:[#allocation5 + $0x21c] sm:$0xf]
        %v632 = vld [vmem:[#allocation5 + $0x220] sm:$0xf]
        %v633 = vld [vmem:[#allocation5 + $0x224] sm:$0xf]
        %v634 = vld [vmem:[#allocation5 + $0x228] sm:$0xf]
        %v635 = vld [vmem:[#allocation5 + $0x22c] sm:$0xf]
        %v636 = vld [vmem:[#allocation5 + $0x230] sm:$0xf]
        %v637 = vld [vmem:[#allocation5 + $0x234] sm:$0xf]
        %v638 = vld [vmem:[#allocation5 + $0x238] sm:$0xf]
        %v639 = vld [vmem:[#allocation5 + $0x23c] sm:$0xf]
        %v640 = vld [vmem:[#allocation5 + $0x240] sm:$0xf]
        %v641 = vld [vmem:[#allocation5 + $0x244] sm:$0xf]
        %v642 = vld [vmem:[#allocation5 + $0x248] sm:$0xf]
        %v643 = vld [vmem:[#allocation5 + $0x24c] sm:$0xf]
        %v644 = vld [vmem:[#allocation5 + $0x250] sm:$0xf]
        %v645 = vld [vmem:[#allocation5 + $0x254] sm:$0xf]
        %v646 = vld [vmem:[#allocation5 + $0x258] sm:$0xf]
        %v647 = vld [vmem:[#allocation5 + $0x25c] sm:$0xf]
        %v648 = vld [vmem:[#allocation5 + $0x260] sm:$0xf]
        %v649 = vld [vmem:[#allocation5 + $0x264] sm:$0xf]
        %v650 = vld [vmem:[#allocation5 + $0x268] sm:$0xf]
        %v651 = vld [vmem:[#allocation5 + $0x26c] sm:$0xf]
        %v652 = vld [vmem:[#allocation5 + $0x270] sm:$0xf]
        %v653 = vld [vmem:[#allocation5 + $0x274] sm:$0xf]
        %v654 = vld [vmem:[#allocation5 + $0x278] sm:$0xf]
        %v655 = vld [vmem:[#allocation5 + $0x27c] sm:$0xf]
        %v656 = vld [vmem:[#allocation5 + $0x280] sm:$0xf]
        %v657 = vld [vmem:[#allocation5 + $0x284] sm:$0xf]
        %v658 = vld [vmem:[#allocation5 + $0x288] sm:$0xf]
        %v659 = vld [vmem:[#allocation5 + $0x28c] sm:$0xf]
        %v660 = vld [vmem:[#allocation5 + $0x290] sm:$0xf]
        %v661 = vld [vmem:[#allocation5 + $0x294] sm:$0xf]
        %v662 = vld [vmem:[#allocation5 + $0x298] sm:$0xf]
        %v663 = vld [vmem:[#allocation5 + $0x29c] sm:$0xf]
        %v664 = vld [vmem:[#allocation5 + $0x2a0] sm:$0xf]
        %v665 = vld [vmem:[#allocation5 + $0x2a4] sm:$0xf]
        %v666 = vld [vmem:[#allocation5 + $0x2a8] sm:$0xf]
        %v667 = vld [vmem:[#allocation5 + $0x2ac] sm:$0xf]
        %v668 = vld [vmem:[#allocation5 + $0x2b0] sm:$0xf]
        %v669 = vld [vmem:[#allocation5 + $0x2b4] sm:$0xf]
        %v670 = vld [vmem:[#allocation5 + $0x2b8] sm:$0xf]
        %v671 = vld [vmem:[#allocation5 + $0x2bc] sm:$0xf]
        %v672 = vld [vmem:[#allocation5 + $0x2c0] sm:$0xf]
        %v673 = vld [vmem:[#allocation5 + $0x2c4] sm:$0xf]
        %v674 = vld [vmem:[#allocation5 + $0x2c8] sm:$0xf]
        %v675 = vld [vmem:[#allocation5 + $0x2cc] sm:$0xf]
        %v676 = vld [vmem:[#allocation5 + $0x2d0] sm:$0xf]
        %v677 = vld [vmem:[#allocation5 + $0x2d4] sm:$0xf]
        %v678 = vld [vmem:[#allocation5 + $0x2d8] sm:$0xf]
        %v679 = vld [vmem:[#allocation5 + $0x2dc] sm:$0xf]
        %v680 = vld [vmem:[#allocation5 + $0x2e0] sm:$0xf]
        %v681 = vld [vmem:[#allocation5 + $0x2e4] sm:$0xf]
        %v682 = vld [vmem:[#allocation5 + $0x2e8] sm:$0xf]
        %v683 = vld [vmem:[#allocation5 + $0x2ec] sm:$0xf]
        %v684 = vld [vmem:[#allocation5 + $0x2f0] sm:$0xf]
        %v685 = vld [vmem:[#allocation5 + $0x2f4] sm:$0xf]
        %v686 = vld [vmem:[#allocation5 + $0x2f8] sm:$0xf]
        %v687 = vld [vmem:[#allocation5 + $0x2fc] sm:$0xf]
        %v688 = vld [vmem:[#allocation5 + $0x300] sm:$0xf]
        %v689 = vld [vmem:[#allocation5 + $0x304] sm:$0xf]
        %v690 = vld [vmem:[#allocation5 + $0x308] sm:$0xf]
        %v691 = vld [vmem:[#allocation5 + $0x30c] sm:$0xf]
        %v692 = vld [vmem:[#allocation5 + $0x310] sm:$0xf]
        %v693 = vld [vmem:[#allocation5 + $0x314] sm:$0xf]
        %v694 = vld [vmem:[#allocation5 + $0x318] sm:$0xf]
        %v695 = vld [vmem:[#allocation5 + $0x31c] sm:$0xf]
        %v696 = vld [vmem:[#allocation5 + $0x320] sm:$0xf]
        %v697 = vld [vmem:[#allocation5 + $0x324] sm:$0xf]
        %v698 = vld [vmem:[#allocation5 + $0x328] sm:$0xf]
        %v699 = vld [vmem:[#allocation5 + $0x32c] sm:$0xf]
        %v700 = vld [vmem:[#allocation5 + $0x330] sm:$0xf]
        %v701 = vld [vmem:[#allocation5 + $0x334] sm:$0xf]
        %v702 = vld [vmem:[#allocation5 + $0x338] sm:$0xf]
        %v703 = vld [vmem:[#allocation5 + $0x33c] sm:$0xf]
        %v704 = vld [vmem:[#allocation5 + $0x340] sm:$0xf]
        %v705 = vld [vmem:[#allocation5 + $0x344] sm:$0xf]
        %v706 = vld [vmem:[#allocation5 + $0x348] sm:$0xf]
        %v707 = vld [vmem:[#allocation5 + $0x34c] sm:$0xf]
        %v708 = vld [vmem:[#allocation5 + $0x350] sm:$0xf]
        %v709 = vld [vmem:[#allocation5 + $0x354] sm:$0xf]
        %v710 = vld [vmem:[#allocation5 + $0x358] sm:$0xf]
        %v711 = vld [vmem:[#allocation5 + $0x35c] sm:$0xf]
        %v712 = vld [vmem:[#allocation5 + $0x360] sm:$0xf]
        %v713 = vld [vmem:[#allocation5 + $0x364] sm:$0xf]
        %v714 = vld [vmem:[#allocation5 + $0x368] sm:$0xf]
        %v715 = vld [vmem:[#allocation5 + $0x36c] sm:$0xf]
        %v716 = vld [vmem:[#allocation5 + $0x370] sm:$0xf]
        %v717 = vld [vmem:[#allocation5 + $0x374] sm:$0xf]
        %v718 = vld [vmem:[#allocation5 + $0x378] sm:$0xf]
        %v719 = vld [vmem:[#allocation5 + $0x37c] sm:$0xf]
        %v720 = vld [vmem:[#allocation5 + $0x380] sm:$0xf]
        %v721 = vld [vmem:[#allocation5 + $0x384] sm:$0xf]
        %v722 = vld [vmem:[#allocation5 + $0x388] sm:$0xf]
        %v723 = vld [vmem:[#allocation5 + $0x38c] sm:$0xf]
        %v724 = vld [vmem:[#allocation5 + $0x390] sm:$0xf]
        %v725 = vld [vmem:[#allocation5 + $0x394] sm:$0xf]
        %v726 = vld [vmem:[#allocation5 + $0x398] sm:$0xf]
        %v727 = vld [vmem:[#allocation5 + $0x39c] sm:$0xf]
        %v728 = vld [vmem:[#allocation5 + $0x3a0] sm:$0xf]
        %v729 = vld [vmem:[#allocation5 + $0x3a4] sm:$0xf]
        %v730 = vld [vmem:[#allocation5 + $0x3a8] sm:$0xf]
        %v731 = vld [vmem:[#allocation5 + $0x3ac] sm:$0xf]
        %v732 = vld [vmem:[#allocation5 + $0x3b0] sm:$0xf]
        %v733 = vld [vmem:[#allocation5 + $0x3b4] sm:$0xf]
        %v734 = vld [vmem:[#allocation5 + $0x3b8] sm:$0xf]
        %v735 = vld [vmem:[#allocation5 + $0x3bc] sm:$0xf]
        %v736 = vld [vmem:[#allocation5 + $0x3c0] sm:$0xf]
        %v737 = vld [vmem:[#allocation5 + $0x3c4] sm:$0xf]
        %v738 = vld [vmem:[#allocation5 + $0x3c8] sm:$0xf]
        %v739 = vld [vmem:[#allocation5 + $0x3cc] sm:$0xf]
        %v740 = vld [vmem:[#allocation5 + $0x3d0] sm:$0xf]
        %v741 = vld [vmem:[#allocation5 + $0x3d4] sm:$0xf]
        %v742 = vld [vmem:[#allocation5 + $0x3d8] sm:$0xf]
        %v743 = vld [vmem:[#allocation5 + $0x3dc] sm:$0xf]
        %v744 = vld [vmem:[#allocation5 + $0x3e0] sm:$0xf]
        %v745 = vld [vmem:[#allocation5 + $0x3e4] sm:$0xf]
        %v746 = vld [vmem:[#allocation5 + $0x3e8] sm:$0xf]
        %v747 = vld [vmem:[#allocation5 + $0x3ec] sm:$0xf]
        %v748 = vld [vmem:[#allocation5 + $0x3f0] sm:$0xf]
        %v749 = vld [vmem:[#allocation5 + $0x3f4] sm:$0xf]
        %v750 = vld [vmem:[#allocation5 + $0x3f8] sm:$0xf]
        %v751 = vld [vmem:[#allocation5 + $0x3fc] sm:$0xf]
        %v752 = vld [vmem:[#allocation5 + $0x400] sm:$0xf]
        %v753 = vld [vmem:[#allocation5 + $0x404] sm:$0xf]
        %v754 = vld [vmem:[#allocation5 + $0x408] sm:$0xf]
        %v755 = vld [vmem:[#allocation5 + $0x40c] sm:$0xf]
        %v756 = vld [vmem:[#allocation5 + $0x410] sm:$0xf]
        %v757 = vld [vmem:[#allocation5 + $0x414] sm:$0xf]
        %v758 = vld [vmem:[#allocation5 + $0x418] sm:$0xf]
        %v759 = vld [vmem:[#allocation5 + $0x41c] sm:$0xf]
        %v760 = vld [vmem:[#allocation5 + $0x420] sm:$0xf]
        %v761 = vld [vmem:[#allocation5 + $0x424] sm:$0xf]
        %v762 = vld [vmem:[#allocation5 + $0x428] sm:$0xf]
        %v763 = vld [vmem:[#allocation5 + $0x42c] sm:$0xf]
        %v764 = vld [vmem:[#allocation5 + $0x430] sm:$0xf]
        %v765 = vld [vmem:[#allocation5 + $0x434] sm:$0xf]
        %v766 = vld [vmem:[#allocation5 + $0x438] sm:$0xf]
        %v767 = vld [vmem:[#allocation5 + $0x43c] sm:$0xf]
        %v768 = vld [vmem:[#allocation5 + $0x440] sm:$0xf]
        %v769 = vld [vmem:[#allocation5 + $0x444] sm:$0xf]
        %v770 = vld [vmem:[#allocation5 + $0x448] sm:$0xf]
        %v771 = vld [vmem:[#allocation5 + $0x44c] sm:$0xf]
        %v772 = vld [vmem:[#allocation5 + $0x450] sm:$0xf]
        %v773 = vld [vmem:[#allocation5 + $0x454] sm:$0xf]
        %v774 = vld [vmem:[#allocation5 + $0x458] sm:$0xf]
        %v775 = vld [vmem:[#allocation5 + $0x45c] sm:$0xf]
        %v776 = vld [vmem:[#allocation5 + $0x460] sm:$0xf]
        %v777 = vld [vmem:[#allocation5 + $0x464] sm:$0xf]
        %v778 = vld [vmem:[#allocation5 + $0x468] sm:$0xf]
        %v779 = vld [vmem:[#allocation5 + $0x46c] sm:$0xf]
        %v780 = vld [vmem:[#allocation5 + $0x470] sm:$0xf]
        %v781 = vld [vmem:[#allocation5 + $0x474] sm:$0xf]
        %v782 = vld [vmem:[#allocation5 + $0x478] sm:$0xf]
        %v783 = vld [vmem:[#allocation5 + $0x47c] sm:$0xf]
        %v784 = vld [vmem:[#allocation5 + $0x480] sm:$0xf]
        %v785 = vld [vmem:[#allocation5 + $0x484] sm:$0xf]
        %v786 = vld [vmem:[#allocation5 + $0x488] sm:$0xf]
        %v787 = vld [vmem:[#allocation5 + $0x48c] sm:$0xf]
        %v788 = vld [vmem:[#allocation5 + $0x490] sm:$0xf]
        %v789 = vld [vmem:[#allocation5 + $0x494] sm:$0xf]
        %v790 = vld [vmem:[#allocation5 + $0x498] sm:$0xf]
        %v791 = vld [vmem:[#allocation5 + $0x49c] sm:$0xf]
        %v792 = vld [vmem:[#allocation5 + $0x4a0] sm:$0xf]
        %v793 = vld [vmem:[#allocation5 + $0x4a4] sm:$0xf]
        %v794 = vld [vmem:[#allocation5 + $0x4a8] sm:$0xf]
        %v795 = vld [vmem:[#allocation5 + $0x4ac] sm:$0xf]
        %v796 = vld [vmem:[#allocation5 + $0x4b0] sm:$0xf]
        %v797 = vld [vmem:[#allocation5 + $0x4b4] sm:$0xf]
        %v798 = vld [vmem:[#allocation5 + $0x4b8] sm:$0xf]
        %v799 = vld [vmem:[#allocation5 + $0x4bc] sm:$0xf]
        %v800 = vld [vmem:[#allocation5 + $0x4c0] sm:$0xf]
        %v801 = vld [vmem:[#allocation5 + $0x4c4] sm:$0xf]
        %v802 = vld [vmem:[#allocation5 + $0x4c8] sm:$0xf]
        %v803 = vld [vmem:[#allocation5 + $0x4cc] sm:$0xf]
        %v804 = vld [vmem:[#allocation5 + $0x4d0] sm:$0xf]
        %v805 = vld [vmem:[#allocation5 + $0x4d4] sm:$0xf]
        %v806 = vld [vmem:[#allocation5 + $0x4d8] sm:$0xf]
        %v807 = vld [vmem:[#allocation5 + $0x4dc] sm:$0xf]
        %v808 = vld [vmem:[#allocation5 + $0x4e0] sm:$0xf]
        %v809 = vld [vmem:[#allocation5 + $0x4e4] sm:$0xf]
        %v810 = vld [vmem:[#allocation5 + $0x4e8] sm:$0xf]
        %v811 = vld [vmem:[#allocation5 + $0x4ec] sm:$0xf]
        %v812 = vld [vmem:[#allocation5 + $0x4f0] sm:$0xf]
        %v813 = vld [vmem:[#allocation5 + $0x4f4] sm:$0xf]
        %v814 = vld [vmem:[#allocation5 + $0x4f8] sm:$0xf]
        %v815 = vld [vmem:[#allocation5 + $0x4fc] sm:$0xf]
        %v816 = vld [vmem:[#allocation5 + $0x500] sm:$0xf]
        %v817 = vld [vmem:[#allocation5 + $0x504] sm:$0xf]
        %v818 = vld [vmem:[#allocation5 + $0x508] sm:$0xf]
        %v819 = vld [vmem:[#allocation5 + $0x50c] sm:$0xf]
        %v820 = vld [vmem:[#allocation5 + $0x510] sm:$0xf]
        %v821 = vld [vmem:[#allocation5 + $0x514] sm:$0xf]
        %v822 = vld [vmem:[#allocation5 + $0x518] sm:$0xf]
        %v823 = vld [vmem:[#allocation5 + $0x51c] sm:$0xf]
        %v824 = vld [vmem:[#allocation5 + $0x520] sm:$0xf]
        %v825 = vld [vmem:[#allocation5 + $0x524] sm:$0xf]
        %v826 = vld [vmem:[#allocation5 + $0x528] sm:$0xf]
        %v827 = vld [vmem:[#allocation5 + $0x52c] sm:$0xf]
        %v828 = vld [vmem:[#allocation5 + $0x530] sm:$0xf]
        %v829 = vld [vmem:[#allocation5 + $0x534] sm:$0xf]
        %v830 = vld [vmem:[#allocation5 + $0x538] sm:$0xf]
        %v831 = vld [vmem:[#allocation5 + $0x53c] sm:$0xf]
        %v832 = vld [vmem:[#allocation5 + $0x540] sm:$0xf]
        %v833 = vld [vmem:[#allocation5 + $0x544] sm:$0xf]
        %v834 = vld [vmem:[#allocation5 + $0x548] sm:$0xf]
        %v835 = vld [vmem:[#allocation5 + $0x54c] sm:$0xf]
        %v836 = vld [vmem:[#allocation5 + $0x550] sm:$0xf]
        %v837 = vld [vmem:[#allocation5 + $0x554] sm:$0xf]
        %v838 = vld [vmem:[#allocation5 + $0x558] sm:$0xf]
        %v839 = vld [vmem:[#allocation5 + $0x55c] sm:$0xf]
        %v840 = vld [vmem:[#allocation5 + $0x560] sm:$0xf]
        %v841 = vld [vmem:[#allocation5 + $0x564] sm:$0xf]
        %v842 = vld [vmem:[#allocation5 + $0x568] sm:$0xf]
        %v843 = vld [vmem:[#allocation5 + $0x56c] sm:$0xf]
        %v844 = vld [vmem:[#allocation5 + $0x570] sm:$0xf]
        %v845 = vld [vmem:[#allocation5 + $0x574] sm:$0xf]
        %v846 = vld [vmem:[#allocation5 + $0x578] sm:$0xf]
        %v847 = vld [vmem:[#allocation5 + $0x57c] sm:$0xf]
        %v848 = vld [vmem:[#allocation5 + $0x580] sm:$0xf]
        %v849 = vld [vmem:[#allocation5 + $0x584] sm:$0xf]
        %v850 = vld [vmem:[#allocation5 + $0x588] sm:$0xf]
        %v851 = vld [vmem:[#allocation5 + $0x58c] sm:$0xf]
        %v852 = vld [vmem:[#allocation5 + $0x590] sm:$0xf]
        %v853 = vld [vmem:[#allocation5 + $0x594] sm:$0xf]
        %v854 = vld [vmem:[#allocation5 + $0x598] sm:$0xf]
        %v855 = vld [vmem:[#allocation5 + $0x59c] sm:$0xf]
        %v856 = vld [vmem:[#allocation5 + $0x5a0] sm:$0xf]
        %v857 = vld [vmem:[#allocation5 + $0x5a4] sm:$0xf]
        %v858 = vld [vmem:[#allocation5 + $0x5a8] sm:$0xf]
        %v859 = vld [vmem:[#allocation5 + $0x5ac] sm:$0xf]
        %v860 = vld [vmem:[#allocation5 + $0x5b0] sm:$0xf]
        %v861 = vld [vmem:[#allocation5 + $0x5b4] sm:$0xf]
        %v862 = vld [vmem:[#allocation5 + $0x5b8] sm:$0xf]
        %v863 = vld [vmem:[#allocation5 + $0x5bc] sm:$0xf]
        %v864 = vld [vmem:[#allocation5 + $0x5c0] sm:$0xf]
        %v865 = vld [vmem:[#allocation5 + $0x5c4] sm:$0xf]
        %v866 = vld [vmem:[#allocation5 + $0x5c8] sm:$0xf]
        %v867 = vld [vmem:[#allocation5 + $0x5cc] sm:$0xf]
        %v868 = vld [vmem:[#allocation5 + $0x5d0] sm:$0xf]
        %v869 = vld [vmem:[#allocation5 + $0x5d4] sm:$0xf]
        %v870 = vld [vmem:[#allocation5 + $0x5d8] sm:$0xf]
        %v871 = vld [vmem:[#allocation5 + $0x5dc] sm:$0xf]
        %v872 = vld [vmem:[#allocation5 + $0x5e0] sm:$0xf]
        %v873 = vld [vmem:[#allocation5 + $0x5e4] sm:$0xf]
        %v874 = vld [vmem:[#allocation5 + $0x5e8] sm:$0xf]
        %v875 = vld [vmem:[#allocation5 + $0x5ec] sm:$0xf]
        %v876 = vld [vmem:[#allocation5 + $0x5f0] sm:$0xf]
        %v877 = vld [vmem:[#allocation5 + $0x5f4] sm:$0xf]
        %v878 = vld [vmem:[#allocation5 + $0x5f8] sm:$0xf]
        %v879 = vld [vmem:[#allocation5 + $0x5fc] sm:$0xf]
        %v880 = vld [vmem:[#allocation5 + $0x600] sm:$0xf]
        %v881 = vld [vmem:[#allocation5 + $0x604] sm:$0xf]
        %v882 = vld [vmem:[#allocation5 + $0x608] sm:$0xf]
        %v883 = vld [vmem:[#allocation5 + $0x60c] sm:$0xf]
        %v884 = vld [vmem:[#allocation5 + $0x610] sm:$0xf]
        %v885 = vld [vmem:[#allocation5 + $0x614] sm:$0xf]
        %v886 = vld [vmem:[#allocation5 + $0x618] sm:$0xf]
        %v887 = vld [vmem:[#allocation5 + $0x61c] sm:$0xf]
        %v888 = vld [vmem:[#allocation5 + $0x620] sm:$0xf]
        %v889 = vld [vmem:[#allocation5 + $0x624] sm:$0xf]
        %v890 = vld [vmem:[#allocation5 + $0x628] sm:$0xf]
        %v891 = vld [vmem:[#allocation5 + $0x62c] sm:$0xf]
        %v892 = vld [vmem:[#allocation5 + $0x630] sm:$0xf]
        %v893 = vld [vmem:[#allocation5 + $0x634] sm:$0xf]
        %v894 = vld [vmem:[#allocation5 + $0x638] sm:$0xf]
        %v895 = vld [vmem:[#allocation5 + $0x63c] sm:$0xf]
        %v896 = vld [vmem:[#allocation5 + $0x640] sm:$0xf]
        %v897 = vld [vmem:[#allocation5 + $0x644] sm:$0xf]
        %v898 = vld [vmem:[#allocation5 + $0x648] sm:$0xf]
        %v899 = vld [vmem:[#allocation5 + $0x64c] sm:$0xf]
        %v900 = vld [vmem:[#allocation5 + $0x650] sm:$0xf]
        %v901 = vld [vmem:[#allocation5 + $0x654] sm:$0xf]
        %v902 = vld [vmem:[#allocation5 + $0x658] sm:$0xf]
        %v903 = vld [vmem:[#allocation5 + $0x65c] sm:$0xf]
        %v904 = vld [vmem:[#allocation5 + $0x660] sm:$0xf]
        %v905 = vld [vmem:[#allocation5 + $0x664] sm:$0xf]
        %v906 = vld [vmem:[#allocation5 + $0x668] sm:$0xf]
        %v907 = vld [vmem:[#allocation5 + $0x66c] sm:$0xf]
        %v908 = vld [vmem:[#allocation5 + $0x670] sm:$0xf]
        %v909 = vld [vmem:[#allocation5 + $0x674] sm:$0xf]
        %v910 = vld [vmem:[#allocation5 + $0x678] sm:$0xf]
        %v911 = vld [vmem:[#allocation5 + $0x67c] sm:$0xf]
        %v912 = vld [vmem:[#allocation5 + $0x680] sm:$0xf]
        %v913 = vld [vmem:[#allocation5 + $0x684] sm:$0xf]
        %v914 = vld [vmem:[#allocation5 + $0x688] sm:$0xf]
        %v915 = vld [vmem:[#allocation5 + $0x68c] sm:$0xf]
        %v916 = vld [vmem:[#allocation5 + $0x690] sm:$0xf]
        %v917 = vld [vmem:[#allocation5 + $0x694] sm:$0xf]
        %v918 = vld [vmem:[#allocation5 + $0x698] sm:$0xf]
        %v919 = vld [vmem:[#allocation5 + $0x69c] sm:$0xf]
        %v920 = vld [vmem:[#allocation5 + $0x6a0] sm:$0xf]
        %v921 = vld [vmem:[#allocation5 + $0x6a4] sm:$0xf]
        %v922 = vld [vmem:[#allocation5 + $0x6a8] sm:$0xf]
        %v923 = vld [vmem:[#allocation5 + $0x6ac] sm:$0xf]
        %v924 = vld [vmem:[#allocation5 + $0x6b0] sm:$0xf]
        %v925 = vld [vmem:[#allocation5 + $0x6b4] sm:$0xf]
        %v926 = vld [vmem:[#allocation5 + $0x6b8] sm:$0xf]
        %v927 = vld [vmem:[#allocation5 + $0x6bc] sm:$0xf]
        %v928 = vld [vmem:[#allocation5 + $0x6c0] sm:$0xf]
        %v929 = vld [vmem:[#allocation5 + $0x6c4] sm:$0xf]
        %v930 = vld [vmem:[#allocation5 + $0x6c8] sm:$0xf]
        %v931 = vld [vmem:[#allocation5 + $0x6cc] sm:$0xf]
        %v932 = vld [vmem:[#allocation5 + $0x6d0] sm:$0xf]
        %v933 = vld [vmem:[#allocation5 + $0x6d4] sm:$0xf]
        %v934 = vld [vmem:[#allocation5 + $0x6d8] sm:$0xf]
        %v935 = vld [vmem:[#allocation5 + $0x6dc] sm:$0xf]
        %v936 = vld [vmem:[#allocation5 + $0x6e0] sm:$0xf]
        %v937 = vld [vmem:[#allocation5 + $0x6e4] sm:$0xf]
        %v938 = vld [vmem:[#allocation5 + $0x6e8] sm:$0xf]
        %v939 = vld [vmem:[#allocation5 + $0x6ec] sm:$0xf]
        %v940 = vld [vmem:[#allocation5 + $0x6f0] sm:$0xf]
        %v941 = vld [vmem:[#allocation5 + $0x6f4] sm:$0xf]
        %v942 = vld [vmem:[#allocation5 + $0x6f8] sm:$0xf]
        %v943 = vld [vmem:[#allocation5 + $0x6fc] sm:$0xf]
        %v944 = vld [vmem:[#allocation5 + $0x700] sm:$0xf]
        %v945 = vld [vmem:[#allocation5 + $0x704] sm:$0xf]
        %v946 = vld [vmem:[#allocation5 + $0x708] sm:$0xf]
        %v947 = vld [vmem:[#allocation5 + $0x70c] sm:$0xf]
        %v948 = vld [vmem:[#allocation5 + $0x710] sm:$0xf]
        %v949 = vld [vmem:[#allocation5 + $0x714] sm:$0xf]
        %v950 = vld [vmem:[#allocation5 + $0x718] sm:$0xf]
        %v951 = vld [vmem:[#allocation5 + $0x71c] sm:$0xf]
        %v952 = vld [vmem:[#allocation5 + $0x720] sm:$0xf]
        %v953 = vld [vmem:[#allocation5 + $0x724] sm:$0xf]
        %v954 = vld [vmem:[#allocation5 + $0x728] sm:$0xf]
        %v955 = vld [vmem:[#allocation5 + $0x72c] sm:$0xf]
        %v956 = vld [vmem:[#allocation5 + $0x730] sm:$0xf]
        %v957 = vld [vmem:[#allocation5 + $0x734] sm:$0xf]
        %v958 = vld [vmem:[#allocation5 + $0x738] sm:$0xf]
        %v959 = vld [vmem:[#allocation5 + $0x73c] sm:$0xf]
        %v960 = vld [vmem:[#allocation5 + $0x740] sm:$0xf]
        %v961 = vld [vmem:[#allocation5 + $0x744] sm:$0xf]
        %v962 = vld [vmem:[#allocation5 + $0x748] sm:$0xf]
        %v963 = vld [vmem:[#allocation5 + $0x74c] sm:$0xf]
        %v964 = vld [vmem:[#allocation5 + $0x750] sm:$0xf]
        %v965 = vld [vmem:[#allocation5 + $0x754] sm:$0xf]
        %v966 = vld [vmem:[#allocation5 + $0x758] sm:$0xf]
        %v967 = vld [vmem:[#allocation5 + $0x75c] sm:$0xf]
        %v968 = vld [vmem:[#allocation5 + $0x760] sm:$0xf]
        %v969 = vld [vmem:[#allocation5 + $0x764] sm:$0xf]
        %v970 = vld [vmem:[#allocation5 + $0x768] sm:$0xf]
        %v971 = vld [vmem:[#allocation5 + $0x76c] sm:$0xf]
        %v972 = vld [vmem:[#allocation5 + $0x770] sm:$0xf]
        %v973 = vld [vmem:[#allocation5 + $0x774] sm:$0xf]
        %v974 = vld [vmem:[#allocation5 + $0x778] sm:$0xf]
        %v975 = vld [vmem:[#allocation5 + $0x77c] sm:$0xf]
        %v976 = vld [vmem:[#allocation5 + $0x780] sm:$0xf]
        %v977 = vld [vmem:[#allocation5 + $0x784] sm:$0xf]
        %v978 = vld [vmem:[#allocation5 + $0x788] sm:$0xf]
        %v979 = vld [vmem:[#allocation5 + $0x78c] sm:$0xf]
        %v980 = vld [vmem:[#allocation5 + $0x790] sm:$0xf]
        %v981 = vld [vmem:[#allocation5 + $0x794] sm:$0xf]
        %v982 = vld [vmem:[#allocation5 + $0x798] sm:$0xf]
        %v983 = vld [vmem:[#allocation5 + $0x79c] sm:$0xf]
        %v984 = vld [vmem:[#allocation5 + $0x7a0] sm:$0xf]
        %v985 = vld [vmem:[#allocation5 + $0x7a4] sm:$0xf]
        %v986 = vld [vmem:[#allocation5 + $0x7a8] sm:$0xf]
        %v987 = vld [vmem:[#allocation5 + $0x7ac] sm:$0xf]
        %v988 = vld [vmem:[#allocation5 + $0x7b0] sm:$0xf]
        %v989 = vld [vmem:[#allocation5 + $0x7b4] sm:$0xf]
        %v990 = vld [vmem:[#allocation5 + $0x7b8] sm:$0xf]
        %v991 = vld [vmem:[#allocation5 + $0x7bc] sm:$0xf]
        %v992 = vld [vmem:[#allocation5 + $0x7c0] sm:$0xf]
        %v993 = vld [vmem:[#allocation5 + $0x7c4] sm:$0xf]
        %v994 = vld [vmem:[#allocation5 + $0x7c8] sm:$0xf]
        %v995 = vld [vmem:[#allocation5 + $0x7cc] sm:$0xf]
        %v996 = vld [vmem:[#allocation5 + $0x7d0] sm:$0xf]
        %v997 = vld [vmem:[#allocation5 + $0x7d4] sm:$0xf]
        %v998 = vld [vmem:[#allocation5 + $0x7d8] sm:$0xf]
        %v999 = vld [vmem:[#allocation5 + $0x7dc] sm:$0xf]
        %v1000 = vld [vmem:[#allocation5 + $0x7e0] sm:$0xf]
        %v1001 = vld [vmem:[#allocation5 + $0x7e4] sm:$0xf]
        %v1002 = vld [vmem:[#allocation5 + $0x7e8] sm:$0xf]
        %v1003 = vld [vmem:[#allocation5 + $0x7ec] sm:$0xf]
        %v1004 = vld [vmem:[#allocation5 + $0x7f0] sm:$0xf]
        %v1005 = vld [vmem:[#allocation5 + $0x7f4] sm:$0xf]
        %v1006 = vld [vmem:[#allocation5 + $0x7f8] sm:$0xf]
        %v1007 = vld [vmem:[#allocation5 + $0x7fc] sm:$0xf]
        %v1008 = vld [vmem:[#allocation5 + $0x800] sm:$0xf]
        %v1009 = vld [vmem:[#allocation5 + $0x804] sm:$0xf]
        %v1010 = vld [vmem:[#allocation5 + $0x808] sm:$0xf]
        %v1011 = vld [vmem:[#allocation5 + $0x80c] sm:$0xf]
        %v1012 = vld [vmem:[#allocation5 + $0x810] sm:$0xf]
        %v1013 = vld [vmem:[#allocation5 + $0x814] sm:$0xf]
        %v1014 = vld [vmem:[#allocation5 + $0x818] sm:$0xf]
        %v1015 = vld [vmem:[#allocation5 + $0x81c] sm:$0xf]
        %v1016 = vld [vmem:[#allocation5 + $0x820] sm:$0xf]
        %v1017 = vld [vmem:[#allocation5 + $0x824] sm:$0xf]
        %v1018 = vld [vmem:[#allocation5 + $0x828] sm:$0xf]
        %v1019 = vld [vmem:[#allocation5 + $0x82c] sm:$0xf]
        %v1020 = vld [vmem:[#allocation5 + $0x830] sm:$0xf]
        %v1021 = vld [vmem:[#allocation5 + $0x834] sm:$0xf]
        %v1022 = vld [vmem:[#allocation5 + $0x838] sm:$0xf]
        %v1023 = vld [vmem:[#allocation5 + $0x83c] sm:$0xf]
        %v1024 = vld [vmem:[#allocation5 + $0x840] sm:$0xf]
        %v1025 = vld [vmem:[#allocation5 + $0x844] sm:$0xf]
        %v1026 = vld [vmem:[#allocation5 + $0x848] sm:$0xf]
        %v1027 = vld [vmem:[#allocation5 + $0x84c] sm:$0xf]
        %v1028 = vld [vmem:[#allocation5 + $0x850] sm:$0xf]
        %v1029 = vld [vmem:[#allocation5 + $0x854] sm:$0xf]
        %v1030 = vld [vmem:[#allocation5 + $0x858] sm:$0xf]
        %v1031 = vld [vmem:[#allocation5 + $0x85c] sm:$0xf]
        %v1032 = vld [vmem:[#allocation5 + $0x860] sm:$0xf]
        %v1033 = vld [vmem:[#allocation5 + $0x864] sm:$0xf]
        %v1034 = vld [vmem:[#allocation5 + $0x868] sm:$0xf]
        %v1035 = vld [vmem:[#allocation5 + $0x86c] sm:$0xf]
        %v1036 = vld [vmem:[#allocation5 + $0x870] sm:$0xf]
        %v1037 = vld [vmem:[#allocation5 + $0x874] sm:$0xf]
        %v1038 = vld [vmem:[#allocation5 + $0x878] sm:$0xf]
        %v1039 = vld [vmem:[#allocation5 + $0x87c] sm:$0xf]
        %v1040 = vld [vmem:[#allocation5 + $0x880] sm:$0xf]
        %v1041 = vld [vmem:[#allocation5 + $0x884] sm:$0xf]
        %v1042 = vld [vmem:[#allocation5 + $0x888] sm:$0xf]
        %v1043 = vld [vmem:[#allocation5 + $0x88c] sm:$0xf]
        %v1044 = vld [vmem:[#allocation5 + $0x890] sm:$0xf]
        %v1045 = vld [vmem:[#allocation5 + $0x894] sm:$0xf]
        %v1046 = vld [vmem:[#allocation5 + $0x898] sm:$0xf]
        %v1047 = vld [vmem:[#allocation5 + $0x89c] sm:$0xf]
        %v1048 = vld [vmem:[#allocation5 + $0x8a0] sm:$0xf]
        %v1049 = vld [vmem:[#allocation5 + $0x8a4] sm:$0xf]
        %v1050 = vld [vmem:[#allocation5 + $0x8a8] sm:$0xf]
        %v1051 = vld [vmem:[#allocation5 + $0x8ac] sm:$0xf]
        %v1052 = vld [vmem:[#allocation5 + $0x8b0] sm:$0xf]
        %v1053 = vld [vmem:[#allocation5 + $0x8b4] sm:$0xf]
        %v1054 = vld [vmem:[#allocation5 + $0x8b8] sm:$0xf]
        %v1055 = vld [vmem:[#allocation5 + $0x8bc] sm:$0xf]
        %v1056 = vld [vmem:[#allocation5 + $0x8c0] sm:$0xf]
        %v1057 = vld [vmem:[#allocation5 + $0x8c4] sm:$0xf]
        %v1058 = vld [vmem:[#allocation5 + $0x8c8] sm:$0xf]
        %v1059 = vld [vmem:[#allocation5 + $0x8cc] sm:$0xf]
        %v1060 = vld [vmem:[#allocation5 + $0x8d0] sm:$0xf]
        %v1061 = vld [vmem:[#allocation5 + $0x8d4] sm:$0xf]
        %v1062 = vld [vmem:[#allocation5 + $0x8d8] sm:$0xf]
        %v1063 = vld [vmem:[#allocation5 + $0x8dc] sm:$0xf]
        %v1064 = vld [vmem:[#allocation5 + $0x8e0] sm:$0xf]
        %v1065 = vld [vmem:[#allocation5 + $0x8e4] sm:$0xf]
        %v1066 = vld [vmem:[#allocation5 + $0x8e8] sm:$0xf]
        %v1067 = vld [vmem:[#allocation5 + $0x8ec] sm:$0xf]
        %v1068 = vld [vmem:[#allocation5 + $0x8f0] sm:$0xf]
        %v1069 = vld [vmem:[#allocation5 + $0x8f4] sm:$0xf]
        %v1070 = vld [vmem:[#allocation5 + $0x8f8] sm:$0xf]
        %v1071 = vld [vmem:[#allocation5 + $0x8fc] sm:$0xf]
        %v1216 = vunpack.c.l.b16 %v352
        %v1217 = vunpack.c.h.b16 %v352
        %v1218 = vunpack.c.l.b16 %v353
        %v1219 = vunpack.c.h.b16 %v353
        %v1220 = vunpack.c.l.b16 %v354
        %v1221 = vunpack.c.h.b16 %v354
        %v1222 = vunpack.c.l.b16 %v355
        %v1223 = vunpack.c.h.b16 %v355
        %v1224 = vunpack.c.l.b16 %v356
        %v1225 = vunpack.c.h.b16 %v356
        %v1226 = vunpack.c.l.b16 %v357
        %v1227 = vunpack.c.h.b16 %v357
        %v1228 = vunpack.c.l.b16 %v358
        %v1229 = vunpack.c.h.b16 %v358
        %v1230 = vunpack.c.l.b16 %v359
        %v1231 = vunpack.c.h.b16 %v359
        %v1232 = vunpack.c.l.b16 %v360
        %v1233 = vunpack.c.h.b16 %v360
        %v1234 = vunpack.c.l.b16 %v361
        %v1235 = vunpack.c.h.b16 %v361
        %v1236 = vunpack.c.l.b16 %v362
        %v1237 = vunpack.c.h.b16 %v362
        %v1238 = vunpack.c.l.b16 %v363
        %v1239 = vunpack.c.h.b16 %v363
        %v1240 = vunpack.c.l.b16 %v364
        %v1241 = vunpack.c.h.b16 %v364
        %v1242 = vunpack.c.l.b16 %v365
        %v1243 = vunpack.c.h.b16 %v365
        %v1244 = vunpack.c.l.b16 %v366
        %v1245 = vunpack.c.h.b16 %v366
        %v1246 = vunpack.c.l.b16 %v367
        %v1247 = vunpack.c.h.b16 %v367
        %v1248 = vunpack.c.l.b16 %v368
        %v1249 = vunpack.c.h.b16 %v368
        %v1250 = vunpack.c.l.b16 %v369
        %v1251 = vunpack.c.h.b16 %v369
        %v1252 = vunpack.c.l.b16 %v370
        %v1253 = vunpack.c.h.b16 %v370
        %v1254 = vunpack.c.l.b16 %v371
        %v1255 = vunpack.c.h.b16 %v371
        %v1256 = vunpack.c.l.b16 %v372
        %v1257 = vunpack.c.h.b16 %v372
        %v1258 = vunpack.c.l.b16 %v373
        %v1259 = vunpack.c.h.b16 %v373
        %v1260 = vunpack.c.l.b16 %v374
        %v1261 = vunpack.c.h.b16 %v374
        %v1262 = vunpack.c.l.b16 %v375
        %v1263 = vunpack.c.h.b16 %v375
        %v1264 = vunpack.c.l.b16 %v376
        %v1265 = vunpack.c.h.b16 %v376
        %v1266 = vunpack.c.l.b16 %v377
        %v1267 = vunpack.c.h.b16 %v377
        %v1268 = vunpack.c.l.b16 %v378
        %v1269 = vunpack.c.h.b16 %v378
        %v1270 = vunpack.c.l.b16 %v379
        %v1271 = vunpack.c.h.b16 %v379
        %v1272 = vunpack.c.l.b16 %v380
        %v1273 = vunpack.c.h.b16 %v380
        %v1274 = vunpack.c.l.b16 %v381
        %v1275 = vunpack.c.h.b16 %v381
        %v1276 = vunpack.c.l.b16 %v382
        %v1277 = vunpack.c.h.b16 %v382
        %v1278 = vunpack.c.l.b16 %v383
        %v1279 = vunpack.c.h.b16 %v383
        %v1280 = vunpack.c.l.b16 %v384
        %v1281 = vunpack.c.h.b16 %v384
        %v1282 = vunpack.c.l.b16 %v385
        %v1283 = vunpack.c.h.b16 %v385
        %v1284 = vunpack.c.l.b16 %v386
        %v1285 = vunpack.c.h.b16 %v386
        %v1286 = vunpack.c.l.b16 %v387
        %v1287 = vunpack.c.h.b16 %v387
        %v1288 = vunpack.c.l.b16 %v388
        %v1289 = vunpack.c.h.b16 %v388
        %v1290 = vunpack.c.l.b16 %v389
        %v1291 = vunpack.c.h.b16 %v389
        %v1292 = vunpack.c.l.b16 %v390
        %v1293 = vunpack.c.h.b16 %v390
        %v1294 = vunpack.c.l.b16 %v391
        %v1295 = vunpack.c.h.b16 %v391
        %v1296 = vunpack.c.l.b16 %v392
        %v1297 = vunpack.c.h.b16 %v392
        %v1298 = vunpack.c.l.b16 %v393
        %v1299 = vunpack.c.h.b16 %v393
        %v1300 = vunpack.c.l.b16 %v394
        %v1301 = vunpack.c.h.b16 %v394
        %v1302 = vunpack.c.l.b16 %v395
        %v1303 = vunpack.c.h.b16 %v395
        %v1304 = vunpack.c.l.b16 %v396
        %v1305 = vunpack.c.h.b16 %v396
        %v1306 = vunpack.c.l.b16 %v397
        %v1307 = vunpack.c.h.b16 %v397
        %v1308 = vunpack.c.l.b16 %v398
        %v1309 = vunpack.c.h.b16 %v398
        %v1310 = vunpack.c.l.b16 %v399
        %v1311 = vunpack.c.h.b16 %v399
        %v1312 = vunpack.c.l.b16 %v400
        %v1313 = vunpack.c.h.b16 %v400
        %v1314 = vunpack.c.l.b16 %v401
        %v1315 = vunpack.c.h.b16 %v401
        %v1316 = vunpack.c.l.b16 %v402
        %v1317 = vunpack.c.h.b16 %v402
        %v1318 = vunpack.c.l.b16 %v403
        %v1319 = vunpack.c.h.b16 %v403
        %v1320 = vunpack.c.l.b16 %v404
        %v1321 = vunpack.c.h.b16 %v404
        %v1322 = vunpack.c.l.b16 %v405
        %v1323 = vunpack.c.h.b16 %v405
        %v1324 = vunpack.c.l.b16 %v406
        %v1325 = vunpack.c.h.b16 %v406
        %v1326 = vunpack.c.l.b16 %v407
        %v1327 = vunpack.c.h.b16 %v407
        %v1328 = vunpack.c.l.b16 %v408
        %v1329 = vunpack.c.h.b16 %v408
        %v1330 = vunpack.c.l.b16 %v409
        %v1331 = vunpack.c.h.b16 %v409
        %v1332 = vunpack.c.l.b16 %v410
        %v1333 = vunpack.c.h.b16 %v410
        %v1334 = vunpack.c.l.b16 %v411
        %v1335 = vunpack.c.h.b16 %v411
        %v1336 = vunpack.c.l.b16 %v412
        %v1337 = vunpack.c.h.b16 %v412
        %v1338 = vunpack.c.l.b16 %v413
        %v1339 = vunpack.c.h.b16 %v413
        %v1340 = vunpack.c.l.b16 %v414
        %v1341 = vunpack.c.h.b16 %v414
        %v1342 = vunpack.c.l.b16 %v415
        %v1343 = vunpack.c.h.b16 %v415
        %v1344 = vunpack.c.l.b16 %v416
        %v1345 = vunpack.c.h.b16 %v416
        %v1346 = vunpack.c.l.b16 %v417
        %v1347 = vunpack.c.h.b16 %v417
        %v1348 = vunpack.c.l.b16 %v418
        %v1349 = vunpack.c.h.b16 %v418
        %v1350 = vunpack.c.l.b16 %v419
        %v1351 = vunpack.c.h.b16 %v419
        %v1352 = vunpack.c.l.b16 %v420
        %v1353 = vunpack.c.h.b16 %v420
        %v1354 = vunpack.c.l.b16 %v421
        %v1355 = vunpack.c.h.b16 %v421
        %v1356 = vunpack.c.l.b16 %v422
        %v1357 = vunpack.c.h.b16 %v422
        %v1358 = vunpack.c.l.b16 %v423
        %v1359 = vunpack.c.h.b16 %v423
        %v1360 = vunpack.c.l.b16 %v424
        %v1361 = vunpack.c.h.b16 %v424
        %v1362 = vunpack.c.l.b16 %v425
        %v1363 = vunpack.c.h.b16 %v425
        %v1364 = vunpack.c.l.b16 %v426
        %v1365 = vunpack.c.h.b16 %v426
        %v1366 = vunpack.c.l.b16 %v427
        %v1367 = vunpack.c.h.b16 %v427
        %v1368 = vunpack.c.l.b16 %v428
        %v1369 = vunpack.c.h.b16 %v428
        %v1370 = vunpack.c.l.b16 %v429
        %v1371 = vunpack.c.h.b16 %v429
        %v1372 = vunpack.c.l.b16 %v430
        %v1373 = vunpack.c.h.b16 %v430
        %v1374 = vunpack.c.l.b16 %v431
        %v1375 = vunpack.c.h.b16 %v431
        %v1376 = vunpack.c.l.b16 %v432
        %v1377 = vunpack.c.h.b16 %v432
        %v1378 = vunpack.c.l.b16 %v433
        %v1379 = vunpack.c.h.b16 %v433
        %v1380 = vunpack.c.l.b16 %v434
        %v1381 = vunpack.c.h.b16 %v434
        %v1382 = vunpack.c.l.b16 %v435
        %v1383 = vunpack.c.h.b16 %v435
        %v1384 = vunpack.c.l.b16 %v436
        %v1385 = vunpack.c.h.b16 %v436
        %v1386 = vunpack.c.l.b16 %v437
        %v1387 = vunpack.c.h.b16 %v437
        %v1388 = vunpack.c.l.b16 %v438
        %v1389 = vunpack.c.h.b16 %v438
        %v1390 = vunpack.c.l.b16 %v439
        %v1391 = vunpack.c.h.b16 %v439
        %v1392 = vunpack.c.l.b16 %v440
        %v1393 = vunpack.c.h.b16 %v440
        %v1394 = vunpack.c.l.b16 %v441
        %v1395 = vunpack.c.h.b16 %v441
        %v1396 = vunpack.c.l.b16 %v442
        %v1397 = vunpack.c.h.b16 %v442
        %v1398 = vunpack.c.l.b16 %v443
        %v1399 = vunpack.c.h.b16 %v443
        %v1400 = vunpack.c.l.b16 %v444
        %v1401 = vunpack.c.h.b16 %v444
        %v1402 = vunpack.c.l.b16 %v445
        %v1403 = vunpack.c.h.b16 %v445
        %v1404 = vunpack.c.l.b16 %v446
        %v1405 = vunpack.c.h.b16 %v446
        %v1406 = vunpack.c.l.b16 %v447
        %v1407 = vunpack.c.h.b16 %v447
        %v1408 = vunpack.c.l.b16 %v448
        %v1409 = vunpack.c.h.b16 %v448
        %v1410 = vunpack.c.l.b16 %v449
        %v1411 = vunpack.c.h.b16 %v449
        %v1412 = vunpack.c.l.b16 %v450
        %v1413 = vunpack.c.h.b16 %v450
        %v1414 = vunpack.c.l.b16 %v451
        %v1415 = vunpack.c.h.b16 %v451
        %v1416 = vunpack.c.l.b16 %v452
        %v1417 = vunpack.c.h.b16 %v452
        %v1418 = vunpack.c.l.b16 %v453
        %v1419 = vunpack.c.h.b16 %v453
        %v1420 = vunpack.c.l.b16 %v454
        %v1421 = vunpack.c.h.b16 %v454
        %v1422 = vunpack.c.l.b16 %v455
        %v1423 = vunpack.c.h.b16 %v455
        %v1424 = vunpack.c.l.b16 %v456
        %v1425 = vunpack.c.h.b16 %v456
        %v1426 = vunpack.c.l.b16 %v457
        %v1427 = vunpack.c.h.b16 %v457
        %v1428 = vunpack.c.l.b16 %v458
        %v1429 = vunpack.c.h.b16 %v458
        %v1430 = vunpack.c.l.b16 %v459
        %v1431 = vunpack.c.h.b16 %v459
        %v1432 = vunpack.c.l.b16 %v460
        %v1433 = vunpack.c.h.b16 %v460
        %v1434 = vunpack.c.l.b16 %v461
        %v1435 = vunpack.c.h.b16 %v461
        %v1436 = vunpack.c.l.b16 %v462
        %v1437 = vunpack.c.h.b16 %v462
        %v1438 = vunpack.c.l.b16 %v463
        %v1439 = vunpack.c.h.b16 %v463
        %v1440 = vunpack.c.l.b16 %v464
        %v1441 = vunpack.c.h.b16 %v464
        %v1442 = vunpack.c.l.b16 %v465
        %v1443 = vunpack.c.h.b16 %v465
        %v1444 = vunpack.c.l.b16 %v466
        %v1445 = vunpack.c.h.b16 %v466
        %v1446 = vunpack.c.l.b16 %v467
        %v1447 = vunpack.c.h.b16 %v467
        %v1448 = vunpack.c.l.b16 %v468
        %v1449 = vunpack.c.h.b16 %v468
        %v1450 = vunpack.c.l.b16 %v469
        %v1451 = vunpack.c.h.b16 %v469
        %v1452 = vunpack.c.l.b16 %v470
        %v1453 = vunpack.c.h.b16 %v470
        %v1454 = vunpack.c.l.b16 %v471
        %v1455 = vunpack.c.h.b16 %v471
        %v1456 = vunpack.c.l.b16 %v472
        %v1457 = vunpack.c.h.b16 %v472
        %v1458 = vunpack.c.l.b16 %v473
        %v1459 = vunpack.c.h.b16 %v473
        %v1460 = vunpack.c.l.b16 %v474
        %v1461 = vunpack.c.h.b16 %v474
        %v1462 = vunpack.c.l.b16 %v475
        %v1463 = vunpack.c.h.b16 %v475
        %v1464 = vunpack.c.l.b16 %v476
        %v1465 = vunpack.c.h.b16 %v476
        %v1466 = vunpack.c.l.b16 %v477
        %v1467 = vunpack.c.h.b16 %v477
        %v1468 = vunpack.c.l.b16 %v478
        %v1469 = vunpack.c.h.b16 %v478
        %v1470 = vunpack.c.l.b16 %v479
        %v1471 = vunpack.c.h.b16 %v479
        %v1472 = vunpack.c.l.b16 %v480
        %v1473 = vunpack.c.h.b16 %v480
        %v1474 = vunpack.c.l.b16 %v481
        %v1475 = vunpack.c.h.b16 %v481
        %v1476 = vunpack.c.l.b16 %v482
        %v1477 = vunpack.c.h.b16 %v482
        %v1478 = vunpack.c.l.b16 %v483
        %v1479 = vunpack.c.h.b16 %v483
        %v1480 = vunpack.c.l.b16 %v484
        %v1481 = vunpack.c.h.b16 %v484
        %v1482 = vunpack.c.l.b16 %v485
        %v1483 = vunpack.c.h.b16 %v485
        %v1484 = vunpack.c.l.b16 %v486
        %v1485 = vunpack.c.h.b16 %v486
        %v1486 = vunpack.c.l.b16 %v487
        %v1487 = vunpack.c.h.b16 %v487
        %v1488 = vunpack.c.l.b16 %v488
        %v1489 = vunpack.c.h.b16 %v488
        %v1490 = vunpack.c.l.b16 %v489
        %v1491 = vunpack.c.h.b16 %v489
        %v1492 = vunpack.c.l.b16 %v490
        %v1493 = vunpack.c.h.b16 %v490
        %v1494 = vunpack.c.l.b16 %v491
        %v1495 = vunpack.c.h.b16 %v491
        %v1496 = vunpack.c.l.b16 %v492
        %v1497 = vunpack.c.h.b16 %v492
        %v1498 = vunpack.c.l.b16 %v493
        %v1499 = vunpack.c.h.b16 %v493
        %v1500 = vunpack.c.l.b16 %v494
        %v1501 = vunpack.c.h.b16 %v494
        %v1502 = vunpack.c.l.b16 %v495
        %v1503 = vunpack.c.h.b16 %v495
        %v1504 = vpack.c.b16 %v1252, %v1216
        %v1505 = vpack.c.b16 %v1253, %v1217
        %v1506 = vpack.c.b16 %v1254, %v1218
        %v1507 = vpack.c.b16 %v1255, %v1219
        %v1508 = vpack.c.b16 %v1256, %v1220
        %v1509 = vpack.c.b16 %v1257, %v1221
        %v1510 = vpack.c.b16 %v1258, %v1222
        %v1511 = vpack.c.b16 %v1259, %v1223
        %v1512 = vpack.c.b16 %v1260, %v1224
        %v1513 = vpack.c.b16 %v1261, %v1225
        %v1514 = vpack.c.b16 %v1262, %v1226
        %v1515 = vpack.c.b16 %v1263, %v1227
        %v1516 = vpack.c.b16 %v1264, %v1228
        %v1517 = vpack.c.b16 %v1265, %v1229
        %v1518 = vpack.c.b16 %v1266, %v1230
        %v1519 = vpack.c.b16 %v1267, %v1231
        %v1520 = vpack.c.b16 %v1268, %v1232
        %v1521 = vpack.c.b16 %v1269, %v1233
        %v1522 = vpack.c.b16 %v1270, %v1234
        %v1523 = vpack.c.b16 %v1271, %v1235
        %v1524 = vpack.c.b16 %v1272, %v1236
        %v1525 = vpack.c.b16 %v1273, %v1237
        %v1526 = vpack.c.b16 %v1274, %v1238
        %v1527 = vpack.c.b16 %v1275, %v1239
        %v1528 = vpack.c.b16 %v1276, %v1240
        %v1529 = vpack.c.b16 %v1277, %v1241
        %v1530 = vpack.c.b16 %v1278, %v1242
        %v1531 = vpack.c.b16 %v1279, %v1243
        %v1532 = vpack.c.b16 %v1280, %v1244
        %v1533 = vpack.c.b16 %v1281, %v1245
        %v1534 = vpack.c.b16 %v1282, %v1246
        %v1535 = vpack.c.b16 %v1283, %v1247
        %v1536 = vpack.c.b16 %v1284, %v1248
        %v1537 = vpack.c.b16 %v1285, %v1249
        %v1538 = vpack.c.b16 %v1286, %v1250
        %v1539 = vpack.c.b16 %v1287, %v1251
        %v1540 = vpack.c.b16 %v1324, %v1288
        %v1541 = vpack.c.b16 %v1325, %v1289
        %v1542 = vpack.c.b16 %v1326, %v1290
        %v1543 = vpack.c.b16 %v1327, %v1291
        %v1544 = vpack.c.b16 %v1328, %v1292
        %v1545 = vpack.c.b16 %v1329, %v1293
        %v1546 = vpack.c.b16 %v1330, %v1294
        %v1547 = vpack.c.b16 %v1331, %v1295
        %v1548 = vpack.c.b16 %v1332, %v1296
        %v1549 = vpack.c.b16 %v1333, %v1297
        %v1550 = vpack.c.b16 %v1334, %v1298
        %v1551 = vpack.c.b16 %v1335, %v1299
        %v1552 = vpack.c.b16 %v1336, %v1300
        %v1553 = vpack.c.b16 %v1337, %v1301
        %v1554 = vpack.c.b16 %v1338, %v1302
        %v1555 = vpack.c.b16 %v1339, %v1303
        %v1556 = vpack.c.b16 %v1340, %v1304
        %v1557 = vpack.c.b16 %v1341, %v1305
        %v1558 = vpack.c.b16 %v1342, %v1306
        %v1559 = vpack.c.b16 %v1343, %v1307
        %v1560 = vpack.c.b16 %v1344, %v1308
        %v1561 = vpack.c.b16 %v1345, %v1309
        %v1562 = vpack.c.b16 %v1346, %v1310
        %v1563 = vpack.c.b16 %v1347, %v1311
        %v1564 = vpack.c.b16 %v1348, %v1312
        %v1565 = vpack.c.b16 %v1349, %v1313
        %v1566 = vpack.c.b16 %v1350, %v1314
        %v1567 = vpack.c.b16 %v1351, %v1315
        %v1568 = vpack.c.b16 %v1352, %v1316
        %v1569 = vpack.c.b16 %v1353, %v1317
        %v1570 = vpack.c.b16 %v1354, %v1318
        %v1571 = vpack.c.b16 %v1355, %v1319
        %v1572 = vpack.c.b16 %v1356, %v1320
        %v1573 = vpack.c.b16 %v1357, %v1321
        %v1574 = vpack.c.b16 %v1358, %v1322
        %v1575 = vpack.c.b16 %v1359, %v1323
        %v1576 = vpack.c.b16 %v1396, %v1360
        %v1577 = vpack.c.b16 %v1397, %v1361
        %v1578 = vpack.c.b16 %v1398, %v1362
        %v1579 = vpack.c.b16 %v1399, %v1363
        %v1580 = vpack.c.b16 %v1400, %v1364
        %v1581 = vpack.c.b16 %v1401, %v1365
        %v1582 = vpack.c.b16 %v1402, %v1366
        %v1583 = vpack.c.b16 %v1403, %v1367
        %v1584 = vpack.c.b16 %v1404, %v1368
        %v1585 = vpack.c.b16 %v1405, %v1369
        %v1586 = vpack.c.b16 %v1406, %v1370
        %v1587 = vpack.c.b16 %v1407, %v1371
        %v1588 = vpack.c.b16 %v1408, %v1372
        %v1589 = vpack.c.b16 %v1409, %v1373
        %v1590 = vpack.c.b16 %v1410, %v1374
        %v1591 = vpack.c.b16 %v1411, %v1375
        %v1592 = vpack.c.b16 %v1412, %v1376
        %v1593 = vpack.c.b16 %v1413, %v1377
        %v1594 = vpack.c.b16 %v1414, %v1378
        %v1595 = vpack.c.b16 %v1415, %v1379
        %v1596 = vpack.c.b16 %v1416, %v1380
        %v1597 = vpack.c.b16 %v1417, %v1381
        %v1598 = vpack.c.b16 %v1418, %v1382
        %v1599 = vpack.c.b16 %v1419, %v1383
        %v1600 = vpack.c.b16 %v1420, %v1384
        %v1601 = vpack.c.b16 %v1421, %v1385
        %v1602 = vpack.c.b16 %v1422, %v1386
        %v1603 = vpack.c.b16 %v1423, %v1387
        %v1604 = vpack.c.b16 %v1424, %v1388
        %v1605 = vpack.c.b16 %v1425, %v1389
        %v1606 = vpack.c.b16 %v1426, %v1390
        %v1607 = vpack.c.b16 %v1427, %v1391
        %v1608 = vpack.c.b16 %v1428, %v1392
        %v1609 = vpack.c.b16 %v1429, %v1393
        %v1610 = vpack.c.b16 %v1430, %v1394
        %v1611 = vpack.c.b16 %v1431, %v1395
        %v1612 = vpack.c.b16 %v1468, %v1432
        %v1613 = vpack.c.b16 %v1469, %v1433
        %v1614 = vpack.c.b16 %v1470, %v1434
        %v1615 = vpack.c.b16 %v1471, %v1435
        %v1616 = vpack.c.b16 %v1472, %v1436
        %v1617 = vpack.c.b16 %v1473, %v1437
        %v1618 = vpack.c.b16 %v1474, %v1438
        %v1619 = vpack.c.b16 %v1475, %v1439
        %v1620 = vpack.c.b16 %v1476, %v1440
        %v1621 = vpack.c.b16 %v1477, %v1441
        %v1622 = vpack.c.b16 %v1478, %v1442
        %v1623 = vpack.c.b16 %v1479, %v1443
        %v1624 = vpack.c.b16 %v1480, %v1444
        %v1625 = vpack.c.b16 %v1481, %v1445
        %v1626 = vpack.c.b16 %v1482, %v1446
        %v1627 = vpack.c.b16 %v1483, %v1447
        %v1628 = vpack.c.b16 %v1484, %v1448
        %v1629 = vpack.c.b16 %v1485, %v1449
        %v1630 = vpack.c.b16 %v1486, %v1450
        %v1631 = vpack.c.b16 %v1487, %v1451
        %v1632 = vpack.c.b16 %v1488, %v1452
        %v1633 = vpack.c.b16 %v1489, %v1453
        %v1634 = vpack.c.b16 %v1490, %v1454
        %v1635 = vpack.c.b16 %v1491, %v1455
        %v1636 = vpack.c.b16 %v1492, %v1456
        %v1637 = vpack.c.b16 %v1493, %v1457
        %v1638 = vpack.c.b16 %v1494, %v1458
        %v1639 = vpack.c.b16 %v1495, %v1459
        %v1640 = vpack.c.b16 %v1496, %v1460
        %v1641 = vpack.c.b16 %v1497, %v1461
        %v1642 = vpack.c.b16 %v1498, %v1462
        %v1643 = vpack.c.b16 %v1499, %v1463
        %v1644 = vpack.c.b16 %v1500, %v1464
        %v1645 = vpack.c.b16 %v1501, %v1465
        %v1646 = vpack.c.b16 %v1502, %v1466
        %v1647 = vpack.c.b16 %v1503, %v1467
        %v2368 = vunpack.c.l.b16 %v496
        %v2369 = vunpack.c.l.b16 %v497
        %v2370 = vunpack.c.l.b16 %v498
        %v2371 = vunpack.c.l.b16 %v499
        %v2372 = vunpack.c.l.b16 %v500
        %v2373 = vunpack.c.l.b16 %v501
        %v2374 = vunpack.c.l.b16 %v502
        %v2375 = vunpack.c.l.b16 %v503
        %v2376 = vunpack.c.l.b16 %v504
        %v2377 = vunpack.c.l.b16 %v505
        %v2378 = vunpack.c.l.b16 %v506
        %v2379 = vunpack.c.l.b16 %v507
        %v2380 = vunpack.c.l.b16 %v508
        %v2381 = vunpack.c.l.b16 %v509
        %v2382 = vunpack.c.l.b16 %v510
        %v2383 = vunpack.c.l.b16 %v511
        %v2384 = vunpack.c.l.b16 %v512
        %v2385 = vunpack.c.l.b16 %v513
        %v2386 = vunpack.c.l.b16 %v514
        %v2387 = vunpack.c.l.b16 %v515
        %v2388 = vunpack.c.l.b16 %v516
        %v2389 = vunpack.c.l.b16 %v517
        %v2390 = vunpack.c.l.b16 %v518
        %v2391 = vunpack.c.l.b16 %v519
        %v2392 = vunpack.c.l.b16 %v520
        %v2393 = vunpack.c.l.b16 %v521
        %v2394 = vunpack.c.l.b16 %v522
        %v2395 = vunpack.c.l.b16 %v523
        %v2396 = vunpack.c.l.b16 %v524
        %v2397 = vunpack.c.l.b16 %v525
        %v2398 = vunpack.c.l.b16 %v526
        %v2399 = vunpack.c.l.b16 %v527
        %v2400 = vunpack.c.l.b16 %v528
        %v2401 = vunpack.c.l.b16 %v529
        %v2402 = vunpack.c.l.b16 %v530
        %v2403 = vunpack.c.l.b16 %v531
        %v2404 = vunpack.c.l.b16 %v532
        %v2405 = vunpack.c.l.b16 %v533
        %v2406 = vunpack.c.l.b16 %v534
        %v2407 = vunpack.c.l.b16 %v535
        %v2408 = vunpack.c.l.b16 %v536
        %v2409 = vunpack.c.l.b16 %v537
        %v2410 = vunpack.c.l.b16 %v538
        %v2411 = vunpack.c.l.b16 %v539
        %v2412 = vunpack.c.l.b16 %v540
        %v2413 = vunpack.c.l.b16 %v541
        %v2414 = vunpack.c.l.b16 %v542
        %v2415 = vunpack.c.l.b16 %v543
        %v2416 = vunpack.c.l.b16 %v544
        %v2417 = vunpack.c.l.b16 %v545
        %v2418 = vunpack.c.l.b16 %v546
        %v2419 = vunpack.c.l.b16 %v547
        %v2420 = vunpack.c.l.b16 %v548
        %v2421 = vunpack.c.l.b16 %v549
        %v2422 = vunpack.c.l.b16 %v550
        %v2423 = vunpack.c.l.b16 %v551
        %v2424 = vunpack.c.l.b16 %v552
        %v2425 = vunpack.c.l.b16 %v553
        %v2426 = vunpack.c.l.b16 %v554
        %v2427 = vunpack.c.l.b16 %v555
        %v2428 = vunpack.c.l.b16 %v556
        %v2429 = vunpack.c.l.b16 %v557
        %v2430 = vunpack.c.l.b16 %v558
        %v2431 = vunpack.c.l.b16 %v559
        %v2432 = vunpack.c.l.b16 %v560
        %v2433 = vunpack.c.l.b16 %v561
        %v2434 = vunpack.c.l.b16 %v562
        %v2435 = vunpack.c.l.b16 %v563
        %v2436 = vunpack.c.l.b16 %v564
        %v2437 = vunpack.c.l.b16 %v565
        %v2438 = vunpack.c.l.b16 %v566
        %v2439 = vunpack.c.l.b16 %v567
        %v2440 = vunpack.c.l.b16 %v568
        %v2441 = vunpack.c.l.b16 %v569
        %v2442 = vunpack.c.l.b16 %v570
        %v2443 = vunpack.c.l.b16 %v571
        %v2444 = vunpack.c.l.b16 %v572
        %v2445 = vunpack.c.l.b16 %v573
        %v2446 = vunpack.c.l.b16 %v574
        %v2447 = vunpack.c.l.b16 %v575
        %v2448 = vunpack.c.l.b16 %v576
        %v2449 = vunpack.c.l.b16 %v577
        %v2450 = vunpack.c.l.b16 %v578
        %v2451 = vunpack.c.l.b16 %v579
        %v2452 = vunpack.c.l.b16 %v580
        %v2453 = vunpack.c.l.b16 %v581
        %v2454 = vunpack.c.l.b16 %v582
        %v2455 = vunpack.c.l.b16 %v583
        %v2456 = vunpack.c.l.b16 %v584
        %v2457 = vunpack.c.l.b16 %v585
        %v2458 = vunpack.c.l.b16 %v586
        %v2459 = vunpack.c.l.b16 %v587
        %v2460 = vunpack.c.l.b16 %v588
        %v2461 = vunpack.c.l.b16 %v589
        %v2462 = vunpack.c.l.b16 %v590
        %v2463 = vunpack.c.l.b16 %v591
        %v2464 = vunpack.c.l.b16 %v592
        %v2465 = vunpack.c.l.b16 %v593
        %v2466 = vunpack.c.l.b16 %v594
        %v2467 = vunpack.c.l.b16 %v595
        %v2468 = vunpack.c.l.b16 %v596
        %v2469 = vunpack.c.l.b16 %v597
        %v2470 = vunpack.c.l.b16 %v598
        %v2471 = vunpack.c.l.b16 %v599
        %v2472 = vunpack.c.l.b16 %v600
        %v2473 = vunpack.c.l.b16 %v601
        %v2474 = vunpack.c.l.b16 %v602
        %v2475 = vunpack.c.l.b16 %v603
        %v2476 = vunpack.c.l.b16 %v604
        %v2477 = vunpack.c.l.b16 %v605
        %v2478 = vunpack.c.l.b16 %v606
        %v2479 = vunpack.c.l.b16 %v607
        %v2480 = vunpack.c.l.b16 %v608
        %v2481 = vunpack.c.l.b16 %v609
        %v2482 = vunpack.c.l.b16 %v610
        %v2483 = vunpack.c.l.b16 %v611
        %v2484 = vunpack.c.l.b16 %v612
        %v2485 = vunpack.c.l.b16 %v613
        %v2486 = vunpack.c.l.b16 %v614
        %v2487 = vunpack.c.l.b16 %v615
        %v2488 = vunpack.c.l.b16 %v616
        %v2489 = vunpack.c.l.b16 %v617
        %v2490 = vunpack.c.l.b16 %v618
        %v2491 = vunpack.c.l.b16 %v619
        %v2492 = vunpack.c.l.b16 %v620
        %v2493 = vunpack.c.l.b16 %v621
        %v2494 = vunpack.c.l.b16 %v622
        %v2495 = vunpack.c.l.b16 %v623
        %v2496 = vunpack.c.l.b16 %v624
        %v2497 = vunpack.c.l.b16 %v625
        %v2498 = vunpack.c.l.b16 %v626
        %v2499 = vunpack.c.l.b16 %v627
        %v2500 = vunpack.c.l.b16 %v628
        %v2501 = vunpack.c.l.b16 %v629
        %v2502 = vunpack.c.l.b16 %v630
        %v2503 = vunpack.c.l.b16 %v631
        %v2504 = vunpack.c.l.b16 %v632
        %v2505 = vunpack.c.l.b16 %v633
        %v2506 = vunpack.c.l.b16 %v634
        %v2507 = vunpack.c.l.b16 %v635
        %v2508 = vunpack.c.l.b16 %v636
        %v2509 = vunpack.c.l.b16 %v637
        %v2510 = vunpack.c.l.b16 %v638
        %v2511 = vunpack.c.l.b16 %v639
        %v2512 = vunpack.c.l.b16 %v640
        %v2513 = vunpack.c.l.b16 %v641
        %v2514 = vunpack.c.l.b16 %v642
        %v2515 = vunpack.c.l.b16 %v643
        %v2516 = vunpack.c.l.b16 %v644
        %v2517 = vunpack.c.l.b16 %v645
        %v2518 = vunpack.c.l.b16 %v646
        %v2519 = vunpack.c.l.b16 %v647
        %v2520 = vunpack.c.l.b16 %v648
        %v2521 = vunpack.c.l.b16 %v649
        %v2522 = vunpack.c.l.b16 %v650
        %v2523 = vunpack.c.l.b16 %v651
        %v2524 = vunpack.c.l.b16 %v652
        %v2525 = vunpack.c.l.b16 %v653
        %v2526 = vunpack.c.l.b16 %v654
        %v2527 = vunpack.c.l.b16 %v655
        %v2528 = vunpack.c.l.b16 %v656
        %v2529 = vunpack.c.l.b16 %v657
        %v2530 = vunpack.c.l.b16 %v658
        %v2531 = vunpack.c.l.b16 %v659
        %v2532 = vunpack.c.l.b16 %v660
        %v2533 = vunpack.c.l.b16 %v661
        %v2534 = vunpack.c.l.b16 %v662
        %v2535 = vunpack.c.l.b16 %v663
        %v2536 = vunpack.c.l.b16 %v664
        %v2537 = vunpack.c.l.b16 %v665
        %v2538 = vunpack.c.l.b16 %v666
        %v2539 = vunpack.c.l.b16 %v667
        %v2540 = vunpack.c.l.b16 %v668
        %v2541 = vunpack.c.l.b16 %v669
        %v2542 = vunpack.c.l.b16 %v670
        %v2543 = vunpack.c.l.b16 %v671
        %v2544 = vunpack.c.l.b16 %v672
        %v2545 = vunpack.c.l.b16 %v673
        %v2546 = vunpack.c.l.b16 %v674
        %v2547 = vunpack.c.l.b16 %v675
        %v2548 = vunpack.c.l.b16 %v676
        %v2549 = vunpack.c.l.b16 %v677
        %v2550 = vunpack.c.l.b16 %v678
        %v2551 = vunpack.c.l.b16 %v679
        %v2552 = vunpack.c.l.b16 %v680
        %v2553 = vunpack.c.l.b16 %v681
        %v2554 = vunpack.c.l.b16 %v682
        %v2555 = vunpack.c.l.b16 %v683
        %v2556 = vunpack.c.l.b16 %v684
        %v2557 = vunpack.c.l.b16 %v685
        %v2558 = vunpack.c.l.b16 %v686
        %v2559 = vunpack.c.l.b16 %v687
        %v2560 = vunpack.c.l.b16 %v688
        %v2561 = vunpack.c.l.b16 %v689
        %v2562 = vunpack.c.l.b16 %v690
        %v2563 = vunpack.c.l.b16 %v691
        %v2564 = vunpack.c.l.b16 %v692
        %v2565 = vunpack.c.l.b16 %v693
        %v2566 = vunpack.c.l.b16 %v694
        %v2567 = vunpack.c.l.b16 %v695
        %v2568 = vunpack.c.l.b16 %v696
        %v2569 = vunpack.c.l.b16 %v697
        %v2570 = vunpack.c.l.b16 %v698
        %v2571 = vunpack.c.l.b16 %v699
        %v2572 = vunpack.c.l.b16 %v700
        %v2573 = vunpack.c.l.b16 %v701
        %v2574 = vunpack.c.l.b16 %v702
        %v2575 = vunpack.c.l.b16 %v703
        %v2576 = vunpack.c.l.b16 %v704
        %v2577 = vunpack.c.l.b16 %v705
        %v2578 = vunpack.c.l.b16 %v706
        %v2579 = vunpack.c.l.b16 %v707
        %v2580 = vunpack.c.l.b16 %v708
        %v2581 = vunpack.c.l.b16 %v709
        %v2582 = vunpack.c.l.b16 %v710
        %v2583 = vunpack.c.l.b16 %v711
        %v2584 = vunpack.c.l.b16 %v712
        %v2585 = vunpack.c.l.b16 %v713
        %v2586 = vunpack.c.l.b16 %v714
        %v2587 = vunpack.c.l.b16 %v715
        %v2588 = vunpack.c.l.b16 %v716
        %v2589 = vunpack.c.l.b16 %v717
        %v2590 = vunpack.c.l.b16 %v718
        %v2591 = vunpack.c.l.b16 %v719
        %v2592 = vunpack.c.l.b16 %v720
        %v2593 = vunpack.c.l.b16 %v721
        %v2594 = vunpack.c.l.b16 %v722
        %v2595 = vunpack.c.l.b16 %v723
        %v2596 = vunpack.c.l.b16 %v724
        %v2597 = vunpack.c.l.b16 %v725
        %v2598 = vunpack.c.l.b16 %v726
        %v2599 = vunpack.c.l.b16 %v727
        %v2600 = vunpack.c.l.b16 %v728
        %v2601 = vunpack.c.l.b16 %v729
        %v2602 = vunpack.c.l.b16 %v730
        %v2603 = vunpack.c.l.b16 %v731
        %v2604 = vunpack.c.l.b16 %v732
        %v2605 = vunpack.c.l.b16 %v733
        %v2606 = vunpack.c.l.b16 %v734
        %v2607 = vunpack.c.l.b16 %v735
        %v2608 = vunpack.c.l.b16 %v736
        %v2609 = vunpack.c.l.b16 %v737
        %v2610 = vunpack.c.l.b16 %v738
        %v2611 = vunpack.c.l.b16 %v739
        %v2612 = vunpack.c.l.b16 %v740
        %v2613 = vunpack.c.l.b16 %v741
        %v2614 = vunpack.c.l.b16 %v742
        %v2615 = vunpack.c.l.b16 %v743
        %v2616 = vunpack.c.l.b16 %v744
        %v2617 = vunpack.c.l.b16 %v745
        %v2618 = vunpack.c.l.b16 %v746
        %v2619 = vunpack.c.l.b16 %v747
        %v2620 = vunpack.c.l.b16 %v748
        %v2621 = vunpack.c.l.b16 %v749
        %v2622 = vunpack.c.l.b16 %v750
        %v2623 = vunpack.c.l.b16 %v751
        %v2624 = vunpack.c.l.b16 %v752
        %v2625 = vunpack.c.l.b16 %v753
        %v2626 = vunpack.c.l.b16 %v754
        %v2627 = vunpack.c.l.b16 %v755
        %v2628 = vunpack.c.l.b16 %v756
        %v2629 = vunpack.c.l.b16 %v757
        %v2630 = vunpack.c.l.b16 %v758
        %v2631 = vunpack.c.l.b16 %v759
        %v2632 = vunpack.c.l.b16 %v760
        %v2633 = vunpack.c.l.b16 %v761
        %v2634 = vunpack.c.l.b16 %v762
        %v2635 = vunpack.c.l.b16 %v763
        %v2636 = vunpack.c.l.b16 %v764
        %v2637 = vunpack.c.l.b16 %v765
        %v2638 = vunpack.c.l.b16 %v766
        %v2639 = vunpack.c.l.b16 %v767
        %v2640 = vunpack.c.l.b16 %v768
        %v2641 = vunpack.c.l.b16 %v769
        %v2642 = vunpack.c.l.b16 %v770
        %v2643 = vunpack.c.l.b16 %v771
        %v2644 = vunpack.c.l.b16 %v772
        %v2645 = vunpack.c.l.b16 %v773
        %v2646 = vunpack.c.l.b16 %v774
        %v2647 = vunpack.c.l.b16 %v775
        %v2648 = vunpack.c.l.b16 %v776
        %v2649 = vunpack.c.l.b16 %v777
        %v2650 = vunpack.c.l.b16 %v778
        %v2651 = vunpack.c.l.b16 %v779
        %v2652 = vunpack.c.l.b16 %v780
        %v2653 = vunpack.c.l.b16 %v781
        %v2654 = vunpack.c.l.b16 %v782
        %v2655 = vunpack.c.l.b16 %v783
        %v2656 = vunpack.c.l.b16 %v784
        %v2657 = vunpack.c.l.b16 %v785
        %v2658 = vunpack.c.l.b16 %v786
        %v2659 = vunpack.c.l.b16 %v787
        %v2660 = vunpack.c.l.b16 %v788
        %v2661 = vunpack.c.l.b16 %v789
        %v2662 = vunpack.c.l.b16 %v790
        %v2663 = vunpack.c.l.b16 %v791
        %v2664 = vunpack.c.l.b16 %v792
        %v2665 = vunpack.c.l.b16 %v793
        %v2666 = vunpack.c.l.b16 %v794
        %v2667 = vunpack.c.l.b16 %v795
        %v2668 = vunpack.c.l.b16 %v796
        %v2669 = vunpack.c.l.b16 %v797
        %v2670 = vunpack.c.l.b16 %v798
        %v2671 = vunpack.c.l.b16 %v799
        %v2672 = vunpack.c.l.b16 %v800
        %v2673 = vunpack.c.l.b16 %v801
        %v2674 = vunpack.c.l.b16 %v802
        %v2675 = vunpack.c.l.b16 %v803
        %v2676 = vunpack.c.l.b16 %v804
        %v2677 = vunpack.c.l.b16 %v805
        %v2678 = vunpack.c.l.b16 %v806
        %v2679 = vunpack.c.l.b16 %v807
        %v2680 = vunpack.c.l.b16 %v808
        %v2681 = vunpack.c.l.b16 %v809
        %v2682 = vunpack.c.l.b16 %v810
        %v2683 = vunpack.c.l.b16 %v811
        %v2684 = vunpack.c.l.b16 %v812
        %v2685 = vunpack.c.l.b16 %v813
        %v2686 = vunpack.c.l.b16 %v814
        %v2687 = vunpack.c.l.b16 %v815
        %v2688 = vunpack.c.l.b16 %v816
        %v2689 = vunpack.c.l.b16 %v817
        %v2690 = vunpack.c.l.b16 %v818
        %v2691 = vunpack.c.l.b16 %v819
        %v2692 = vunpack.c.l.b16 %v820
        %v2693 = vunpack.c.l.b16 %v821
        %v2694 = vunpack.c.l.b16 %v822
        %v2695 = vunpack.c.l.b16 %v823
        %v2696 = vunpack.c.l.b16 %v824
        %v2697 = vunpack.c.l.b16 %v825
        %v2698 = vunpack.c.l.b16 %v826
        %v2699 = vunpack.c.l.b16 %v827
        %v2700 = vunpack.c.l.b16 %v828
        %v2701 = vunpack.c.l.b16 %v829
        %v2702 = vunpack.c.l.b16 %v830
        %v2703 = vunpack.c.l.b16 %v831
        %v2704 = vunpack.c.l.b16 %v832
        %v2705 = vunpack.c.l.b16 %v833
        %v2706 = vunpack.c.l.b16 %v834
        %v2707 = vunpack.c.l.b16 %v835
        %v2708 = vunpack.c.l.b16 %v836
        %v2709 = vunpack.c.l.b16 %v837
        %v2710 = vunpack.c.l.b16 %v838
        %v2711 = vunpack.c.l.b16 %v839
        %v2712 = vunpack.c.l.b16 %v840
        %v2713 = vunpack.c.l.b16 %v841
        %v2714 = vunpack.c.l.b16 %v842
        %v2715 = vunpack.c.l.b16 %v843
        %v2716 = vunpack.c.l.b16 %v844
        %v2717 = vunpack.c.l.b16 %v845
        %v2718 = vunpack.c.l.b16 %v846
        %v2719 = vunpack.c.l.b16 %v847
        %v2720 = vunpack.c.l.b16 %v848
        %v2721 = vunpack.c.l.b16 %v849
        %v2722 = vunpack.c.l.b16 %v850
        %v2723 = vunpack.c.l.b16 %v851
        %v2724 = vunpack.c.l.b16 %v852
        %v2725 = vunpack.c.l.b16 %v853
        %v2726 = vunpack.c.l.b16 %v854
        %v2727 = vunpack.c.l.b16 %v855
        %v2728 = vunpack.c.l.b16 %v856
        %v2729 = vunpack.c.l.b16 %v857
        %v2730 = vunpack.c.l.b16 %v858
        %v2731 = vunpack.c.l.b16 %v859
        %v2732 = vunpack.c.l.b16 %v860
        %v2733 = vunpack.c.l.b16 %v861
        %v2734 = vunpack.c.l.b16 %v862
        %v2735 = vunpack.c.l.b16 %v863
        %v2736 = vunpack.c.l.b16 %v864
        %v2737 = vunpack.c.l.b16 %v865
        %v2738 = vunpack.c.l.b16 %v866
        %v2739 = vunpack.c.l.b16 %v867
        %v2740 = vunpack.c.l.b16 %v868
        %v2741 = vunpack.c.l.b16 %v869
        %v2742 = vunpack.c.l.b16 %v870
        %v2743 = vunpack.c.l.b16 %v871
        %v2744 = vunpack.c.l.b16 %v872
        %v2745 = vunpack.c.l.b16 %v873
        %v2746 = vunpack.c.l.b16 %v874
        %v2747 = vunpack.c.l.b16 %v875
        %v2748 = vunpack.c.l.b16 %v876
        %v2749 = vunpack.c.l.b16 %v877
        %v2750 = vunpack.c.l.b16 %v878
        %v2751 = vunpack.c.l.b16 %v879
        %v2752 = vunpack.c.l.b16 %v880
        %v2753 = vunpack.c.l.b16 %v881
        %v2754 = vunpack.c.l.b16 %v882
        %v2755 = vunpack.c.l.b16 %v883
        %v2756 = vunpack.c.l.b16 %v884
        %v2757 = vunpack.c.l.b16 %v885
        %v2758 = vunpack.c.l.b16 %v886
        %v2759 = vunpack.c.l.b16 %v887
        %v2760 = vunpack.c.l.b16 %v888
        %v2761 = vunpack.c.l.b16 %v889
        %v2762 = vunpack.c.l.b16 %v890
        %v2763 = vunpack.c.l.b16 %v891
        %v2764 = vunpack.c.l.b16 %v892
        %v2765 = vunpack.c.l.b16 %v893
        %v2766 = vunpack.c.l.b16 %v894
        %v2767 = vunpack.c.l.b16 %v895
        %v2768 = vunpack.c.l.b16 %v896
        %v2769 = vunpack.c.l.b16 %v897
        %v2770 = vunpack.c.l.b16 %v898
        %v2771 = vunpack.c.l.b16 %v899
        %v2772 = vunpack.c.l.b16 %v900
        %v2773 = vunpack.c.l.b16 %v901
        %v2774 = vunpack.c.l.b16 %v902
        %v2775 = vunpack.c.l.b16 %v903
        %v2776 = vunpack.c.l.b16 %v904
        %v2777 = vunpack.c.l.b16 %v905
        %v2778 = vunpack.c.l.b16 %v906
        %v2779 = vunpack.c.l.b16 %v907
        %v2780 = vunpack.c.l.b16 %v908
        %v2781 = vunpack.c.l.b16 %v909
        %v2782 = vunpack.c.l.b16 %v910
        %v2783 = vunpack.c.l.b16 %v911
        %v2784 = vunpack.c.l.b16 %v912
        %v2785 = vunpack.c.l.b16 %v913
        %v2786 = vunpack.c.l.b16 %v914
        %v2787 = vunpack.c.l.b16 %v915
        %v2788 = vunpack.c.l.b16 %v916
        %v2789 = vunpack.c.l.b16 %v917
        %v2790 = vunpack.c.l.b16 %v918
        %v2791 = vunpack.c.l.b16 %v919
        %v2792 = vunpack.c.l.b16 %v920
        %v2793 = vunpack.c.l.b16 %v921
        %v2794 = vunpack.c.l.b16 %v922
        %v2795 = vunpack.c.l.b16 %v923
        %v2796 = vunpack.c.l.b16 %v924
        %v2797 = vunpack.c.l.b16 %v925
        %v2798 = vunpack.c.l.b16 %v926
        %v2799 = vunpack.c.l.b16 %v927
        %v2800 = vunpack.c.l.b16 %v928
        %v2801 = vunpack.c.l.b16 %v929
        %v2802 = vunpack.c.l.b16 %v930
        %v2803 = vunpack.c.l.b16 %v931
        %v2804 = vunpack.c.l.b16 %v932
        %v2805 = vunpack.c.l.b16 %v933
        %v2806 = vunpack.c.l.b16 %v934
        %v2807 = vunpack.c.l.b16 %v935
        %v2808 = vunpack.c.l.b16 %v936
        %v2809 = vunpack.c.l.b16 %v937
        %v2810 = vunpack.c.l.b16 %v938
        %v2811 = vunpack.c.l.b16 %v939
        %v2812 = vunpack.c.l.b16 %v940
        %v2813 = vunpack.c.l.b16 %v941
        %v2814 = vunpack.c.l.b16 %v942
        %v2815 = vunpack.c.l.b16 %v943
        %v2816 = vunpack.c.l.b16 %v944
        %v2817 = vunpack.c.l.b16 %v945
        %v2818 = vunpack.c.l.b16 %v946
        %v2819 = vunpack.c.l.b16 %v947
        %v2820 = vunpack.c.l.b16 %v948
        %v2821 = vunpack.c.l.b16 %v949
        %v2822 = vunpack.c.l.b16 %v950
        %v2823 = vunpack.c.l.b16 %v951
        %v2824 = vunpack.c.l.b16 %v952
        %v2825 = vunpack.c.l.b16 %v953
        %v2826 = vunpack.c.l.b16 %v954
        %v2827 = vunpack.c.l.b16 %v955
        %v2828 = vunpack.c.l.b16 %v956
        %v2829 = vunpack.c.l.b16 %v957
        %v2830 = vunpack.c.l.b16 %v958
        %v2831 = vunpack.c.l.b16 %v959
        %v2832 = vunpack.c.l.b16 %v960
        %v2833 = vunpack.c.l.b16 %v961
        %v2834 = vunpack.c.l.b16 %v962
        %v2835 = vunpack.c.l.b16 %v963
        %v2836 = vunpack.c.l.b16 %v964
        %v2837 = vunpack.c.l.b16 %v965
        %v2838 = vunpack.c.l.b16 %v966
        %v2839 = vunpack.c.l.b16 %v967
        %v2840 = vunpack.c.l.b16 %v968
        %v2841 = vunpack.c.l.b16 %v969
        %v2842 = vunpack.c.l.b16 %v970
        %v2843 = vunpack.c.l.b16 %v971
        %v2844 = vunpack.c.l.b16 %v972
        %v2845 = vunpack.c.l.b16 %v973
        %v2846 = vunpack.c.l.b16 %v974
        %v2847 = vunpack.c.l.b16 %v975
        %v2848 = vunpack.c.l.b16 %v976
        %v2849 = vunpack.c.l.b16 %v977
        %v2850 = vunpack.c.l.b16 %v978
        %v2851 = vunpack.c.l.b16 %v979
        %v2852 = vunpack.c.l.b16 %v980
        %v2853 = vunpack.c.l.b16 %v981
        %v2854 = vunpack.c.l.b16 %v982
        %v2855 = vunpack.c.l.b16 %v983
        %v2856 = vunpack.c.l.b16 %v984
        %v2857 = vunpack.c.l.b16 %v985
        %v2858 = vunpack.c.l.b16 %v986
        %v2859 = vunpack.c.l.b16 %v987
        %v2860 = vunpack.c.l.b16 %v988
        %v2861 = vunpack.c.l.b16 %v989
        %v2862 = vunpack.c.l.b16 %v990
        %v2863 = vunpack.c.l.b16 %v991
        %v2864 = vunpack.c.l.b16 %v992
        %v2865 = vunpack.c.l.b16 %v993
        %v2866 = vunpack.c.l.b16 %v994
        %v2867 = vunpack.c.l.b16 %v995
        %v2868 = vunpack.c.l.b16 %v996
        %v2869 = vunpack.c.l.b16 %v997
        %v2870 = vunpack.c.l.b16 %v998
        %v2871 = vunpack.c.l.b16 %v999
        %v2872 = vunpack.c.l.b16 %v1000
        %v2873 = vunpack.c.l.b16 %v1001
        %v2874 = vunpack.c.l.b16 %v1002
        %v2875 = vunpack.c.l.b16 %v1003
        %v2876 = vunpack.c.l.b16 %v1004
        %v2877 = vunpack.c.l.b16 %v1005
        %v2878 = vunpack.c.l.b16 %v1006
        %v2879 = vunpack.c.l.b16 %v1007
        %v2880 = vunpack.c.l.b16 %v1008
        %v2881 = vunpack.c.l.b16 %v1009
        %v2882 = vunpack.c.l.b16 %v1010
        %v2883 = vunpack.c.l.b16 %v1011
        %v2884 = vunpack.c.l.b16 %v1012
        %v2885 = vunpack.c.l.b16 %v1013
        %v2886 = vunpack.c.l.b16 %v1014
        %v2887 = vunpack.c.l.b16 %v1015
        %v2888 = vunpack.c.l.b16 %v1016
        %v2889 = vunpack.c.l.b16 %v1017
        %v2890 = vunpack.c.l.b16 %v1018
        %v2891 = vunpack.c.l.b16 %v1019
        %v2892 = vunpack.c.l.b16 %v1020
        %v2893 = vunpack.c.l.b16 %v1021
        %v2894 = vunpack.c.l.b16 %v1022
        %v2895 = vunpack.c.l.b16 %v1023
        %v2896 = vunpack.c.l.b16 %v1024
        %v2897 = vunpack.c.l.b16 %v1025
        %v2898 = vunpack.c.l.b16 %v1026
        %v2899 = vunpack.c.l.b16 %v1027
        %v2900 = vunpack.c.l.b16 %v1028
        %v2901 = vunpack.c.l.b16 %v1029
        %v2902 = vunpack.c.l.b16 %v1030
        %v2903 = vunpack.c.l.b16 %v1031
        %v2904 = vunpack.c.l.b16 %v1032
        %v2905 = vunpack.c.l.b16 %v1033
        %v2906 = vunpack.c.l.b16 %v1034
        %v2907 = vunpack.c.l.b16 %v1035
        %v2908 = vunpack.c.l.b16 %v1036
        %v2909 = vunpack.c.l.b16 %v1037
        %v2910 = vunpack.c.l.b16 %v1038
        %v2911 = vunpack.c.l.b16 %v1039
        %v2912 = vunpack.c.l.b16 %v1040
        %v2913 = vunpack.c.l.b16 %v1041
        %v2914 = vunpack.c.l.b16 %v1042
        %v2915 = vunpack.c.l.b16 %v1043
        %v2916 = vunpack.c.l.b16 %v1044
        %v2917 = vunpack.c.l.b16 %v1045
        %v2918 = vunpack.c.l.b16 %v1046
        %v2919 = vunpack.c.l.b16 %v1047
        %v2920 = vunpack.c.l.b16 %v1048
        %v2921 = vunpack.c.l.b16 %v1049
        %v2922 = vunpack.c.l.b16 %v1050
        %v2923 = vunpack.c.l.b16 %v1051
        %v2924 = vunpack.c.l.b16 %v1052
        %v2925 = vunpack.c.l.b16 %v1053
        %v2926 = vunpack.c.l.b16 %v1054
        %v2927 = vunpack.c.l.b16 %v1055
        %v2928 = vunpack.c.l.b16 %v1056
        %v2929 = vunpack.c.l.b16 %v1057
        %v2930 = vunpack.c.l.b16 %v1058
        %v2931 = vunpack.c.l.b16 %v1059
        %v2932 = vunpack.c.l.b16 %v1060
        %v2933 = vunpack.c.l.b16 %v1061
        %v2934 = vunpack.c.l.b16 %v1062
        %v2935 = vunpack.c.l.b16 %v1063
        %v2936 = vunpack.c.l.b16 %v1064
        %v2937 = vunpack.c.l.b16 %v1065
        %v2938 = vunpack.c.l.b16 %v1066
        %v2939 = vunpack.c.l.b16 %v1067
        %v2940 = vunpack.c.l.b16 %v1068
        %v2941 = vunpack.c.l.b16 %v1069
        %v2942 = vunpack.c.l.b16 %v1070
        %v2943 = vunpack.c.l.b16 %v1071
        %v2944 = vpack.c.b16 %v2369, %v2368
        %v2945 = vpack.c.b16 %v2371, %v2370
        %v2946 = vpack.c.b16 %v2373, %v2372
        %v2947 = vpack.c.b16 %v2375, %v2374
        %v2948 = vpack.c.b16 %v2377, %v2376
        %v2949 = vpack.c.b16 %v2379, %v2378
        %v2950 = vpack.c.b16 %v2381, %v2380
        %v2951 = vpack.c.b16 %v2383, %v2382
        %v2952 = vpack.c.b16 %v2385, %v2384
        %v2953 = vpack.c.b16 %v2387, %v2386
        %v2954 = vpack.c.b16 %v2389, %v2388
        %v2955 = vpack.c.b16 %v2391, %v2390
        %v2956 = vpack.c.b16 %v2393, %v2392
        %v2957 = vpack.c.b16 %v2395, %v2394
        %v2958 = vpack.c.b16 %v2397, %v2396
        %v2959 = vpack.c.b16 %v2399, %v2398
        %v2960 = vpack.c.b16 %v2401, %v2400
        %v2961 = vpack.c.b16 %v2403, %v2402
        %v2962 = vpack.c.b16 %v2405, %v2404
        %v2963 = vpack.c.b16 %v2407, %v2406
        %v2964 = vpack.c.b16 %v2409, %v2408
        %v2965 = vpack.c.b16 %v2411, %v2410
        %v2966 = vpack.c.b16 %v2413, %v2412
        %v2967 = vpack.c.b16 %v2415, %v2414
        %v2968 = vpack.c.b16 %v2417, %v2416
        %v2969 = vpack.c.b16 %v2419, %v2418
        %v2970 = vpack.c.b16 %v2421, %v2420
        %v2971 = vpack.c.b16 %v2423, %v2422
        %v2972 = vpack.c.b16 %v2425, %v2424
        %v2973 = vpack.c.b16 %v2427, %v2426
        %v2974 = vpack.c.b16 %v2429, %v2428
        %v2975 = vpack.c.b16 %v2431, %v2430
        %v2976 = vpack.c.b16 %v2433, %v2432
        %v2977 = vpack.c.b16 %v2435, %v2434
        %v2978 = vpack.c.b16 %v2437, %v2436
        %v2979 = vpack.c.b16 %v2439, %v2438
        %v2980 = vpack.c.b16 %v2441, %v2440
        %v2981 = vpack.c.b16 %v2443, %v2442
        %v2982 = vpack.c.b16 %v2445, %v2444
        %v2983 = vpack.c.b16 %v2447, %v2446
        %v2984 = vpack.c.b16 %v2449, %v2448
        %v2985 = vpack.c.b16 %v2451, %v2450
        %v2986 = vpack.c.b16 %v2453, %v2452
        %v2987 = vpack.c.b16 %v2455, %v2454
        %v2988 = vpack.c.b16 %v2457, %v2456
        %v2989 = vpack.c.b16 %v2459, %v2458
        %v2990 = vpack.c.b16 %v2461, %v2460
        %v2991 = vpack.c.b16 %v2463, %v2462
        %v2992 = vpack.c.b16 %v2465, %v2464
        %v2993 = vpack.c.b16 %v2467, %v2466
        %v2994 = vpack.c.b16 %v2469, %v2468
        %v2995 = vpack.c.b16 %v2471, %v2470
        %v2996 = vpack.c.b16 %v2473, %v2472
        %v2997 = vpack.c.b16 %v2475, %v2474
        %v2998 = vpack.c.b16 %v2477, %v2476
        %v2999 = vpack.c.b16 %v2479, %v2478
        %v3000 = vpack.c.b16 %v2481, %v2480
        %v3001 = vpack.c.b16 %v2483, %v2482
        %v3002 = vpack.c.b16 %v2485, %v2484
        %v3003 = vpack.c.b16 %v2487, %v2486
        %v3004 = vpack.c.b16 %v2489, %v2488
        %v3005 = vpack.c.b16 %v2491, %v2490
        %v3006 = vpack.c.b16 %v2493, %v2492
        %v3007 = vpack.c.b16 %v2495, %v2494
        %v3008 = vpack.c.b16 %v2497, %v2496
        %v3009 = vpack.c.b16 %v2499, %v2498
        %v3010 = vpack.c.b16 %v2501, %v2500
        %v3011 = vpack.c.b16 %v2503, %v2502
        %v3012 = vpack.c.b16 %v2505, %v2504
        %v3013 = vpack.c.b16 %v2507, %v2506
        %v3014 = vpack.c.b16 %v2509, %v2508
        %v3015 = vpack.c.b16 %v2511, %v2510
        %v3016 = vpack.c.b16 %v2513, %v2512
        %v3017 = vpack.c.b16 %v2515, %v2514
        %v3018 = vpack.c.b16 %v2517, %v2516
        %v3019 = vpack.c.b16 %v2519, %v2518
        %v3020 = vpack.c.b16 %v2521, %v2520
        %v3021 = vpack.c.b16 %v2523, %v2522
        %v3022 = vpack.c.b16 %v2525, %v2524
        %v3023 = vpack.c.b16 %v2527, %v2526
        %v3024 = vpack.c.b16 %v2529, %v2528
        %v3025 = vpack.c.b16 %v2531, %v2530
        %v3026 = vpack.c.b16 %v2533, %v2532
        %v3027 = vpack.c.b16 %v2535, %v2534
        %v3028 = vpack.c.b16 %v2537, %v2536
        %v3029 = vpack.c.b16 %v2539, %v2538
        %v3030 = vpack.c.b16 %v2541, %v2540
        %v3031 = vpack.c.b16 %v2543, %v2542
        %v3032 = vpack.c.b16 %v2545, %v2544
        %v3033 = vpack.c.b16 %v2547, %v2546
        %v3034 = vpack.c.b16 %v2549, %v2548
        %v3035 = vpack.c.b16 %v2551, %v2550
        %v3036 = vpack.c.b16 %v2553, %v2552
        %v3037 = vpack.c.b16 %v2555, %v2554
        %v3038 = vpack.c.b16 %v2557, %v2556
        %v3039 = vpack.c.b16 %v2559, %v2558
        %v3040 = vpack.c.b16 %v2561, %v2560
        %v3041 = vpack.c.b16 %v2563, %v2562
        %v3042 = vpack.c.b16 %v2565, %v2564
        %v3043 = vpack.c.b16 %v2567, %v2566
        %v3044 = vpack.c.b16 %v2569, %v2568
        %v3045 = vpack.c.b16 %v2571, %v2570
        %v3046 = vpack.c.b16 %v2573, %v2572
        %v3047 = vpack.c.b16 %v2575, %v2574
        %v3048 = vpack.c.b16 %v2577, %v2576
        %v3049 = vpack.c.b16 %v2579, %v2578
        %v3050 = vpack.c.b16 %v2581, %v2580
        %v3051 = vpack.c.b16 %v2583, %v2582
        %v3052 = vpack.c.b16 %v2585, %v2584
        %v3053 = vpack.c.b16 %v2587, %v2586
        %v3054 = vpack.c.b16 %v2589, %v2588
        %v3055 = vpack.c.b16 %v2591, %v2590
        %v3056 = vpack.c.b16 %v2593, %v2592
        %v3057 = vpack.c.b16 %v2595, %v2594
        %v3058 = vpack.c.b16 %v2597, %v2596
        %v3059 = vpack.c.b16 %v2599, %v2598
        %v3060 = vpack.c.b16 %v2601, %v2600
        %v3061 = vpack.c.b16 %v2603, %v2602
        %v3062 = vpack.c.b16 %v2605, %v2604
        %v3063 = vpack.c.b16 %v2607, %v2606
        %v3064 = vpack.c.b16 %v2609, %v2608
        %v3065 = vpack.c.b16 %v2611, %v2610
        %v3066 = vpack.c.b16 %v2613, %v2612
        %v3067 = vpack.c.b16 %v2615, %v2614
        %v3068 = vpack.c.b16 %v2617, %v2616
        %v3069 = vpack.c.b16 %v2619, %v2618
        %v3070 = vpack.c.b16 %v2621, %v2620
        %v3071 = vpack.c.b16 %v2623, %v2622
        %v3072 = vpack.c.b16 %v2625, %v2624
        %v3073 = vpack.c.b16 %v2627, %v2626
        %v3074 = vpack.c.b16 %v2629, %v2628
        %v3075 = vpack.c.b16 %v2631, %v2630
        %v3076 = vpack.c.b16 %v2633, %v2632
        %v3077 = vpack.c.b16 %v2635, %v2634
        %v3078 = vpack.c.b16 %v2637, %v2636
        %v3079 = vpack.c.b16 %v2639, %v2638
        %v3080 = vpack.c.b16 %v2641, %v2640
        %v3081 = vpack.c.b16 %v2643, %v2642
        %v3082 = vpack.c.b16 %v2645, %v2644
        %v3083 = vpack.c.b16 %v2647, %v2646
        %v3084 = vpack.c.b16 %v2649, %v2648
        %v3085 = vpack.c.b16 %v2651, %v2650
        %v3086 = vpack.c.b16 %v2653, %v2652
        %v3087 = vpack.c.b16 %v2655, %v2654
        %v3088 = vpack.c.b16 %v2657, %v2656
        %v3089 = vpack.c.b16 %v2659, %v2658
        %v3090 = vpack.c.b16 %v2661, %v2660
        %v3091 = vpack.c.b16 %v2663, %v2662
        %v3092 = vpack.c.b16 %v2665, %v2664
        %v3093 = vpack.c.b16 %v2667, %v2666
        %v3094 = vpack.c.b16 %v2669, %v2668
        %v3095 = vpack.c.b16 %v2671, %v2670
        %v3096 = vpack.c.b16 %v2673, %v2672
        %v3097 = vpack.c.b16 %v2675, %v2674
        %v3098 = vpack.c.b16 %v2677, %v2676
        %v3099 = vpack.c.b16 %v2679, %v2678
        %v3100 = vpack.c.b16 %v2681, %v2680
        %v3101 = vpack.c.b16 %v2683, %v2682
        %v3102 = vpack.c.b16 %v2685, %v2684
        %v3103 = vpack.c.b16 %v2687, %v2686
        %v3104 = vpack.c.b16 %v2689, %v2688
        %v3105 = vpack.c.b16 %v2691, %v2690
        %v3106 = vpack.c.b16 %v2693, %v2692
        %v3107 = vpack.c.b16 %v2695, %v2694
        %v3108 = vpack.c.b16 %v2697, %v2696
        %v3109 = vpack.c.b16 %v2699, %v2698
        %v3110 = vpack.c.b16 %v2701, %v2700
        %v3111 = vpack.c.b16 %v2703, %v2702
        %v3112 = vpack.c.b16 %v2705, %v2704
        %v3113 = vpack.c.b16 %v2707, %v2706
        %v3114 = vpack.c.b16 %v2709, %v2708
        %v3115 = vpack.c.b16 %v2711, %v2710
        %v3116 = vpack.c.b16 %v2713, %v2712
        %v3117 = vpack.c.b16 %v2715, %v2714
        %v3118 = vpack.c.b16 %v2717, %v2716
        %v3119 = vpack.c.b16 %v2719, %v2718
        %v3120 = vpack.c.b16 %v2721, %v2720
        %v3121 = vpack.c.b16 %v2723, %v2722
        %v3122 = vpack.c.b16 %v2725, %v2724
        %v3123 = vpack.c.b16 %v2727, %v2726
        %v3124 = vpack.c.b16 %v2729, %v2728
        %v3125 = vpack.c.b16 %v2731, %v2730
        %v3126 = vpack.c.b16 %v2733, %v2732
        %v3127 = vpack.c.b16 %v2735, %v2734
        %v3128 = vpack.c.b16 %v2737, %v2736
        %v3129 = vpack.c.b16 %v2739, %v2738
        %v3130 = vpack.c.b16 %v2741, %v2740
        %v3131 = vpack.c.b16 %v2743, %v2742
        %v3132 = vpack.c.b16 %v2745, %v2744
        %v3133 = vpack.c.b16 %v2747, %v2746
        %v3134 = vpack.c.b16 %v2749, %v2748
        %v3135 = vpack.c.b16 %v2751, %v2750
        %v3136 = vpack.c.b16 %v2753, %v2752
        %v3137 = vpack.c.b16 %v2755, %v2754
        %v3138 = vpack.c.b16 %v2757, %v2756
        %v3139 = vpack.c.b16 %v2759, %v2758
        %v3140 = vpack.c.b16 %v2761, %v2760
        %v3141 = vpack.c.b16 %v2763, %v2762
        %v3142 = vpack.c.b16 %v2765, %v2764
        %v3143 = vpack.c.b16 %v2767, %v2766
        %v3144 = vpack.c.b16 %v2769, %v2768
        %v3145 = vpack.c.b16 %v2771, %v2770
        %v3146 = vpack.c.b16 %v2773, %v2772
        %v3147 = vpack.c.b16 %v2775, %v2774
        %v3148 = vpack.c.b16 %v2777, %v2776
        %v3149 = vpack.c.b16 %v2779, %v2778
        %v3150 = vpack.c.b16 %v2781, %v2780
        %v3151 = vpack.c.b16 %v2783, %v2782
        %v3152 = vpack.c.b16 %v2785, %v2784
        %v3153 = vpack.c.b16 %v2787, %v2786
        %v3154 = vpack.c.b16 %v2789, %v2788
        %v3155 = vpack.c.b16 %v2791, %v2790
        %v3156 = vpack.c.b16 %v2793, %v2792
        %v3157 = vpack.c.b16 %v2795, %v2794
        %v3158 = vpack.c.b16 %v2797, %v2796
        %v3159 = vpack.c.b16 %v2799, %v2798
        %v3160 = vpack.c.b16 %v2801, %v2800
        %v3161 = vpack.c.b16 %v2803, %v2802
        %v3162 = vpack.c.b16 %v2805, %v2804
        %v3163 = vpack.c.b16 %v2807, %v2806
        %v3164 = vpack.c.b16 %v2809, %v2808
        %v3165 = vpack.c.b16 %v2811, %v2810
        %v3166 = vpack.c.b16 %v2813, %v2812
        %v3167 = vpack.c.b16 %v2815, %v2814
        %v3168 = vpack.c.b16 %v2817, %v2816
        %v3169 = vpack.c.b16 %v2819, %v2818
        %v3170 = vpack.c.b16 %v2821, %v2820
        %v3171 = vpack.c.b16 %v2823, %v2822
        %v3172 = vpack.c.b16 %v2825, %v2824
        %v3173 = vpack.c.b16 %v2827, %v2826
        %v3174 = vpack.c.b16 %v2829, %v2828
        %v3175 = vpack.c.b16 %v2831, %v2830
        %v3176 = vpack.c.b16 %v2833, %v2832
        %v3177 = vpack.c.b16 %v2835, %v2834
        %v3178 = vpack.c.b16 %v2837, %v2836
        %v3179 = vpack.c.b16 %v2839, %v2838
        %v3180 = vpack.c.b16 %v2841, %v2840
        %v3181 = vpack.c.b16 %v2843, %v2842
        %v3182 = vpack.c.b16 %v2845, %v2844
        %v3183 = vpack.c.b16 %v2847, %v2846
        %v3184 = vpack.c.b16 %v2849, %v2848
        %v3185 = vpack.c.b16 %v2851, %v2850
        %v3186 = vpack.c.b16 %v2853, %v2852
        %v3187 = vpack.c.b16 %v2855, %v2854
        %v3188 = vpack.c.b16 %v2857, %v2856
        %v3189 = vpack.c.b16 %v2859, %v2858
        %v3190 = vpack.c.b16 %v2861, %v2860
        %v3191 = vpack.c.b16 %v2863, %v2862
        %v3192 = vpack.c.b16 %v2865, %v2864
        %v3193 = vpack.c.b16 %v2867, %v2866
        %v3194 = vpack.c.b16 %v2869, %v2868
        %v3195 = vpack.c.b16 %v2871, %v2870
        %v3196 = vpack.c.b16 %v2873, %v2872
        %v3197 = vpack.c.b16 %v2875, %v2874
        %v3198 = vpack.c.b16 %v2877, %v2876
        %v3199 = vpack.c.b16 %v2879, %v2878
        %v3200 = vpack.c.b16 %v2881, %v2880
        %v3201 = vpack.c.b16 %v2883, %v2882
        %v3202 = vpack.c.b16 %v2885, %v2884
        %v3203 = vpack.c.b16 %v2887, %v2886
        %v3204 = vpack.c.b16 %v2889, %v2888
        %v3205 = vpack.c.b16 %v2891, %v2890
        %v3206 = vpack.c.b16 %v2893, %v2892
        %v3207 = vpack.c.b16 %v2895, %v2894
        %v3208 = vpack.c.b16 %v2897, %v2896
        %v3209 = vpack.c.b16 %v2899, %v2898
        %v3210 = vpack.c.b16 %v2901, %v2900
        %v3211 = vpack.c.b16 %v2903, %v2902
        %v3212 = vpack.c.b16 %v2905, %v2904
        %v3213 = vpack.c.b16 %v2907, %v2906
        %v3214 = vpack.c.b16 %v2909, %v2908
        %v3215 = vpack.c.b16 %v2911, %v2910
        %v3216 = vpack.c.b16 %v2913, %v2912
        %v3217 = vpack.c.b16 %v2915, %v2914
        %v3218 = vpack.c.b16 %v2917, %v2916
        %v3219 = vpack.c.b16 %v2919, %v2918
        %v3220 = vpack.c.b16 %v2921, %v2920
        %v3221 = vpack.c.b16 %v2923, %v2922
        %v3222 = vpack.c.b16 %v2925, %v2924
        %v3223 = vpack.c.b16 %v2927, %v2926
        %v3224 = vpack.c.b16 %v2929, %v2928
        %v3225 = vpack.c.b16 %v2931, %v2930
        %v3226 = vpack.c.b16 %v2933, %v2932
        %v3227 = vpack.c.b16 %v2935, %v2934
        %v3228 = vpack.c.b16 %v2937, %v2936
        %v3229 = vpack.c.b16 %v2939, %v2938
        %v3230 = vpack.c.b16 %v2941, %v2940
        %v3231 = vpack.c.b16 %v2943, %v2942
        %3520 = vmatpush.bf16.msra.mxu0 %v2951
        %3521 = vmatpush.bf16.msra.mxu0 %v2950
        %3522 = vmatpush.bf16.msra.mxu0 %v2949
        %3523 = vmatpush.bf16.msra.mxu0 %v2948
        %3524 = vmatpush.bf16.msra.mxu0 %v2947
        %3525 = vmatpush.bf16.msra.mxu0 %v2946
        %3526 = vmatpush.bf16.msra.mxu0 %v2945
        %3527 = vmatpush.bf16.msra.mxu0 %v2944
        %3528 = vmatmul.bf16.gmra.mxu0 %v1504
        %v3529 = vpop.f32.mrf.mxu0
        %v3530 = vadd.f32 0.0, %v3529
        %v3531 = vpop.f32.mrf.mxu0
        %v3532 = vadd.f32 0.0, %v3531
        %3533 = vmatmul.bf16.gmra.mxu0 %v1540
        %v3534 = vpop.f32.mrf.mxu0
        %v3535 = vadd.f32 0.0, %v3534
        %v3536 = vpop.f32.mrf.mxu0
        %v3537 = vadd.f32 0.0, %v3536
        %3538 = vmatmul.bf16.gmra.mxu0 %v1576
        %v3539 = vpop.f32.mrf.mxu0
        %v3540 = vadd.f32 0.0, %v3539
        %v3541 = vpop.f32.mrf.mxu0
        %v3542 = vadd.f32 0.0, %v3541
        %3543 = vmatmul.bf16.gmra.mxu0 %v1612
        %v3544 = vpop.f32.mrf.mxu0
        %v3545 = vadd.f32 0.0, %v3544
        %v3546 = vpop.f32.mrf.mxu0
        %v3547 = vadd.f32 0.0, %v3546
        %3548 = vdwg.mxu0
        %3549 = vmatpush.bf16.msra.mxu0 %v2959
        %3550 = vmatpush.bf16.msra.mxu0 %v2958
        %3551 = vmatpush.bf16.msra.mxu0 %v2957
        %3552 = vmatpush.bf16.msra.mxu0 %v2956
        %3553 = vmatpush.bf16.msra.mxu0 %v2955
        %3554 = vmatpush.bf16.msra.mxu0 %v2954
        %3555 = vmatpush.bf16.msra.mxu0 %v2953
        %3556 = vmatpush.bf16.msra.mxu0 %v2952
        %3557 = vmatmul.bf16.gmra.mxu0 %v1505
        %v3558 = vpop.f32.mrf.mxu0
        %v3559 = vadd.f32 %v3530, %v3558
        %v3560 = vpop.f32.mrf.mxu0
        %v3561 = vadd.f32 %v3532, %v3560
        %3562 = vmatmul.bf16.gmra.mxu0 %v1541
        %v3563 = vpop.f32.mrf.mxu0
        %v3564 = vadd.f32 %v3535, %v3563
        %v3565 = vpop.f32.mrf.mxu0
        %v3566 = vadd.f32 %v3537, %v3565
        %3567 = vmatmul.bf16.gmra.mxu0 %v1577
        %v3568 = vpop.f32.mrf.mxu0
        %v3569 = vadd.f32 %v3540, %v3568
        %v3570 = vpop.f32.mrf.mxu0
        %v3571 = vadd.f32 %v3542, %v3570
        %3572 = vmatmul.bf16.gmra.mxu0 %v1613
        %v3573 = vpop.f32.mrf.mxu0
        %v3574 = vadd.f32 %v3545, %v3573
        %v3575 = vpop.f32.mrf.mxu0
        %v3576 = vadd.f32 %v3547, %v3575
        %3577 = vdwg.mxu0
        %3578 = vmatpush.bf16.msra.mxu0 %v2967
        %3579 = vmatpush.bf16.msra.mxu0 %v2966
        %3580 = vmatpush.bf16.msra.mxu0 %v2965
        %3581 = vmatpush.bf16.msra.mxu0 %v2964
        %3582 = vmatpush.bf16.msra.mxu0 %v2963
        %3583 = vmatpush.bf16.msra.mxu0 %v2962
        %3584 = vmatpush.bf16.msra.mxu0 %v2961
        %3585 = vmatpush.bf16.msra.mxu0 %v2960
        %3586 = vmatmul.bf16.gmra.mxu0 %v1506
        %v3587 = vpop.f32.mrf.mxu0
        %v3588 = vadd.f32 %v3559, %v3587
        %v3589 = vpop.f32.mrf.mxu0
        %v3590 = vadd.f32 %v3561, %v3589
        %3591 = vmatmul.bf16.gmra.mxu0 %v1542
        %v3592 = vpop.f32.mrf.mxu0
        %v3593 = vadd.f32 %v3564, %v3592
        %v3594 = vpop.f32.mrf.mxu0
        %v3595 = vadd.f32 %v3566, %v3594
        %3596 = vmatmul.bf16.gmra.mxu0 %v1578
        %v3597 = vpop.f32.mrf.mxu0
        %v3598 = vadd.f32 %v3569, %v3597
        %v3599 = vpop.f32.mrf.mxu0
        %v3600 = vadd.f32 %v3571, %v3599
        %3601 = vmatmul.bf16.gmra.mxu0 %v1614
        %v3602 = vpop.f32.mrf.mxu0
        %v3603 = vadd.f32 %v3574, %v3602
        %v3604 = vpop.f32.mrf.mxu0
        %v3605 = vadd.f32 %v3576, %v3604
        %3606 = vdwg.mxu0
        %3607 = vmatpush.bf16.msra.mxu0 %v2975
        %3608 = vmatpush.bf16.msra.mxu0 %v2974
        %3609 = vmatpush.bf16.msra.mxu0 %v2973
        %3610 = vmatpush.bf16.msra.mxu0 %v2972
        %3611 = vmatpush.bf16.msra.mxu0 %v2971
        %3612 = vmatpush.bf16.msra.mxu0 %v2970
        %3613 = vmatpush.bf16.msra.mxu0 %v2969
        %3614 = vmatpush.bf16.msra.mxu0 %v2968
        %3615 = vmatmul.bf16.gmra.mxu0 %v1507
        %v3616 = vpop.f32.mrf.mxu0
        %v3617 = vadd.f32 %v3588, %v3616
        %v3618 = vpop.f32.mrf.mxu0
        %v3619 = vadd.f32 %v3590, %v3618
        %3620 = vmatmul.bf16.gmra.mxu0 %v1543
        %v3621 = vpop.f32.mrf.mxu0
        %v3622 = vadd.f32 %v3593, %v3621
        %v3623 = vpop.f32.mrf.mxu0
        %v3624 = vadd.f32 %v3595, %v3623
        %3625 = vmatmul.bf16.gmra.mxu0 %v1579
        %v3626 = vpop.f32.mrf.mxu0
        %v3627 = vadd.f32 %v3598, %v3626
        %v3628 = vpop.f32.mrf.mxu0
        %v3629 = vadd.f32 %v3600, %v3628
        %3630 = vmatmul.bf16.gmra.mxu0 %v1615
        %v3631 = vpop.f32.mrf.mxu0
        %v3632 = vadd.f32 %v3603, %v3631
        %v3633 = vpop.f32.mrf.mxu0
        %v3634 = vadd.f32 %v3605, %v3633
        %3635 = vdwg.mxu0
        %3636 = vmatpush.bf16.msra.mxu0 %v2983
        %3637 = vmatpush.bf16.msra.mxu0 %v2982
        %3638 = vmatpush.bf16.msra.mxu0 %v2981
        %3639 = vmatpush.bf16.msra.mxu0 %v2980
        %3640 = vmatpush.bf16.msra.mxu0 %v2979
        %3641 = vmatpush.bf16.msra.mxu0 %v2978
        %3642 = vmatpush.bf16.msra.mxu0 %v2977
        %3643 = vmatpush.bf16.msra.mxu0 %v2976
        %3644 = vmatmul.bf16.gmra.mxu0 %v1508
        %v3645 = vpop.f32.mrf.mxu0
        %v3646 = vadd.f32 %v3617, %v3645
        %v3647 = vpop.f32.mrf.mxu0
        %v3648 = vadd.f32 %v3619, %v3647
        %3649 = vmatmul.bf16.gmra.mxu0 %v1544
        %v3650 = vpop.f32.mrf.mxu0
        %v3651 = vadd.f32 %v3622, %v3650
        %v3652 = vpop.f32.mrf.mxu0
        %v3653 = vadd.f32 %v3624, %v3652
        %3654 = vmatmul.bf16.gmra.mxu0 %v1580
        %v3655 = vpop.f32.mrf.mxu0
        %v3656 = vadd.f32 %v3627, %v3655
        %v3657 = vpop.f32.mrf.mxu0
        %v3658 = vadd.f32 %v3629, %v3657
        %3659 = vmatmul.bf16.gmra.mxu0 %v1616
        %v3660 = vpop.f32.mrf.mxu0
        %v3661 = vadd.f32 %v3632, %v3660
        %v3662 = vpop.f32.mrf.mxu0
        %v3663 = vadd.f32 %v3634, %v3662
        %3664 = vdwg.mxu0
        %3665 = vmatpush.bf16.msra.mxu0 %v2991
        %3666 = vmatpush.bf16.msra.mxu0 %v2990
        %3667 = vmatpush.bf16.msra.mxu0 %v2989
        %3668 = vmatpush.bf16.msra.mxu0 %v2988
        %3669 = vmatpush.bf16.msra.mxu0 %v2987
        %3670 = vmatpush.bf16.msra.mxu0 %v2986
        %3671 = vmatpush.bf16.msra.mxu0 %v2985
        %3672 = vmatpush.bf16.msra.mxu0 %v2984
        %3673 = vmatmul.bf16.gmra.mxu0 %v1509
        %v3674 = vpop.f32.mrf.mxu0
        %v3675 = vadd.f32 %v3646, %v3674
        %v3676 = vpop.f32.mrf.mxu0
        %v3677 = vadd.f32 %v3648, %v3676
        %3678 = vmatmul.bf16.gmra.mxu0 %v1545
        %v3679 = vpop.f32.mrf.mxu0
        %v3680 = vadd.f32 %v3651, %v3679
        %v3681 = vpop.f32.mrf.mxu0
        %v3682 = vadd.f32 %v3653, %v3681
        %3683 = vmatmul.bf16.gmra.mxu0 %v1581
        %v3684 = vpop.f32.mrf.mxu0
        %v3685 = vadd.f32 %v3656, %v3684
        %v3686 = vpop.f32.mrf.mxu0
        %v3687 = vadd.f32 %v3658, %v3686
        %3688 = vmatmul.bf16.gmra.mxu0 %v1617
        %v3689 = vpop.f32.mrf.mxu0
        %v3690 = vadd.f32 %v3661, %v3689
        %v3691 = vpop.f32.mrf.mxu0
        %v3692 = vadd.f32 %v3663, %v3691
        %3693 = vdwg.mxu0
        %3694 = vmatpush.bf16.msra.mxu0 %v2999
        %3695 = vmatpush.bf16.msra.mxu0 %v2998
        %3696 = vmatpush.bf16.msra.mxu0 %v2997
        %3697 = vmatpush.bf16.msra.mxu0 %v2996
        %3698 = vmatpush.bf16.msra.mxu0 %v2995
        %3699 = vmatpush.bf16.msra.mxu0 %v2994
        %3700 = vmatpush.bf16.msra.mxu0 %v2993
        %3701 = vmatpush.bf16.msra.mxu0 %v2992
        %3702 = vmatmul.bf16.gmra.mxu0 %v1510
        %v3703 = vpop.f32.mrf.mxu0
        %v3704 = vadd.f32 %v3675, %v3703
        %v3705 = vpop.f32.mrf.mxu0
        %v3706 = vadd.f32 %v3677, %v3705
        %3707 = vmatmul.bf16.gmra.mxu0 %v1546
        %v3708 = vpop.f32.mrf.mxu0
        %v3709 = vadd.f32 %v3680, %v3708
        %v3710 = vpop.f32.mrf.mxu0
        %v3711 = vadd.f32 %v3682, %v3710
        %3712 = vmatmul.bf16.gmra.mxu0 %v1582
        %v3713 = vpop.f32.mrf.mxu0
        %v3714 = vadd.f32 %v3685, %v3713
        %v3715 = vpop.f32.mrf.mxu0
        %v3716 = vadd.f32 %v3687, %v3715
        %3717 = vmatmul.bf16.gmra.mxu0 %v1618
        %v3718 = vpop.f32.mrf.mxu0
        %v3719 = vadd.f32 %v3690, %v3718
        %v3720 = vpop.f32.mrf.mxu0
        %v3721 = vadd.f32 %v3692, %v3720
        %3722 = vdwg.mxu0
        %3723 = vmatpush.bf16.msra.mxu0 %v3007
        %3724 = vmatpush.bf16.msra.mxu0 %v3006
        %3725 = vmatpush.bf16.msra.mxu0 %v3005
        %3726 = vmatpush.bf16.msra.mxu0 %v3004
        %3727 = vmatpush.bf16.msra.mxu0 %v3003
        %3728 = vmatpush.bf16.msra.mxu0 %v3002
        %3729 = vmatpush.bf16.msra.mxu0 %v3001
        %3730 = vmatpush.bf16.msra.mxu0 %v3000
        %3731 = vmatmul.bf16.gmra.mxu0 %v1511
        %v3732 = vpop.f32.mrf.mxu0
        %v3733 = vadd.f32 %v3704, %v3732
        %v3734 = vpop.f32.mrf.mxu0
        %v3735 = vadd.f32 %v3706, %v3734
        %3736 = vmatmul.bf16.gmra.mxu0 %v1547
        %v3737 = vpop.f32.mrf.mxu0
        %v3738 = vadd.f32 %v3709, %v3737
        %v3739 = vpop.f32.mrf.mxu0
        %v3740 = vadd.f32 %v3711, %v3739
        %3741 = vmatmul.bf16.gmra.mxu0 %v1583
        %v3742 = vpop.f32.mrf.mxu0
        %v3743 = vadd.f32 %v3714, %v3742
        %v3744 = vpop.f32.mrf.mxu0
        %v3745 = vadd.f32 %v3716, %v3744
        %3746 = vmatmul.bf16.gmra.mxu0 %v1619
        %v3747 = vpop.f32.mrf.mxu0
        %v3748 = vadd.f32 %v3719, %v3747
        %v3749 = vpop.f32.mrf.mxu0
        %v3750 = vadd.f32 %v3721, %v3749
        %3751 = vdwg.mxu0
        %3752 = vmatpush.bf16.msra.mxu0 %v3015
        %3753 = vmatpush.bf16.msra.mxu0 %v3014
        %3754 = vmatpush.bf16.msra.mxu0 %v3013
        %3755 = vmatpush.bf16.msra.mxu0 %v3012
        %3756 = vmatpush.bf16.msra.mxu0 %v3011
        %3757 = vmatpush.bf16.msra.mxu0 %v3010
        %3758 = vmatpush.bf16.msra.mxu0 %v3009
        %3759 = vmatpush.bf16.msra.mxu0 %v3008
        %3760 = vmatmul.bf16.gmra.mxu0 %v1512
        %v3761 = vpop.f32.mrf.mxu0
        %v3762 = vadd.f32 %v3733, %v3761
        %v3763 = vpop.f32.mrf.mxu0
        %v3764 = vadd.f32 %v3735, %v3763
        %3765 = vmatmul.bf16.gmra.mxu0 %v1548
        %v3766 = vpop.f32.mrf.mxu0
        %v3767 = vadd.f32 %v3738, %v3766
        %v3768 = vpop.f32.mrf.mxu0
        %v3769 = vadd.f32 %v3740, %v3768
        %3770 = vmatmul.bf16.gmra.mxu0 %v1584
        %v3771 = vpop.f32.mrf.mxu0
        %v3772 = vadd.f32 %v3743, %v3771
        %v3773 = vpop.f32.mrf.mxu0
        %v3774 = vadd.f32 %v3745, %v3773
        %3775 = vmatmul.bf16.gmra.mxu0 %v1620
        %v3776 = vpop.f32.mrf.mxu0
        %v3777 = vadd.f32 %v3748, %v3776
        %v3778 = vpop.f32.mrf.mxu0
        %v3779 = vadd.f32 %v3750, %v3778
        %3780 = vdwg.mxu0
        %3781 = vmatpush.bf16.msra.mxu0 %v3023
        %3782 = vmatpush.bf16.msra.mxu0 %v3022
        %3783 = vmatpush.bf16.msra.mxu0 %v3021
        %3784 = vmatpush.bf16.msra.mxu0 %v3020
        %3785 = vmatpush.bf16.msra.mxu0 %v3019
        %3786 = vmatpush.bf16.msra.mxu0 %v3018
        %3787 = vmatpush.bf16.msra.mxu0 %v3017
        %3788 = vmatpush.bf16.msra.mxu0 %v3016
        %3789 = vmatmul.bf16.gmra.mxu0 %v1513
        %v3790 = vpop.f32.mrf.mxu0
        %v3791 = vadd.f32 %v3762, %v3790
        %v3792 = vpop.f32.mrf.mxu0
        %v3793 = vadd.f32 %v3764, %v3792
        %3794 = vmatmul.bf16.gmra.mxu0 %v1549
        %v3795 = vpop.f32.mrf.mxu0
        %v3796 = vadd.f32 %v3767, %v3795
        %v3797 = vpop.f32.mrf.mxu0
        %v3798 = vadd.f32 %v3769, %v3797
        %3799 = vmatmul.bf16.gmra.mxu0 %v1585
        %v3800 = vpop.f32.mrf.mxu0
        %v3801 = vadd.f32 %v3772, %v3800
        %v3802 = vpop.f32.mrf.mxu0
        %v3803 = vadd.f32 %v3774, %v3802
        %3804 = vmatmul.bf16.gmra.mxu0 %v1621
        %v3805 = vpop.f32.mrf.mxu0
        %v3806 = vadd.f32 %v3777, %v3805
        %v3807 = vpop.f32.mrf.mxu0
        %v3808 = vadd.f32 %v3779, %v3807
        %3809 = vdwg.mxu0
        %3810 = vmatpush.bf16.msra.mxu0 %v3031
        %3811 = vmatpush.bf16.msra.mxu0 %v3030
        %3812 = vmatpush.bf16.msra.mxu0 %v3029
        %3813 = vmatpush.bf16.msra.mxu0 %v3028
        %3814 = vmatpush.bf16.msra.mxu0 %v3027
        %3815 = vmatpush.bf16.msra.mxu0 %v3026
        %3816 = vmatpush.bf16.msra.mxu0 %v3025
        %3817 = vmatpush.bf16.msra.mxu0 %v3024
        %3818 = vmatmul.bf16.gmra.mxu0 %v1514
        %v3819 = vpop.f32.mrf.mxu0
        %v3820 = vadd.f32 %v3791, %v3819
        %v3821 = vpop.f32.mrf.mxu0
        %v3822 = vadd.f32 %v3793, %v3821
        %3823 = vmatmul.bf16.gmra.mxu0 %v1550
        %v3824 = vpop.f32.mrf.mxu0
        %v3825 = vadd.f32 %v3796, %v3824
        %v3826 = vpop.f32.mrf.mxu0
        %v3827 = vadd.f32 %v3798, %v3826
        %3828 = vmatmul.bf16.gmra.mxu0 %v1586
        %v3829 = vpop.f32.mrf.mxu0
        %v3830 = vadd.f32 %v3801, %v3829
        %v3831 = vpop.f32.mrf.mxu0
        %v3832 = vadd.f32 %v3803, %v3831
        %3833 = vmatmul.bf16.gmra.mxu0 %v1622
        %v3834 = vpop.f32.mrf.mxu0
        %v3835 = vadd.f32 %v3806, %v3834
        %v3836 = vpop.f32.mrf.mxu0
        %v3837 = vadd.f32 %v3808, %v3836
        %3838 = vdwg.mxu0
        %3839 = vmatpush.bf16.msra.mxu0 %v3039
        %3840 = vmatpush.bf16.msra.mxu0 %v3038
        %3841 = vmatpush.bf16.msra.mxu0 %v3037
        %3842 = vmatpush.bf16.msra.mxu0 %v3036
        %3843 = vmatpush.bf16.msra.mxu0 %v3035
        %3844 = vmatpush.bf16.msra.mxu0 %v3034
        %3845 = vmatpush.bf16.msra.mxu0 %v3033
        %3846 = vmatpush.bf16.msra.mxu0 %v3032
        %3847 = vmatmul.bf16.gmra.mxu0 %v1515
        %v3848 = vpop.f32.mrf.mxu0
        %v3849 = vadd.f32 %v3820, %v3848
        %v3850 = vpop.f32.mrf.mxu0
        %v3851 = vadd.f32 %v3822, %v3850
        %3852 = vmatmul.bf16.gmra.mxu0 %v1551
        %v3853 = vpop.f32.mrf.mxu0
        %v3854 = vadd.f32 %v3825, %v3853
        %v3855 = vpop.f32.mrf.mxu0
        %v3856 = vadd.f32 %v3827, %v3855
        %3857 = vmatmul.bf16.gmra.mxu0 %v1587
        %v3858 = vpop.f32.mrf.mxu0
        %v3859 = vadd.f32 %v3830, %v3858
        %v3860 = vpop.f32.mrf.mxu0
        %v3861 = vadd.f32 %v3832, %v3860
        %3862 = vmatmul.bf16.gmra.mxu0 %v1623
        %v3863 = vpop.f32.mrf.mxu0
        %v3864 = vadd.f32 %v3835, %v3863
        %v3865 = vpop.f32.mrf.mxu0
        %v3866 = vadd.f32 %v3837, %v3865
        %3867 = vdwg.mxu0
        %3868 = vmatpush.bf16.msra.mxu0 %v3047
        %3869 = vmatpush.bf16.msra.mxu0 %v3046
        %3870 = vmatpush.bf16.msra.mxu0 %v3045
        %3871 = vmatpush.bf16.msra.mxu0 %v3044
        %3872 = vmatpush.bf16.msra.mxu0 %v3043
        %3873 = vmatpush.bf16.msra.mxu0 %v3042
        %3874 = vmatpush.bf16.msra.mxu0 %v3041
        %3875 = vmatpush.bf16.msra.mxu0 %v3040
        %3876 = vmatmul.bf16.gmra.mxu0 %v1516
        %v3877 = vpop.f32.mrf.mxu0
        %v3878 = vadd.f32 %v3849, %v3877
        %v3879 = vpop.f32.mrf.mxu0
        %v3880 = vadd.f32 %v3851, %v3879
        %3881 = vmatmul.bf16.gmra.mxu0 %v1552
        %v3882 = vpop.f32.mrf.mxu0
        %v3883 = vadd.f32 %v3854, %v3882
        %v3884 = vpop.f32.mrf.mxu0
        %v3885 = vadd.f32 %v3856, %v3884
        %3886 = vmatmul.bf16.gmra.mxu0 %v1588
        %v3887 = vpop.f32.mrf.mxu0
        %v3888 = vadd.f32 %v3859, %v3887
        %v3889 = vpop.f32.mrf.mxu0
        %v3890 = vadd.f32 %v3861, %v3889
        %3891 = vmatmul.bf16.gmra.mxu0 %v1624
        %v3892 = vpop.f32.mrf.mxu0
        %v3893 = vadd.f32 %v3864, %v3892
        %v3894 = vpop.f32.mrf.mxu0
        %v3895 = vadd.f32 %v3866, %v3894
        %3896 = vdwg.mxu0
        %3897 = vmatpush.bf16.msra.mxu0 %v3055
        %3898 = vmatpush.bf16.msra.mxu0 %v3054
        %3899 = vmatpush.bf16.msra.mxu0 %v3053
        %3900 = vmatpush.bf16.msra.mxu0 %v3052
        %3901 = vmatpush.bf16.msra.mxu0 %v3051
        %3902 = vmatpush.bf16.msra.mxu0 %v3050
        %3903 = vmatpush.bf16.msra.mxu0 %v3049
        %3904 = vmatpush.bf16.msra.mxu0 %v3048
        %3905 = vmatmul.bf16.gmra.mxu0 %v1517
        %v3906 = vpop.f32.mrf.mxu0
        %v3907 = vadd.f32 %v3878, %v3906
        %v3908 = vpop.f32.mrf.mxu0
        %v3909 = vadd.f32 %v3880, %v3908
        %3910 = vmatmul.bf16.gmra.mxu0 %v1553
        %v3911 = vpop.f32.mrf.mxu0
        %v3912 = vadd.f32 %v3883, %v3911
        %v3913 = vpop.f32.mrf.mxu0
        %v3914 = vadd.f32 %v3885, %v3913
        %3915 = vmatmul.bf16.gmra.mxu0 %v1589
        %v3916 = vpop.f32.mrf.mxu0
        %v3917 = vadd.f32 %v3888, %v3916
        %v3918 = vpop.f32.mrf.mxu0
        %v3919 = vadd.f32 %v3890, %v3918
        %3920 = vmatmul.bf16.gmra.mxu0 %v1625
        %v3921 = vpop.f32.mrf.mxu0
        %v3922 = vadd.f32 %v3893, %v3921
        %v3923 = vpop.f32.mrf.mxu0
        %v3924 = vadd.f32 %v3895, %v3923
        %3925 = vdwg.mxu0
        %3926 = vmatpush.bf16.msra.mxu0 %v3063
        %3927 = vmatpush.bf16.msra.mxu0 %v3062
        %3928 = vmatpush.bf16.msra.mxu0 %v3061
        %3929 = vmatpush.bf16.msra.mxu0 %v3060
        %3930 = vmatpush.bf16.msra.mxu0 %v3059
        %3931 = vmatpush.bf16.msra.mxu0 %v3058
        %3932 = vmatpush.bf16.msra.mxu0 %v3057
        %3933 = vmatpush.bf16.msra.mxu0 %v3056
        %3934 = vmatmul.bf16.gmra.mxu0 %v1518
        %v3935 = vpop.f32.mrf.mxu0
        %v3936 = vadd.f32 %v3907, %v3935
        %v3937 = vpop.f32.mrf.mxu0
        %v3938 = vadd.f32 %v3909, %v3937
        %3939 = vmatmul.bf16.gmra.mxu0 %v1554
        %v3940 = vpop.f32.mrf.mxu0
        %v3941 = vadd.f32 %v3912, %v3940
        %v3942 = vpop.f32.mrf.mxu0
        %v3943 = vadd.f32 %v3914, %v3942
        %3944 = vmatmul.bf16.gmra.mxu0 %v1590
        %v3945 = vpop.f32.mrf.mxu0
        %v3946 = vadd.f32 %v3917, %v3945
        %v3947 = vpop.f32.mrf.mxu0
        %v3948 = vadd.f32 %v3919, %v3947
        %3949 = vmatmul.bf16.gmra.mxu0 %v1626
        %v3950 = vpop.f32.mrf.mxu0
        %v3951 = vadd.f32 %v3922, %v3950
        %v3952 = vpop.f32.mrf.mxu0
        %v3953 = vadd.f32 %v3924, %v3952
        %3954 = vdwg.mxu0
        %3955 = vmatpush.bf16.msra.mxu0 %v3071
        %3956 = vmatpush.bf16.msra.mxu0 %v3070
        %3957 = vmatpush.bf16.msra.mxu0 %v3069
        %3958 = vmatpush.bf16.msra.mxu0 %v3068
        %3959 = vmatpush.bf16.msra.mxu0 %v3067
        %3960 = vmatpush.bf16.msra.mxu0 %v3066
        %3961 = vmatpush.bf16.msra.mxu0 %v3065
        %3962 = vmatpush.bf16.msra.mxu0 %v3064
        %3963 = vmatmul.bf16.gmra.mxu0 %v1519
        %v3964 = vpop.f32.mrf.mxu0
        %v3965 = vadd.f32 %v3936, %v3964
        %v3966 = vpop.f32.mrf.mxu0
        %v3967 = vadd.f32 %v3938, %v3966
        %3968 = vmatmul.bf16.gmra.mxu0 %v1555
        %v3969 = vpop.f32.mrf.mxu0
        %v3970 = vadd.f32 %v3941, %v3969
        %v3971 = vpop.f32.mrf.mxu0
        %v3972 = vadd.f32 %v3943, %v3971
        %3973 = vmatmul.bf16.gmra.mxu0 %v1591
        %v3974 = vpop.f32.mrf.mxu0
        %v3975 = vadd.f32 %v3946, %v3974
        %v3976 = vpop.f32.mrf.mxu0
        %v3977 = vadd.f32 %v3948, %v3976
        %3978 = vmatmul.bf16.gmra.mxu0 %v1627
        %v3979 = vpop.f32.mrf.mxu0
        %v3980 = vadd.f32 %v3951, %v3979
        %v3981 = vpop.f32.mrf.mxu0
        %v3982 = vadd.f32 %v3953, %v3981
        %3983 = vdwg.mxu0
        %3984 = vmatpush.bf16.msra.mxu0 %v3079
        %3985 = vmatpush.bf16.msra.mxu0 %v3078
        %3986 = vmatpush.bf16.msra.mxu0 %v3077
        %3987 = vmatpush.bf16.msra.mxu0 %v3076
        %3988 = vmatpush.bf16.msra.mxu0 %v3075
        %3989 = vmatpush.bf16.msra.mxu0 %v3074
        %3990 = vmatpush.bf16.msra.mxu0 %v3073
        %3991 = vmatpush.bf16.msra.mxu0 %v3072
        %3992 = vmatmul.bf16.gmra.mxu0 %v1520
        %v3993 = vpop.f32.mrf.mxu0
        %v3994 = vadd.f32 %v3965, %v3993
        %v3995 = vpop.f32.mrf.mxu0
        %v3996 = vadd.f32 %v3967, %v3995
        %3997 = vmatmul.bf16.gmra.mxu0 %v1556
        %v3998 = vpop.f32.mrf.mxu0
        %v3999 = vadd.f32 %v3970, %v3998
        %v4000 = vpop.f32.mrf.mxu0
        %v4001 = vadd.f32 %v3972, %v4000
        %4002 = vmatmul.bf16.gmra.mxu0 %v1592
        %v4003 = vpop.f32.mrf.mxu0
        %v4004 = vadd.f32 %v3975, %v4003
        %v4005 = vpop.f32.mrf.mxu0
        %v4006 = vadd.f32 %v3977, %v4005
        %4007 = vmatmul.bf16.gmra.mxu0 %v1628
        %v4008 = vpop.f32.mrf.mxu0
        %v4009 = vadd.f32 %v3980, %v4008
        %v4010 = vpop.f32.mrf.mxu0
        %v4011 = vadd.f32 %v3982, %v4010
        %4012 = vdwg.mxu0
        %4013 = vmatpush.bf16.msra.mxu0 %v3087
        %4014 = vmatpush.bf16.msra.mxu0 %v3086
        %4015 = vmatpush.bf16.msra.mxu0 %v3085
        %4016 = vmatpush.bf16.msra.mxu0 %v3084
        %4017 = vmatpush.bf16.msra.mxu0 %v3083
        %4018 = vmatpush.bf16.msra.mxu0 %v3082
        %4019 = vmatpush.bf16.msra.mxu0 %v3081
        %4020 = vmatpush.bf16.msra.mxu0 %v3080
        %4021 = vmatmul.bf16.gmra.mxu0 %v1521
        %v4022 = vpop.f32.mrf.mxu0
        %v4023 = vadd.f32 %v3994, %v4022
        %v4024 = vpop.f32.mrf.mxu0
        %v4025 = vadd.f32 %v3996, %v4024
        %4026 = vmatmul.bf16.gmra.mxu0 %v1557
        %v4027 = vpop.f32.mrf.mxu0
        %v4028 = vadd.f32 %v3999, %v4027
        %v4029 = vpop.f32.mrf.mxu0
        %v4030 = vadd.f32 %v4001, %v4029
        %4031 = vmatmul.bf16.gmra.mxu0 %v1593
        %v4032 = vpop.f32.mrf.mxu0
        %v4033 = vadd.f32 %v4004, %v4032
        %v4034 = vpop.f32.mrf.mxu0
        %v4035 = vadd.f32 %v4006, %v4034
        %4036 = vmatmul.bf16.gmra.mxu0 %v1629
        %v4037 = vpop.f32.mrf.mxu0
        %v4038 = vadd.f32 %v4009, %v4037
        %v4039 = vpop.f32.mrf.mxu0
        %v4040 = vadd.f32 %v4011, %v4039
        %4041 = vdwg.mxu0
        %4042 = vmatpush.bf16.msra.mxu0 %v3095
        %4043 = vmatpush.bf16.msra.mxu0 %v3094
        %4044 = vmatpush.bf16.msra.mxu0 %v3093
        %4045 = vmatpush.bf16.msra.mxu0 %v3092
        %4046 = vmatpush.bf16.msra.mxu0 %v3091
        %4047 = vmatpush.bf16.msra.mxu0 %v3090
        %4048 = vmatpush.bf16.msra.mxu0 %v3089
        %4049 = vmatpush.bf16.msra.mxu0 %v3088
        %4050 = vmatmul.bf16.gmra.mxu0 %v1522
        %v4051 = vpop.f32.mrf.mxu0
        %v4052 = vadd.f32 %v4023, %v4051
        %v4053 = vpop.f32.mrf.mxu0
        %v4054 = vadd.f32 %v4025, %v4053
        %4055 = vmatmul.bf16.gmra.mxu0 %v1558
        %v4056 = vpop.f32.mrf.mxu0
        %v4057 = vadd.f32 %v4028, %v4056
        %v4058 = vpop.f32.mrf.mxu0
        %v4059 = vadd.f32 %v4030, %v4058
        %4060 = vmatmul.bf16.gmra.mxu0 %v1594
        %v4061 = vpop.f32.mrf.mxu0
        %v4062 = vadd.f32 %v4033, %v4061
        %v4063 = vpop.f32.mrf.mxu0
        %v4064 = vadd.f32 %v4035, %v4063
        %4065 = vmatmul.bf16.gmra.mxu0 %v1630
        %v4066 = vpop.f32.mrf.mxu0
        %v4067 = vadd.f32 %v4038, %v4066
        %v4068 = vpop.f32.mrf.mxu0
        %v4069 = vadd.f32 %v4040, %v4068
        %4070 = vdwg.mxu0
        %4071 = vmatpush.bf16.msra.mxu0 %v3103
        %4072 = vmatpush.bf16.msra.mxu0 %v3102
        %4073 = vmatpush.bf16.msra.mxu0 %v3101
        %4074 = vmatpush.bf16.msra.mxu0 %v3100
        %4075 = vmatpush.bf16.msra.mxu0 %v3099
        %4076 = vmatpush.bf16.msra.mxu0 %v3098
        %4077 = vmatpush.bf16.msra.mxu0 %v3097
        %4078 = vmatpush.bf16.msra.mxu0 %v3096
        %4079 = vmatmul.bf16.gmra.mxu0 %v1523
        %v4080 = vpop.f32.mrf.mxu0
        %v4081 = vadd.f32 %v4052, %v4080
        %v4082 = vpop.f32.mrf.mxu0
        %v4083 = vadd.f32 %v4054, %v4082
        %4084 = vmatmul.bf16.gmra.mxu0 %v1559
        %v4085 = vpop.f32.mrf.mxu0
        %v4086 = vadd.f32 %v4057, %v4085
        %v4087 = vpop.f32.mrf.mxu0
        %v4088 = vadd.f32 %v4059, %v4087
        %4089 = vmatmul.bf16.gmra.mxu0 %v1595
        %v4090 = vpop.f32.mrf.mxu0
        %v4091 = vadd.f32 %v4062, %v4090
        %v4092 = vpop.f32.mrf.mxu0
        %v4093 = vadd.f32 %v4064, %v4092
        %4094 = vmatmul.bf16.gmra.mxu0 %v1631
        %v4095 = vpop.f32.mrf.mxu0
        %v4096 = vadd.f32 %v4067, %v4095
        %v4097 = vpop.f32.mrf.mxu0
        %v4098 = vadd.f32 %v4069, %v4097
        %4099 = vdwg.mxu0
        %4100 = vmatpush.bf16.msra.mxu0 %v3111
        %4101 = vmatpush.bf16.msra.mxu0 %v3110
        %4102 = vmatpush.bf16.msra.mxu0 %v3109
        %4103 = vmatpush.bf16.msra.mxu0 %v3108
        %4104 = vmatpush.bf16.msra.mxu0 %v3107
        %4105 = vmatpush.bf16.msra.mxu0 %v3106
        %4106 = vmatpush.bf16.msra.mxu0 %v3105
        %4107 = vmatpush.bf16.msra.mxu0 %v3104
        %4108 = vmatmul.bf16.gmra.mxu0 %v1524
        %v4109 = vpop.f32.mrf.mxu0
        %v4110 = vadd.f32 %v4081, %v4109
        %v4111 = vpop.f32.mrf.mxu0
        %v4112 = vadd.f32 %v4083, %v4111
        %4113 = vmatmul.bf16.gmra.mxu0 %v1560
        %v4114 = vpop.f32.mrf.mxu0
        %v4115 = vadd.f32 %v4086, %v4114
        %v4116 = vpop.f32.mrf.mxu0
        %v4117 = vadd.f32 %v4088, %v4116
        %4118 = vmatmul.bf16.gmra.mxu0 %v1596
        %v4119 = vpop.f32.mrf.mxu0
        %v4120 = vadd.f32 %v4091, %v4119
        %v4121 = vpop.f32.mrf.mxu0
        %v4122 = vadd.f32 %v4093, %v4121
        %4123 = vmatmul.bf16.gmra.mxu0 %v1632
        %v4124 = vpop.f32.mrf.mxu0
        %v4125 = vadd.f32 %v4096, %v4124
        %v4126 = vpop.f32.mrf.mxu0
        %v4127 = vadd.f32 %v4098, %v4126
        %4128 = vdwg.mxu0
        %4129 = vmatpush.bf16.msra.mxu0 %v3119
        %4130 = vmatpush.bf16.msra.mxu0 %v3118
        %4131 = vmatpush.bf16.msra.mxu0 %v3117
        %4132 = vmatpush.bf16.msra.mxu0 %v3116
        %4133 = vmatpush.bf16.msra.mxu0 %v3115
        %4134 = vmatpush.bf16.msra.mxu0 %v3114
        %4135 = vmatpush.bf16.msra.mxu0 %v3113
        %4136 = vmatpush.bf16.msra.mxu0 %v3112
        %4137 = vmatmul.bf16.gmra.mxu0 %v1525
        %v4138 = vpop.f32.mrf.mxu0
        %v4139 = vadd.f32 %v4110, %v4138
        %v4140 = vpop.f32.mrf.mxu0
        %v4141 = vadd.f32 %v4112, %v4140
        %4142 = vmatmul.bf16.gmra.mxu0 %v1561
        %v4143 = vpop.f32.mrf.mxu0
        %v4144 = vadd.f32 %v4115, %v4143
        %v4145 = vpop.f32.mrf.mxu0
        %v4146 = vadd.f32 %v4117, %v4145
        %4147 = vmatmul.bf16.gmra.mxu0 %v1597
        %v4148 = vpop.f32.mrf.mxu0
        %v4149 = vadd.f32 %v4120, %v4148
        %v4150 = vpop.f32.mrf.mxu0
        %v4151 = vadd.f32 %v4122, %v4150
        %4152 = vmatmul.bf16.gmra.mxu0 %v1633
        %v4153 = vpop.f32.mrf.mxu0
        %v4154 = vadd.f32 %v4125, %v4153
        %v4155 = vpop.f32.mrf.mxu0
        %v4156 = vadd.f32 %v4127, %v4155
        %4157 = vdwg.mxu0
        %4158 = vmatpush.bf16.msra.mxu0 %v3127
        %4159 = vmatpush.bf16.msra.mxu0 %v3126
        %4160 = vmatpush.bf16.msra.mxu0 %v3125
        %4161 = vmatpush.bf16.msra.mxu0 %v3124
        %4162 = vmatpush.bf16.msra.mxu0 %v3123
        %4163 = vmatpush.bf16.msra.mxu0 %v3122
        %4164 = vmatpush.bf16.msra.mxu0 %v3121
        %4165 = vmatpush.bf16.msra.mxu0 %v3120
        %4166 = vmatmul.bf16.gmra.mxu0 %v1526
        %v4167 = vpop.f32.mrf.mxu0
        %v4168 = vadd.f32 %v4139, %v4167
        %v4169 = vpop.f32.mrf.mxu0
        %v4170 = vadd.f32 %v4141, %v4169
        %4171 = vmatmul.bf16.gmra.mxu0 %v1562
        %v4172 = vpop.f32.mrf.mxu0
        %v4173 = vadd.f32 %v4144, %v4172
        %v4174 = vpop.f32.mrf.mxu0
        %v4175 = vadd.f32 %v4146, %v4174
        %4176 = vmatmul.bf16.gmra.mxu0 %v1598
        %v4177 = vpop.f32.mrf.mxu0
        %v4178 = vadd.f32 %v4149, %v4177
        %v4179 = vpop.f32.mrf.mxu0
        %v4180 = vadd.f32 %v4151, %v4179
        %4181 = vmatmul.bf16.gmra.mxu0 %v1634
        %v4182 = vpop.f32.mrf.mxu0
        %v4183 = vadd.f32 %v4154, %v4182
        %v4184 = vpop.f32.mrf.mxu0
        %v4185 = vadd.f32 %v4156, %v4184
        %4186 = vdwg.mxu0
        %4187 = vmatpush.bf16.msra.mxu0 %v3135
        %4188 = vmatpush.bf16.msra.mxu0 %v3134
        %4189 = vmatpush.bf16.msra.mxu0 %v3133
        %4190 = vmatpush.bf16.msra.mxu0 %v3132
        %4191 = vmatpush.bf16.msra.mxu0 %v3131
        %4192 = vmatpush.bf16.msra.mxu0 %v3130
        %4193 = vmatpush.bf16.msra.mxu0 %v3129
        %4194 = vmatpush.bf16.msra.mxu0 %v3128
        %4195 = vmatmul.bf16.gmra.mxu0 %v1527
        %v4196 = vpop.f32.mrf.mxu0
        %v4197 = vadd.f32 %v4168, %v4196
        %v4198 = vpop.f32.mrf.mxu0
        %v4199 = vadd.f32 %v4170, %v4198
        %4200 = vmatmul.bf16.gmra.mxu0 %v1563
        %v4201 = vpop.f32.mrf.mxu0
        %v4202 = vadd.f32 %v4173, %v4201
        %v4203 = vpop.f32.mrf.mxu0
        %v4204 = vadd.f32 %v4175, %v4203
        %4205 = vmatmul.bf16.gmra.mxu0 %v1599
        %v4206 = vpop.f32.mrf.mxu0
        %v4207 = vadd.f32 %v4178, %v4206
        %v4208 = vpop.f32.mrf.mxu0
        %v4209 = vadd.f32 %v4180, %v4208
        %4210 = vmatmul.bf16.gmra.mxu0 %v1635
        %v4211 = vpop.f32.mrf.mxu0
        %v4212 = vadd.f32 %v4183, %v4211
        %v4213 = vpop.f32.mrf.mxu0
        %v4214 = vadd.f32 %v4185, %v4213
        %4215 = vdwg.mxu0
        %4216 = vmatpush.bf16.msra.mxu0 %v3143
        %4217 = vmatpush.bf16.msra.mxu0 %v3142
        %4218 = vmatpush.bf16.msra.mxu0 %v3141
        %4219 = vmatpush.bf16.msra.mxu0 %v3140
        %4220 = vmatpush.bf16.msra.mxu0 %v3139
        %4221 = vmatpush.bf16.msra.mxu0 %v3138
        %4222 = vmatpush.bf16.msra.mxu0 %v3137
        %4223 = vmatpush.bf16.msra.mxu0 %v3136
        %4224 = vmatmul.bf16.gmra.mxu0 %v1528
        %v4225 = vpop.f32.mrf.mxu0
        %v4226 = vadd.f32 %v4197, %v4225
        %v4227 = vpop.f32.mrf.mxu0
        %v4228 = vadd.f32 %v4199, %v4227
        %4229 = vmatmul.bf16.gmra.mxu0 %v1564
        %v4230 = vpop.f32.mrf.mxu0
        %v4231 = vadd.f32 %v4202, %v4230
        %v4232 = vpop.f32.mrf.mxu0
        %v4233 = vadd.f32 %v4204, %v4232
        %4234 = vmatmul.bf16.gmra.mxu0 %v1600
        %v4235 = vpop.f32.mrf.mxu0
        %v4236 = vadd.f32 %v4207, %v4235
        %v4237 = vpop.f32.mrf.mxu0
        %v4238 = vadd.f32 %v4209, %v4237
        %4239 = vmatmul.bf16.gmra.mxu0 %v1636
        %v4240 = vpop.f32.mrf.mxu0
        %v4241 = vadd.f32 %v4212, %v4240
        %v4242 = vpop.f32.mrf.mxu0
        %v4243 = vadd.f32 %v4214, %v4242
        %4244 = vdwg.mxu0
        %4245 = vmatpush.bf16.msra.mxu0 %v3151
        %4246 = vmatpush.bf16.msra.mxu0 %v3150
        %4247 = vmatpush.bf16.msra.mxu0 %v3149
        %4248 = vmatpush.bf16.msra.mxu0 %v3148
        %4249 = vmatpush.bf16.msra.mxu0 %v3147
        %4250 = vmatpush.bf16.msra.mxu0 %v3146
        %4251 = vmatpush.bf16.msra.mxu0 %v3145
        %4252 = vmatpush.bf16.msra.mxu0 %v3144
        %4253 = vmatmul.bf16.gmra.mxu0 %v1529
        %v4254 = vpop.f32.mrf.mxu0
        %v4255 = vadd.f32 %v4226, %v4254
        %v4256 = vpop.f32.mrf.mxu0
        %v4257 = vadd.f32 %v4228, %v4256
        %4258 = vmatmul.bf16.gmra.mxu0 %v1565
        %v4259 = vpop.f32.mrf.mxu0
        %v4260 = vadd.f32 %v4231, %v4259
        %v4261 = vpop.f32.mrf.mxu0
        %v4262 = vadd.f32 %v4233, %v4261
        %4263 = vmatmul.bf16.gmra.mxu0 %v1601
        %v4264 = vpop.f32.mrf.mxu0
        %v4265 = vadd.f32 %v4236, %v4264
        %v4266 = vpop.f32.mrf.mxu0
        %v4267 = vadd.f32 %v4238, %v4266
        %4268 = vmatmul.bf16.gmra.mxu0 %v1637
        %v4269 = vpop.f32.mrf.mxu0
        %v4270 = vadd.f32 %v4241, %v4269
        %v4271 = vpop.f32.mrf.mxu0
        %v4272 = vadd.f32 %v4243, %v4271
        %4273 = vdwg.mxu0
        %4274 = vmatpush.bf16.msra.mxu0 %v3159
        %4275 = vmatpush.bf16.msra.mxu0 %v3158
        %4276 = vmatpush.bf16.msra.mxu0 %v3157
        %4277 = vmatpush.bf16.msra.mxu0 %v3156
        %4278 = vmatpush.bf16.msra.mxu0 %v3155
        %4279 = vmatpush.bf16.msra.mxu0 %v3154
        %4280 = vmatpush.bf16.msra.mxu0 %v3153
        %4281 = vmatpush.bf16.msra.mxu0 %v3152
        %4282 = vmatmul.bf16.gmra.mxu0 %v1530
        %v4283 = vpop.f32.mrf.mxu0
        %v4284 = vadd.f32 %v4255, %v4283
        %v4285 = vpop.f32.mrf.mxu0
        %v4286 = vadd.f32 %v4257, %v4285
        %4287 = vmatmul.bf16.gmra.mxu0 %v1566
        %v4288 = vpop.f32.mrf.mxu0
        %v4289 = vadd.f32 %v4260, %v4288
        %v4290 = vpop.f32.mrf.mxu0
        %v4291 = vadd.f32 %v4262, %v4290
        %4292 = vmatmul.bf16.gmra.mxu0 %v1602
        %v4293 = vpop.f32.mrf.mxu0
        %v4294 = vadd.f32 %v4265, %v4293
        %v4295 = vpop.f32.mrf.mxu0
        %v4296 = vadd.f32 %v4267, %v4295
        %4297 = vmatmul.bf16.gmra.mxu0 %v1638
        %v4298 = vpop.f32.mrf.mxu0
        %v4299 = vadd.f32 %v4270, %v4298
        %v4300 = vpop.f32.mrf.mxu0
        %v4301 = vadd.f32 %v4272, %v4300
        %4302 = vdwg.mxu0
        %4303 = vmatpush.bf16.msra.mxu0 %v3167
        %4304 = vmatpush.bf16.msra.mxu0 %v3166
        %4305 = vmatpush.bf16.msra.mxu0 %v3165
        %4306 = vmatpush.bf16.msra.mxu0 %v3164
        %4307 = vmatpush.bf16.msra.mxu0 %v3163
        %4308 = vmatpush.bf16.msra.mxu0 %v3162
        %4309 = vmatpush.bf16.msra.mxu0 %v3161
        %4310 = vmatpush.bf16.msra.mxu0 %v3160
        %4311 = vmatmul.bf16.gmra.mxu0 %v1531
        %v4312 = vpop.f32.mrf.mxu0
        %v4313 = vadd.f32 %v4284, %v4312
        %v4314 = vpop.f32.mrf.mxu0
        %v4315 = vadd.f32 %v4286, %v4314
        %4316 = vmatmul.bf16.gmra.mxu0 %v1567
        %v4317 = vpop.f32.mrf.mxu0
        %v4318 = vadd.f32 %v4289, %v4317
        %v4319 = vpop.f32.mrf.mxu0
        %v4320 = vadd.f32 %v4291, %v4319
        %4321 = vmatmul.bf16.gmra.mxu0 %v1603
        %v4322 = vpop.f32.mrf.mxu0
        %v4323 = vadd.f32 %v4294, %v4322
        %v4324 = vpop.f32.mrf.mxu0
        %v4325 = vadd.f32 %v4296, %v4324
        %4326 = vmatmul.bf16.gmra.mxu0 %v1639
        %v4327 = vpop.f32.mrf.mxu0
        %v4328 = vadd.f32 %v4299, %v4327
        %v4329 = vpop.f32.mrf.mxu0
        %v4330 = vadd.f32 %v4301, %v4329
        %4331 = vdwg.mxu0
        %4332 = vmatpush.bf16.msra.mxu0 %v3175
        %4333 = vmatpush.bf16.msra.mxu0 %v3174
        %4334 = vmatpush.bf16.msra.mxu0 %v3173
        %4335 = vmatpush.bf16.msra.mxu0 %v3172
        %4336 = vmatpush.bf16.msra.mxu0 %v3171
        %4337 = vmatpush.bf16.msra.mxu0 %v3170
        %4338 = vmatpush.bf16.msra.mxu0 %v3169
        %4339 = vmatpush.bf16.msra.mxu0 %v3168
        %4340 = vmatmul.bf16.gmra.mxu0 %v1532
        %v4341 = vpop.f32.mrf.mxu0
        %v4342 = vadd.f32 %v4313, %v4341
        %v4343 = vpop.f32.mrf.mxu0
        %v4344 = vadd.f32 %v4315, %v4343
        %4345 = vmatmul.bf16.gmra.mxu0 %v1568
        %v4346 = vpop.f32.mrf.mxu0
        %v4347 = vadd.f32 %v4318, %v4346
        %v4348 = vpop.f32.mrf.mxu0
        %v4349 = vadd.f32 %v4320, %v4348
        %4350 = vmatmul.bf16.gmra.mxu0 %v1604
        %v4351 = vpop.f32.mrf.mxu0
        %v4352 = vadd.f32 %v4323, %v4351
        %v4353 = vpop.f32.mrf.mxu0
        %v4354 = vadd.f32 %v4325, %v4353
        %4355 = vmatmul.bf16.gmra.mxu0 %v1640
        %v4356 = vpop.f32.mrf.mxu0
        %v4357 = vadd.f32 %v4328, %v4356
        %v4358 = vpop.f32.mrf.mxu0
        %v4359 = vadd.f32 %v4330, %v4358
        %4360 = vdwg.mxu0
        %4361 = vmatpush.bf16.msra.mxu0 %v3183
        %4362 = vmatpush.bf16.msra.mxu0 %v3182
        %4363 = vmatpush.bf16.msra.mxu0 %v3181
        %4364 = vmatpush.bf16.msra.mxu0 %v3180
        %4365 = vmatpush.bf16.msra.mxu0 %v3179
        %4366 = vmatpush.bf16.msra.mxu0 %v3178
        %4367 = vmatpush.bf16.msra.mxu0 %v3177
        %4368 = vmatpush.bf16.msra.mxu0 %v3176
        %4369 = vmatmul.bf16.gmra.mxu0 %v1533
        %v4370 = vpop.f32.mrf.mxu0
        %v4371 = vadd.f32 %v4342, %v4370
        %v4372 = vpop.f32.mrf.mxu0
        %v4373 = vadd.f32 %v4344, %v4372
        %4374 = vmatmul.bf16.gmra.mxu0 %v1569
        %v4375 = vpop.f32.mrf.mxu0
        %v4376 = vadd.f32 %v4347, %v4375
        %v4377 = vpop.f32.mrf.mxu0
        %v4378 = vadd.f32 %v4349, %v4377
        %4379 = vmatmul.bf16.gmra.mxu0 %v1605
        %v4380 = vpop.f32.mrf.mxu0
        %v4381 = vadd.f32 %v4352, %v4380
        %v4382 = vpop.f32.mrf.mxu0
        %v4383 = vadd.f32 %v4354, %v4382
        %4384 = vmatmul.bf16.gmra.mxu0 %v1641
        %v4385 = vpop.f32.mrf.mxu0
        %v4386 = vadd.f32 %v4357, %v4385
        %v4387 = vpop.f32.mrf.mxu0
        %v4388 = vadd.f32 %v4359, %v4387
        %4389 = vdwg.mxu0
        %4390 = vmatpush.bf16.msra.mxu0 %v3191
        %4391 = vmatpush.bf16.msra.mxu0 %v3190
        %4392 = vmatpush.bf16.msra.mxu0 %v3189
        %4393 = vmatpush.bf16.msra.mxu0 %v3188
        %4394 = vmatpush.bf16.msra.mxu0 %v3187
        %4395 = vmatpush.bf16.msra.mxu0 %v3186
        %4396 = vmatpush.bf16.msra.mxu0 %v3185
        %4397 = vmatpush.bf16.msra.mxu0 %v3184
        %4398 = vmatmul.bf16.gmra.mxu0 %v1534
        %v4399 = vpop.f32.mrf.mxu0
        %v4400 = vadd.f32 %v4371, %v4399
        %v4401 = vpop.f32.mrf.mxu0
        %v4402 = vadd.f32 %v4373, %v4401
        %4403 = vmatmul.bf16.gmra.mxu0 %v1570
        %v4404 = vpop.f32.mrf.mxu0
        %v4405 = vadd.f32 %v4376, %v4404
        %v4406 = vpop.f32.mrf.mxu0
        %v4407 = vadd.f32 %v4378, %v4406
        %4408 = vmatmul.bf16.gmra.mxu0 %v1606
        %v4409 = vpop.f32.mrf.mxu0
        %v4410 = vadd.f32 %v4381, %v4409
        %v4411 = vpop.f32.mrf.mxu0
        %v4412 = vadd.f32 %v4383, %v4411
        %4413 = vmatmul.bf16.gmra.mxu0 %v1642
        %v4414 = vpop.f32.mrf.mxu0
        %v4415 = vadd.f32 %v4386, %v4414
        %v4416 = vpop.f32.mrf.mxu0
        %v4417 = vadd.f32 %v4388, %v4416
        %4418 = vdwg.mxu0
        %4419 = vmatpush.bf16.msra.mxu0 %v3199
        %4420 = vmatpush.bf16.msra.mxu0 %v3198
        %4421 = vmatpush.bf16.msra.mxu0 %v3197
        %4422 = vmatpush.bf16.msra.mxu0 %v3196
        %4423 = vmatpush.bf16.msra.mxu0 %v3195
        %4424 = vmatpush.bf16.msra.mxu0 %v3194
        %4425 = vmatpush.bf16.msra.mxu0 %v3193
        %4426 = vmatpush.bf16.msra.mxu0 %v3192
        %4427 = vmatmul.bf16.gmra.mxu0 %v1535
        %v4428 = vpop.f32.mrf.mxu0
        %v4429 = vadd.f32 %v4400, %v4428
        %v4430 = vpop.f32.mrf.mxu0
        %v4431 = vadd.f32 %v4402, %v4430
        %4432 = vmatmul.bf16.gmra.mxu0 %v1571
        %v4433 = vpop.f32.mrf.mxu0
        %v4434 = vadd.f32 %v4405, %v4433
        %v4435 = vpop.f32.mrf.mxu0
        %v4436 = vadd.f32 %v4407, %v4435
        %4437 = vmatmul.bf16.gmra.mxu0 %v1607
        %v4438 = vpop.f32.mrf.mxu0
        %v4439 = vadd.f32 %v4410, %v4438
        %v4440 = vpop.f32.mrf.mxu0
        %v4441 = vadd.f32 %v4412, %v4440
        %4442 = vmatmul.bf16.gmra.mxu0 %v1643
        %v4443 = vpop.f32.mrf.mxu0
        %v4444 = vadd.f32 %v4415, %v4443
        %v4445 = vpop.f32.mrf.mxu0
        %v4446 = vadd.f32 %v4417, %v4445
        %4447 = vdwg.mxu0
        %4448 = vmatpush.bf16.msra.mxu0 %v3207
        %4449 = vmatpush.bf16.msra.mxu0 %v3206
        %4450 = vmatpush.bf16.msra.mxu0 %v3205
        %4451 = vmatpush.bf16.msra.mxu0 %v3204
        %4452 = vmatpush.bf16.msra.mxu0 %v3203
        %4453 = vmatpush.bf16.msra.mxu0 %v3202
        %4454 = vmatpush.bf16.msra.mxu0 %v3201
        %4455 = vmatpush.bf16.msra.mxu0 %v3200
        %4456 = vmatmul.bf16.gmra.mxu0 %v1536
        %v4457 = vpop.f32.mrf.mxu0
        %v4458 = vadd.f32 %v4429, %v4457
        %v4459 = vpop.f32.mrf.mxu0
        %v4460 = vadd.f32 %v4431, %v4459
        %4461 = vmatmul.bf16.gmra.mxu0 %v1572
        %v4462 = vpop.f32.mrf.mxu0
        %v4463 = vadd.f32 %v4434, %v4462
        %v4464 = vpop.f32.mrf.mxu0
        %v4465 = vadd.f32 %v4436, %v4464
        %4466 = vmatmul.bf16.gmra.mxu0 %v1608
        %v4467 = vpop.f32.mrf.mxu0
        %v4468 = vadd.f32 %v4439, %v4467
        %v4469 = vpop.f32.mrf.mxu0
        %v4470 = vadd.f32 %v4441, %v4469
        %4471 = vmatmul.bf16.gmra.mxu0 %v1644
        %v4472 = vpop.f32.mrf.mxu0
        %v4473 = vadd.f32 %v4444, %v4472
        %v4474 = vpop.f32.mrf.mxu0
        %v4475 = vadd.f32 %v4446, %v4474
        %4476 = vdwg.mxu0
        %4477 = vmatpush.bf16.msra.mxu0 %v3215
        %4478 = vmatpush.bf16.msra.mxu0 %v3214
        %4479 = vmatpush.bf16.msra.mxu0 %v3213
        %4480 = vmatpush.bf16.msra.mxu0 %v3212
        %4481 = vmatpush.bf16.msra.mxu0 %v3211
        %4482 = vmatpush.bf16.msra.mxu0 %v3210
        %4483 = vmatpush.bf16.msra.mxu0 %v3209
        %4484 = vmatpush.bf16.msra.mxu0 %v3208
        %4485 = vmatmul.bf16.gmra.mxu0 %v1537
        %v4486 = vpop.f32.mrf.mxu0
        %v4487 = vadd.f32 %v4458, %v4486
        %v4488 = vpop.f32.mrf.mxu0
        %v4489 = vadd.f32 %v4460, %v4488
        %4490 = vmatmul.bf16.gmra.mxu0 %v1573
        %v4491 = vpop.f32.mrf.mxu0
        %v4492 = vadd.f32 %v4463, %v4491
        %v4493 = vpop.f32.mrf.mxu0
        %v4494 = vadd.f32 %v4465, %v4493
        %4495 = vmatmul.bf16.gmra.mxu0 %v1609
        %v4496 = vpop.f32.mrf.mxu0
        %v4497 = vadd.f32 %v4468, %v4496
        %v4498 = vpop.f32.mrf.mxu0
        %v4499 = vadd.f32 %v4470, %v4498
        %4500 = vmatmul.bf16.gmra.mxu0 %v1645
        %v4501 = vpop.f32.mrf.mxu0
        %v4502 = vadd.f32 %v4473, %v4501
        %v4503 = vpop.f32.mrf.mxu0
        %v4504 = vadd.f32 %v4475, %v4503
        %4505 = vdwg.mxu0
        %4506 = vmatpush.bf16.msra.mxu0 %v3223
        %4507 = vmatpush.bf16.msra.mxu0 %v3222
        %4508 = vmatpush.bf16.msra.mxu0 %v3221
        %4509 = vmatpush.bf16.msra.mxu0 %v3220
        %4510 = vmatpush.bf16.msra.mxu0 %v3219
        %4511 = vmatpush.bf16.msra.mxu0 %v3218
        %4512 = vmatpush.bf16.msra.mxu0 %v3217
        %4513 = vmatpush.bf16.msra.mxu0 %v3216
        %4514 = vmatmul.bf16.gmra.mxu0 %v1538
        %v4515 = vpop.f32.mrf.mxu0
        %v4516 = vadd.f32 %v4487, %v4515
        %v4517 = vpop.f32.mrf.mxu0
        %v4518 = vadd.f32 %v4489, %v4517
        %4519 = vmatmul.bf16.gmra.mxu0 %v1574
        %v4520 = vpop.f32.mrf.mxu0
        %v4521 = vadd.f32 %v4492, %v4520
        %v4522 = vpop.f32.mrf.mxu0
        %v4523 = vadd.f32 %v4494, %v4522
        %4524 = vmatmul.bf16.gmra.mxu0 %v1610
        %v4525 = vpop.f32.mrf.mxu0
        %v4526 = vadd.f32 %v4497, %v4525
        %v4527 = vpop.f32.mrf.mxu0
        %v4528 = vadd.f32 %v4499, %v4527
        %4529 = vmatmul.bf16.gmra.mxu0 %v1646
        %v4530 = vpop.f32.mrf.mxu0
        %v4531 = vadd.f32 %v4502, %v4530
        %v4532 = vpop.f32.mrf.mxu0
        %v4533 = vadd.f32 %v4504, %v4532
        %4534 = vdwg.mxu0
        %4535 = vmatpush.bf16.msra.mxu0 %v3231
        %4536 = vmatpush.bf16.msra.mxu0 %v3230
        %4537 = vmatpush.bf16.msra.mxu0 %v3229
        %4538 = vmatpush.bf16.msra.mxu0 %v3228
        %4539 = vmatpush.bf16.msra.mxu0 %v3227
        %4540 = vmatpush.bf16.msra.mxu0 %v3226
        %4541 = vmatpush.bf16.msra.mxu0 %v3225
        %4542 = vmatpush.bf16.msra.mxu0 %v3224
        %4543 = vmatmul.bf16.gmra.mxu0 %v1539
        %v4544 = vpop.f32.mrf.mxu0
        %v4545 = vadd.f32 %v4516, %v4544
        %v4546 = vpop.f32.mrf.mxu0
        %v4547 = vadd.f32 %v4518, %v4546
        %4548 = vmatmul.bf16.gmra.mxu0 %v1575
        %v4549 = vpop.f32.mrf.mxu0
        %v4550 = vadd.f32 %v4521, %v4549
        %v4551 = vpop.f32.mrf.mxu0
        %v4552 = vadd.f32 %v4523, %v4551
        %4553 = vmatmul.bf16.gmra.mxu0 %v1611
        %v4554 = vpop.f32.mrf.mxu0
        %v4555 = vadd.f32 %v4526, %v4554
        %v4556 = vpop.f32.mrf.mxu0
        %v4557 = vadd.f32 %v4528, %v4556
        %4558 = vmatmul.bf16.gmra.mxu0 %v1647
        %v4559 = vpop.f32.mrf.mxu0
        %v4560 = vadd.f32 %v4531, %v4559
        %v4561 = vpop.f32.mrf.mxu0
        %v4562 = vadd.f32 %v4533, %v4561
        %4563 = vdwg.mxu0
        %v4564 = vld [vmem:[#allocation7] sm:$0x1]
        %v4566 = vperm.slane %v4564, 0
        %v4568 = vmul.f32 %v4545, %v4566
        %v4569 = vmul.f32 %v4547, %v4566
        %v4570 = vmul.f32 %v4550, %v4566
        %v4571 = vmul.f32 %v4552, %v4566
        %v4572 = vmul.f32 %v4555, %v4566
        %v4573 = vmul.f32 %v4557, %v4566
        %v4574 = vmul.f32 %v4560, %v4566
        %v4575 = vmul.f32 %v4562, %v4566
        %v4576 = vld [vmem:[#allocation8] sm:$0x1]
        %v4578 = vperm.slane %v4576, 0
        %v4580 = vadd.f32 %v4568, %v4578
        %v4581 = vadd.f32 %v4569, %v4578
        %v4582 = vadd.f32 %v4570, %v4578
        %v4583 = vadd.f32 %v4571, %v4578
        %v4584 = vadd.f32 %v4572, %v4578
        %v4585 = vadd.f32 %v4573, %v4578
        %v4586 = vadd.f32 %v4574, %v4578
        %v4587 = vadd.f32 %v4575, %v4578
        %v4588 = vmax.f32 %v4580, 0.0
        %v4589 = vmax.f32 %v4581, 0.0
        %v4590 = vmax.f32 %v4582, 0.0
        %v4591 = vmax.f32 %v4583, 0.0
        %v4592 = vmax.f32 %v4584, 0.0
        %v4593 = vmax.f32 %v4585, 0.0
        %v4594 = vmax.f32 %v4586, 0.0
        %v4595 = vmax.f32 %v4587, 0.0
        %v4596 = vld [vmem:[#allocation10] sm:$0xff]
        %v4597 = vld [vmem:[#allocation10 + $0x8] sm:$0xff]
        %v4598 = vld [vmem:[#allocation10 + $0x10] sm:$0xff]
        %v4599 = vld [vmem:[#allocation10 + $0x18] sm:$0xff]
        %v4600 = vld [vmem:[#allocation10 + $0x20] sm:$0xff]
        %v4601 = vld [vmem:[#allocation10 + $0x28] sm:$0xff]
        %v4602 = vld [vmem:[#allocation10 + $0x30] sm:$0xff]
        %v4603 = vld [vmem:[#allocation10 + $0x38] sm:$0xff]
        %v4604 = vld [vmem:[#allocation10 + $0x40] sm:$0xff]
        %v4605 = vld [vmem:[#allocation10 + $0x48] sm:$0xff]
        %v4606 = vld [vmem:[#allocation10 + $0x50] sm:$0xff]
        %v4607 = vld [vmem:[#allocation10 + $0x58] sm:$0xff]
        %v4608 = vld [vmem:[#allocation10 + $0x60] sm:$0xff]
        %v4609 = vld [vmem:[#allocation10 + $0x68] sm:$0xff]
        %v4610 = vld [vmem:[#allocation10 + $0x70] sm:$0xff]
        %v4611 = vld [vmem:[#allocation10 + $0x78] sm:$0xff]
        %v4612 = vld [vmem:[#allocation11] sm:$0x1]
        %v4614 = vperm.slane %v4612, 0
        %4616 = vmatpush.msra.mxu0 %v4611
        %4617 = vmatpush.msra.mxu0 %v4610
        %4618 = vmatpush.msra.mxu0 %v4609
        %4619 = vmatpush.msra.mxu0 %v4608
        %4620 = vmatpush.msra.mxu0 %v4607
        %4621 = vmatpush.msra.mxu0 %v4606
        %4622 = vmatpush.msra.mxu0 %v4605
        %4623 = vmatpush.msra.mxu0 %v4604
        %4624 = vmatpush.msra.mxu0 %v4603
        %4625 = vmatpush.msra.mxu0 %v4602
        %4626 = vmatpush.msra.mxu0 %v4601
        %4627 = vmatpush.msra.mxu0 %v4600
        %4628 = vmatpush.msra.mxu0 %v4599
        %4629 = vmatpush.msra.mxu0 %v4598
        %4630 = vmatpush.msra.mxu0 %v4597
        %4631 = vmatpush.msra.mxu0 %v4596
        %4632 = vmatmul.f32.gmra.mxu0 %v4588
        %v4633 = vpop.f32.mrf.mxu0
        %v4634 = vadd.f32 %v4614, %v4633
        %4635 = vmatmul.f32.gmra.mxu0 %v4589
        %v4636 = vpop.f32.mrf.mxu0
        %v4637 = vadd.f32 %v4614, %v4636
        %4638 = vmatmul.f32.gmra.mxu0 %v4590
        %v4639 = vpop.f32.mrf.mxu0
        %v4640 = vadd.f32 %v4614, %v4639
        %4641 = vmatmul.f32.gmra.mxu0 %v4591
        %v4642 = vpop.f32.mrf.mxu0
        %v4643 = vadd.f32 %v4614, %v4642
        %4644 = vmatmul.f32.gmra.mxu0 %v4592
        %v4645 = vpop.f32.mrf.mxu0
        %v4646 = vadd.f32 %v4614, %v4645
        %4647 = vmatmul.f32.gmra.mxu0 %v4593
        %v4648 = vpop.f32.mrf.mxu0
        %v4649 = vadd.f32 %v4614, %v4648
        %4650 = vmatmul.f32.gmra.mxu0 %v4594
        %v4651 = vpop.f32.mrf.mxu0
        %v4652 = vadd.f32 %v4614, %v4651
        %4653 = vmatmul.f32.gmra.mxu0 %v4595
        %v4654 = vpop.f32.mrf.mxu0
        %v4655 = vadd.f32 %v4614, %v4654
        %4656 = vdwg.mxu0
        %4657 = vst [vmem:[%s349] sm:$0xff] %v4634
        %4658 = vst [vmem:[%s349 + $0x8] sm:$0xff] %v4637
        %4659 = vst [vmem:[%s349 + $0x10] sm:$0xff] %v4640
        %4660 = vst [vmem:[%s349 + $0x18] sm:$0xff] %v4643
        %4661 = vst [vmem:[%s349 + $0x20] sm:$0xff] %v4646
        %4662 = vst [vmem:[%s349 + $0x28] sm:$0xff] %v4649
        %4663 = vst [vmem:[%s349 + $0x30] sm:$0xff] %v4652
        %4664 = vst [vmem:[%s349 + $0x38] sm:$0xff] %v4655
        %s4665 = sand.u32 %s165, 1
        %s4666 = scalar_lea.sflag [#allocation4], %s4665
        %s4667 = sand.u32 %s165, 1
        %s4668 = smul.addr %s4667, 64
        %s4669 = scalar_lea.vmem [#allocation13], %s4668
        // Predicated region
        $region69: #{tpu_custom_call.1} parent=43 // pred_check
          %p4670 = pneg %p175
        $region70: #{tpu_custom_call.1} parent=43 // pred_check_branch
          %4672 = sbr.rel (%p4670) target = $region72
        $region71: #{tpu_custom_call.1} parent=43 // pred_region
          %s4673 = smul.u32 8, %s26
          %4675 = vsyncadd %s4666, 0
          %s4676 = smul.addr %s4673, 8
          %s4677 = scalar_lea.hbm %s6, %s4676
          %s4678 = sshll.u32 %s4669, 4
          %s4679 = int_to_ptr.vmem [resolvable:$true] %s4678
          %s4680 = sshll.u32 %s4677, 4
          %s4681 = int_to_ptr.hbm [resolvable:$true] %s4680
          %4686 = dma.vmem_to_hbm [thread:$0]  %s4679, 1024, %s4681, %s4666, 128, 128, 8
        $region72: #{tpu_custom_call.1} parent=43 // pred_fallthru
          _
      $region44: #{tpu_custom_call.1} parent=5 // pred_fallthru
        _
      %p4687 = scmp.le.s32.totalorder 2, %s21
      // Predicated region
      $region73: #{tpu_custom_call.1} parent=5 // pred_check
        %p4688 = pneg %p4687
      $region74: #{tpu_custom_call.1} parent=5 // pred_check_branch
        %4690 = sbr.rel (%p4688) target = $region76
      $region75: #{tpu_custom_call.1} parent=5 // pred_region
        %s4691 = ssub.s32 %s21, 2
        // Predicated region
        $region77: #{tpu_custom_call.1} parent=75 // pred_check
          %p4692 = pneg %p181
        $region78: #{tpu_custom_call.1} parent=75 // pred_check_branch
          %4694 = sbr.rel (%p4692) target = $region80
        $region79: #{tpu_custom_call.1} parent=75 // pred_region
          %s4695 = sand.u32 %s166, 1
          %s4696 = scalar_lea.sflag [#allocation4], %s4695
          %s4697 = sand.u32 %s166, 1
          %s4698 = smul.addr %s4697, 64
          %s4699 = scalar_lea.vmem [#allocation13], %s4698
          %4701 = dma.done %s4696, 1024
        $region80: #{tpu_custom_call.1} parent=75 // pred_fallthru
          _
      $region76: #{tpu_custom_call.1} parent=5 // pred_fallthru
        _
    $region6: #{tpu_custom_call.1} parent=1 // loop_footer
      %s25 = sadd.s32 1, %s21
    $region7: #{tpu_custom_call.1} parent=1 // loop_footer_branch
      %20 = sbr.rel target = $region3
    $region8: #{tpu_custom_call.1} parent=1 // loop_exit
      _
    %4702 = vsyncpa [#allocation3], 1
    %s4703 = scalar_lea.sflag [#allocation3], 1
    %4704 = vsyncpa %s4703, 1
    %4705 = vsyncpa [#allocation6], 1
    %4706 = vsyncpa [#allocation9], 1
    %4707 = vsyncpa [#allocation12], 1
    %4708 = vsyncpa [#allocation4], 1
    %s4709 = scalar_lea.sflag [#allocation4], 1
    %4710 = vsyncpa %s4709, 1

</llo_original>
